<compile_context>
chip_gen: v7x
topology: tpu7x:2x2x1
jax: 0.10.0
libtpu: 0.0.40
codegen_flags: <defaults>
</compile_context>

<pallas_src>
import jax
import jax.numpy as jnp
from jax.experimental import pallas as pl
from jax.experimental.pallas import tpu as pltpu


TILE_B = 4096   # default rows per grid step (must be a multiple of 1024)
_LANES = 128


def _round_up(n, m):
    return (n + m - 1) // m * m


def mlp_kernel(x_ref, w1_ref, b1_ref, w2_ref, b2_ref,
               w3_ref, b3_ref, w4_ref, b4_ref, o_ref):
    """One batch tile of the full MLP.

    Matmul inputs are cast to bf16 in-kernel; accumulation and all elementwise
    math (bias add, ReLU, final reduce) stay f32. The result is stored in a
    lane-dense (tile//128, 128) layout for unmasked full-lane stores.
    """
    x = x_ref[...].astype(jnp.bfloat16)                      # cast in-kernel
    # Layer 1: Linear(56 -> 128) + ReLU   (MXU, bf16 in / f32 acc)
    h = jnp.dot(x, w1_ref[...], preferred_element_type=jnp.float32)
    h = jnp.maximum(h + b1_ref[...], 0.0)
    # Layer 2: Linear(128 -> 64) + ReLU
    h = jnp.dot(h.astype(jnp.bfloat16), w2_ref[...],
                preferred_element_type=jnp.float32)
    h = jnp.maximum(h + b2_ref[...], 0.0)
    # Layer 3: Linear(64 -> 32) + ReLU
    h = jnp.dot(h.astype(jnp.bfloat16), w3_ref[...],
                preferred_element_type=jnp.float32)
    h = jnp.maximum(h + b3_ref[...], 0.0)
    # Layer 4: Linear(32 -> 1). An N=1 MXU matmul would waste a full MXU pass
    # for a single output column, so do it on the VPU (elementwise multiply)
    # + XLU (lane reduce) instead — both slots are otherwise idle here.
    y = jnp.sum(h * w4_ref[...], axis=-1, keepdims=True) + b4_ref[...]  # (tile, 1) f32
    # Relayout per-row scalars into lanes (XLU has slack here) so the HBM
    # writeback is dense full-lane vst instead of 1-lane masked stores.
    o_ref[...] = y.reshape(o_ref.shape)


def _pick_tile(batch, tile_b):
    """Pick a batch tile: multiple of 1024 (keeps the lane-dense out block
    (8,128)-aligned), >= 2 grid steps whenever batch allows it (v7x megacore),
    ~= batch / num_steps so pad / partial-block waste stays bounded, capped at
    `tile_b` (4096 default) so the working set fits v5e's 16 MiB scoped VMEM."""
    num_tiles = pl.cdiv(batch, tile_b)
    if num_tiles == 1:
        if batch > 1024:
            num_tiles = 2           # let v7x's 2nd TensorCore work
    elif num_tiles % 2:
        num_tiles += 1              # prefer an even step count (v7x tail)
    tb = max(1024, _round_up(pl.cdiv(batch, num_tiles), 1024))
    return min(tb, tile_b)


def neural_network_3hidden(x, params, tile_b=TILE_B):
    """Forward pass. x: (batch, ...) with 56 features after flatten.
    params: dict from init_params() (f32, weights stored (in, out)).
    Returns (batch, 1) float32 logits."""
    assert tile_b % 1024 == 0 and tile_b >= 1024
    # nn.Flatten equivalent (plain JAX glue, free for contiguous x).
    x = x.reshape(x.shape[0], -1)
    assert x.shape[1] == 56, f"expected 56 features, got {x.shape[1]}"
    batch = x.shape[0]

    tb = _pick_tile(batch, tile_b)
    grid_steps = pl.cdiv(batch, tb)
    padded_rows = grid_steps * tb

    # Only tiny batches (batch < one tile) are padded; larger batches stream
    # straight from HBM with a ceil-div grid and a partial final block (the
    # out-of-range rows produce garbage that is sliced off below — harmless
    # because every output row depends only on its own input row).
    if batch < tb:
        x = jnp.pad(x, ((0, tb - batch), (0, 0)))

    # Weights to bf16 (tiny, one-time). Biases + the last-layer weight stay f32
    # so all elementwise math is f32 (v5e-friendly).
    w1 = params["w1"].astype(jnp.bfloat16)
    w2 = params["w2"].astype(jnp.bfloat16)
    w3 = params["w3"].astype(jnp.bfloat16)
    w4 = params["w4"].reshape(1, -1).astype(jnp.float32)    # (1, 32) row vector
    b1, b2, b3 = params["b1"], params["b2"], params["b3"]
    b4 = params["b4"].reshape(1, 1)

    operands = (x, w1, b1, w2, b2, w3, b3, w4, b4)

    # x streams through the grid; weights/biases reuse block (0, 0) every step
    # so Pallas keeps them VMEM-resident instead of re-DMAing per step.
    x_spec = pl.BlockSpec((tb, 56), lambda i: (i, 0))
    resident = lambda a: pl.BlockSpec(a.shape, lambda i: (0, 0))
    in_specs = [x_spec] + [resident(a) for a in operands[1:]]
    # Lane-dense output: 128-wide blocks -> unmasked vst + dense HBM writeback.
    out_spec = pl.BlockSpec((tb // _LANES, _LANES), lambda i: (i, 0))

    flops = 2 * padded_rows * (56 * 128 + 128 * 64 + 64 * 32 + 32 * 1)
    bytes_accessed = (padded_rows * 56 * x.dtype.itemsize
                      + sum(int(a.size) * a.dtype.itemsize for a in operands[1:])
                      + padded_rows * 4)
    cost = pl.CostEstimate(flops=flops, transcendentals=0,
                           bytes_accessed=bytes_accessed)

    out = pl.pallas_call(
        mlp_kernel,
        out_shape=jax.ShapeDtypeStruct((padded_rows // _LANES, _LANES),
                                       jnp.float32),
        grid=(grid_steps,),
        in_specs=in_specs,
        out_specs=out_spec,
        compiler_params=pltpu.CompilerParams(
            # Batch tiles are independent -> megacore sharding on v7x,
            # neutral on v5e/v6e.
            dimension_semantics=("parallel",)),
        cost_estimate=cost,
    )(*operands)

    # Row-major (padded_rows//128, 128) -> (padded_rows, 1); rows beyond the
    # real batch (pad / partial-block garbage) are sliced off.
    return out.reshape(padded_rows, 1)[:batch]


def init_params(key):
    """Deterministic init matching nn.Linear shapes (weights pre-transposed to
    (in, out)); uniform(-1/sqrt(fan_in), 1/sqrt(fan_in)) like PyTorch."""
    dims = [(56, 128), (128, 64), (64, 32), (32, 1)]
    params = {}
    keys = jax.random.split(key, 2 * len(dims))
    for i, (fan_in, fan_out) in enumerate(dims):
        bound = 1.0 / jnp.sqrt(jnp.float32(fan_in))
        w = jax.random.uniform(keys[2 * i], (fan_in, fan_out),
                               dtype=jnp.float32, minval=-bound, maxval=bound)
        b = jax.random.uniform(keys[2 * i + 1], (1, fan_out),
                               dtype=jnp.float32, minval=-bound, maxval=bound)
        params[f"w{i + 1}"] = w
        params[f"b{i + 1}"] = b
    return params


def reference_forward(x, params, matmul_dtype=jnp.bfloat16):
    """Pure-JAX reference. matmul_dtype=bf16 mirrors the kernel's dtype
    strategy; matmul_dtype=f32 is the exact PyTorch-equivalent forward."""
    h = x.reshape(x.shape[0], -1)
    for i in (1, 2, 3):
        h = jnp.dot(h.astype(matmul_dtype), params[f"w{i}"].astype(matmul_dtype),
                    preferred_element_type=jnp.float32) + params[f"b{i}"]
        h = jnp.maximum(h, 0.0)
    y = jnp.sum(h * params["w4"].reshape(1, -1), axis=-1, keepdims=True)
    return y + params["b4"].reshape(1, 1)


if __name__ == "__main__":
    key = jax.random.PRNGKey(0)
    pkey, xkey = jax.random.split(key)
    params = init_params(pkey)

    # Small case (exercises flatten + single padded tile).
    batch = 8
    x = jax.random.normal(xkey, (batch, 7, 8), dtype=jnp.float32)  # flattens to 56
    out = jax.block_until_ready(neural_network_3hidden(x, params))
    assert out.shape == (batch, 1), out.shape

    ref_bf16 = reference_forward(x, params, jnp.bfloat16)
    assert jnp.allclose(out, ref_bf16, atol=5e-3, rtol=5e-3), \
        float(jnp.max(jnp.abs(out - ref_bf16)))
    ref_f32 = reference_forward(x, params, jnp.float32)
    assert jnp.allclose(out, ref_f32, atol=5e-2, rtol=5e-2), \
        float(jnp.max(jnp.abs(out - ref_f32)))

    # Larger case (exercises multi-step grid + partial final block, no pad).
    batch2 = 2500
    x2 = jax.random.normal(jax.random.PRNGKey(1), (batch2, 56), dtype=jnp.float32)
    out2 = jax.block_until_ready(neural_network_3hidden(x2, params))
    assert out2.shape == (batch2, 1), out2.shape
    ref2 = reference_forward(x2, params, jnp.bfloat16)
    assert jnp.allclose(out2, ref2, atol=5e-3, rtol=5e-3), \
        float(jnp.max(jnp.abs(out2 - ref2)))

    print("KERNEL_OK")
</pallas_src>

<mosaic_0001>
module attributes {stable_mosaic.version = 11 : i64} {
  func.func @mlp_kernel(%arg0: i32, %arg1: memref<1024x56xf32, #tpu.memory_space<vmem>>, %arg2: memref<56x128xbf16, #tpu.memory_space<vmem>>, %arg3: memref<1x128xf32, #tpu.memory_space<vmem>>, %arg4: memref<128x64xbf16, #tpu.memory_space<vmem>>, %arg5: memref<1x64xf32, #tpu.memory_space<vmem>>, %arg6: memref<64x32xbf16, #tpu.memory_space<vmem>>, %arg7: memref<1x32xf32, #tpu.memory_space<vmem>>, %arg8: memref<1x32xf32, #tpu.memory_space<vmem>>, %arg9: memref<1x1xf32, #tpu.memory_space<vmem>>, %arg10: memref<8x128xf32, #tpu.memory_space<vmem>>) attributes {dimension_semantics = [#tpu.dimension_semantics<parallel>], iteration_bounds = array<i64: 1>, scalar_prefetch = 0 : i64, scratch_operands = 0 : i64, tpu.core_type = #tpu.core_type<tc>, window_params = [{transform_indices = @transform_0, window_bounds = array<i64: 1024, 56>}, {pipeline_mode = #tpu.pipeline_mode<synchronous>, transform_indices = @transform_1, window_bounds = array<i64: 56, 128>}, {pipeline_mode = #tpu.pipeline_mode<synchronous>, transform_indices = @transform_2, window_bounds = array<i64: 1, 128>}, {pipeline_mode = #tpu.pipeline_mode<synchronous>, transform_indices = @transform_3, window_bounds = array<i64: 128, 64>}, {pipeline_mode = #tpu.pipeline_mode<synchronous>, transform_indices = @transform_4, window_bounds = array<i64: 1, 64>}, {pipeline_mode = #tpu.pipeline_mode<synchronous>, transform_indices = @transform_5, window_bounds = array<i64: 64, 32>}, {pipeline_mode = #tpu.pipeline_mode<synchronous>, transform_indices = @transform_6, window_bounds = array<i64: 1, 32>}, {pipeline_mode = #tpu.pipeline_mode<synchronous>, transform_indices = @transform_7, window_bounds = array<i64: 1, 32>}, {pipeline_mode = #tpu.pipeline_mode<synchronous>, transform_indices = @transform_8, window_bounds = array<i64: 1, 1>}, {transform_indices = @transform_9, window_bounds = array<i64: 8, 128>}]} {
    %c0 = arith.constant 0 : index
    %c0_0 = arith.constant 0 : index
    %0 = vector.load %arg1[%c0, %c0_0] : memref<1024x56xf32, #tpu.memory_space<vmem>>, vector<1024x56xf32>
    %1 = arith.truncf %0 : vector<1024x56xf32> to vector<1024x56xbf16>
    %c0_1 = arith.constant 0 : index
    %c0_2 = arith.constant 0 : index
    %2 = vector.load %arg2[%c0_1, %c0_2] : memref<56x128xbf16, #tpu.memory_space<vmem>>, vector<56x128xbf16>
    %cst = arith.constant dense<0.000000e+00> : vector<1024x128xf32>
    %3 = tpu.matmul %1, %2, %cst {dimension_numbers = #tpu.dot_dimension_numbers<[1], [0], [0], [1], [0, 0, 1, 1], [], []>} : vector<1024x56xbf16>, vector<56x128xbf16>, vector<1024x128xf32> -> vector<1024x128xf32>
    %c0_3 = arith.constant 0 : index
    %c0_4 = arith.constant 0 : index
    %4 = vector.load %arg3[%c0_3, %c0_4] : memref<1x128xf32, #tpu.memory_space<vmem>>, vector<1x128xf32>
    %5 = vector.broadcast %4 : vector<1x128xf32> to vector<1024x128xf32>
    %6 = arith.addf %3, %5 : vector<1024x128xf32>
    %cst_5 = arith.constant 0.000000e+00 : f32
    %7 = vector.broadcast %cst_5 : f32 to vector<1024x128xf32>
    %8 = arith.maximumf %6, %7 : vector<1024x128xf32>
    %9 = arith.truncf %8 : vector<1024x128xf32> to vector<1024x128xbf16>
    %c0_6 = arith.constant 0 : index
    %c0_7 = arith.constant 0 : index
    %10 = vector.load %arg4[%c0_6, %c0_7] : memref<128x64xbf16, #tpu.memory_space<vmem>>, vector<128x64xbf16>
    %cst_8 = arith.constant dense<0.000000e+00> : vector<1024x64xf32>
    %11 = tpu.matmul %9, %10, %cst_8 {dimension_numbers = #tpu.dot_dimension_numbers<[1], [0], [0], [1], [0, 0, 1, 1], [], []>} : vector<1024x128xbf16>, vector<128x64xbf16>, vector<1024x64xf32> -> vector<1024x64xf32>
    %c0_9 = arith.constant 0 : index
    %c0_10 = arith.constant 0 : index
    %12 = vector.load %arg5[%c0_9, %c0_10] : memref<1x64xf32, #tpu.memory_space<vmem>>, vector<1x64xf32>
    %13 = vector.broadcast %12 : vector<1x64xf32> to vector<1024x64xf32>
    %14 = arith.addf %11, %13 : vector<1024x64xf32>
    %cst_11 = arith.constant 0.000000e+00 : f32
    %15 = vector.broadcast %cst_11 : f32 to vector<1024x64xf32>
    %16 = arith.maximumf %14, %15 : vector<1024x64xf32>
    %17 = arith.truncf %16 : vector<1024x64xf32> to vector<1024x64xbf16>
    %c0_12 = arith.constant 0 : index
    %c0_13 = arith.constant 0 : index
    %18 = vector.load %arg6[%c0_12, %c0_13] : memref<64x32xbf16, #tpu.memory_space<vmem>>, vector<64x32xbf16>
    %cst_14 = arith.constant dense<0.000000e+00> : vector<1024x32xf32>
    %19 = tpu.matmul %17, %18, %cst_14 {dimension_numbers = #tpu.dot_dimension_numbers<[1], [0], [0], [1], [0, 0, 1, 1], [], []>} : vector<1024x64xbf16>, vector<64x32xbf16>, vector<1024x32xf32> -> vector<1024x32xf32>
    %c0_15 = arith.constant 0 : index
    %c0_16 = arith.constant 0 : index
    %20 = vector.load %arg7[%c0_15, %c0_16] : memref<1x32xf32, #tpu.memory_space<vmem>>, vector<1x32xf32>
    %21 = vector.broadcast %20 : vector<1x32xf32> to vector<1024x32xf32>
    %22 = arith.addf %19, %21 : vector<1024x32xf32>
    %cst_17 = arith.constant 0.000000e+00 : f32
    %23 = vector.broadcast %cst_17 : f32 to vector<1024x32xf32>
    %24 = arith.maximumf %22, %23 : vector<1024x32xf32>
    %c0_18 = arith.constant 0 : index
    %c0_19 = arith.constant 0 : index
    %25 = vector.load %arg8[%c0_18, %c0_19] : memref<1x32xf32, #tpu.memory_space<vmem>>, vector<1x32xf32>
    %26 = vector.broadcast %25 : vector<1x32xf32> to vector<1024x32xf32>
    %27 = arith.mulf %24, %26 : vector<1024x32xf32>
    %cst_20 = arith.constant dense<0.000000e+00> : vector<1024xf32>
    %28 = vector.multi_reduction <add>, %27, %cst_20 [1] : vector<1024x32xf32> to vector<1024xf32>
    %29 = vector.shape_cast %28 : vector<1024xf32> to vector<1024x1xf32>
    %c0_21 = arith.constant 0 : index
    %c0_22 = arith.constant 0 : index
    %30 = vector.load %arg9[%c0_21, %c0_22] : memref<1x1xf32, #tpu.memory_space<vmem>>, vector<1x1xf32>
    %31 = vector.broadcast %30 : vector<1x1xf32> to vector<1024x1xf32>
    %32 = arith.addf %29, %31 : vector<1024x1xf32>
    %33 = vector.shape_cast %32 : vector<1024x1xf32> to vector<8x128xf32>
    %c0_23 = arith.constant 0 : index
    %c0_24 = arith.constant 0 : index
    %34 = vector.load %arg10[%c0_23, %c0_24] : memref<8x128xf32, #tpu.memory_space<vmem>>, vector<8x128xf32>
    tpu.vector_store %arg10[%c0_23, %c0_24], %33 {strides = array<i32>} : memref<8x128xf32, #tpu.memory_space<vmem>>, vector<8x128xf32>,
    return
  }
  func.func @transform_0(%arg0: i32) -> (i32, i32) {
    %c0_i32 = arith.constant 0 : i32
    %c0_i32_0 = arith.constant 0 : i32
    return %arg0, %c0_i32 : i32, i32
  }
  func.func @transform_1(%arg0: i32) -> (i32, i32) {
    %c0_i32 = arith.constant 0 : i32
    %c0_i32_0 = arith.constant 0 : i32
    %c0_i32_1 = arith.constant 0 : i32
    return %c0_i32, %c0_i32_0 : i32, i32
  }
  func.func @transform_2(%arg0: i32) -> (i32, i32) {
    %c0_i32 = arith.constant 0 : i32
    %c0_i32_0 = arith.constant 0 : i32
    %c0_i32_1 = arith.constant 0 : i32
    return %c0_i32, %c0_i32_0 : i32, i32
  }
  func.func @transform_3(%arg0: i32) -> (i32, i32) {
    %c0_i32 = arith.constant 0 : i32
    %c0_i32_0 = arith.constant 0 : i32
    %c0_i32_1 = arith.constant 0 : i32
    return %c0_i32, %c0_i32_0 : i32, i32
  }
  func.func @transform_4(%arg0: i32) -> (i32, i32) {
    %c0_i32 = arith.constant 0 : i32
    %c0_i32_0 = arith.constant 0 : i32
    %c0_i32_1 = arith.constant 0 : i32
    return %c0_i32, %c0_i32_0 : i32, i32
  }
  func.func @transform_5(%arg0: i32) -> (i32, i32) {
    %c0_i32 = arith.constant 0 : i32
    %c0_i32_0 = arith.constant 0 : i32
    %c0_i32_1 = arith.constant 0 : i32
    return %c0_i32, %c0_i32_0 : i32, i32
  }
  func.func @transform_6(%arg0: i32) -> (i32, i32) {
    %c0_i32 = arith.constant 0 : i32
    %c0_i32_0 = arith.constant 0 : i32
    %c0_i32_1 = arith.constant 0 : i32
    return %c0_i32, %c0_i32_0 : i32, i32
  }
  func.func @transform_7(%arg0: i32) -> (i32, i32) {
    %c0_i32 = arith.constant 0 : i32
    %c0_i32_0 = arith.constant 0 : i32
    %c0_i32_1 = arith.constant 0 : i32
    return %c0_i32, %c0_i32_0 : i32, i32
  }
  func.func @transform_8(%arg0: i32) -> (i32, i32) {
    %c0_i32 = arith.constant 0 : i32
    %c0_i32_0 = arith.constant 0 : i32
    %c0_i32_1 = arith.constant 0 : i32
    return %c0_i32, %c0_i32_0 : i32, i32
  }
  func.func @transform_9(%arg0: i32) -> (i32, i32) {
    %c0_i32 = arith.constant 0 : i32
    %c0_i32_0 = arith.constant 0 : i32
    return %arg0, %c0_i32 : i32, i32
  }
}

</mosaic_0001>

<llo_original>
// kernel: tpu_custom_call.1
$region0: #{tpu_custom_call.1}
  #allocation0 [shape = 'u32[]', space=smem, size = 0x4, offset = 0x4, fixed_abs, tag = 'smem constant byte address 0x4 - core index']
  #allocation1 [shape = 'u32[144,128]{1,0:T(1,128)}', space=vmem, size = 0x12000, scoped, tag = 'internal scratch']
  #allocation2 [shape = 'f32[1,1]{1,0:T(1,128)S(1)}', space=vmem, size = 0x200, scoped, tag = 'scoped memory for tpu_custom_call.1']
  %s0 = inlined_call_operand.vmem [shape: f32[1024,56], index: 0, kind: input, shape index: {}]
  %s1 = inlined_call_operand.vmem [shape: bf16[56,128], index: 1, kind: input, shape index: {}]
  %s2 = inlined_call_operand.vmem [shape: f32[1,128], index: 2, kind: input, shape index: {}]
  %s3 = inlined_call_operand.vmem [shape: bf16[128,64], index: 3, kind: input, shape index: {}]
  %s4 = inlined_call_operand.vmem [shape: f32[1,64], index: 4, kind: input, shape index: {}]
  %s5 = inlined_call_operand.vmem [shape: bf16[64,32], index: 5, kind: input, shape index: {}]
  %s6 = inlined_call_operand.vmem [shape: f32[1,32], index: 6, kind: input, shape index: {}]
  %s7 = inlined_call_operand.vmem [shape: f32[1,32], index: 7, kind: input, shape index: {}]
  %s8 = inlined_call_operand.<no memory space> [shape: f32[1,1], index: 8, kind: input, shape index: {}]
  %s9 = inlined_call_operand.hbm [shape: f32[8,128], index: 9, kind: output, shape index: {}]
  %s10 = sld [smem:[#allocation0]]
  $region46: #{tpu_custom_call.1} parent=0
    _
  %s12 = ssub.s32 1, %s10
  %s13 = scalar_select 0, %s12, %s10
  %v14 = vstv %s8
  %15 = vst [vmem:[#allocation2] sm:$0x1] %v14
  $region1: #{tpu_custom_call.1} parent=0
    #allocation3 [shape = 'u8[4096]{0}', space=vmem, size = 0x1000, scoped, tag = 'output window, operand 0, single buffered']
    #allocation4 [shape = 's32[1]{0}', space=sflag, size = 0x4, scoped, tag = 'scoped memory for tpu_custom_call.1']
    %16 = vsyncpa [#allocation4], 0
    // Predicated region
    $region2: #{tpu_custom_call.1} parent=1 // pred_check
      _
    $region3: #{tpu_custom_call.1} parent=1 // pred_check_branch
      %18 = sbr.rel (0) target = $region5
    $region4: #{tpu_custom_call.1} parent=1 // pred_region
      _
    $region5: #{tpu_custom_call.1} parent=1 // pred_fallthru
      _
    // Predicated region
    $region6: #{tpu_custom_call.1} parent=1 // pred_check
      _
    $region7: #{tpu_custom_call.1} parent=1 // pred_check_branch
      %20 = sbr.rel (0) target = $region9
    $region8: #{tpu_custom_call.1} parent=1 // pred_region
      _
    $region9: #{tpu_custom_call.1} parent=1 // pred_fallthru
      _
    // Predicated region
    $region10: #{tpu_custom_call.1} parent=1 // pred_check
      _
    $region11: #{tpu_custom_call.1} parent=1 // pred_check_branch
      %22 = sbr.rel (0) target = $region13
    $region12: #{tpu_custom_call.1} parent=1 // pred_region
      _
    $region13: #{tpu_custom_call.1} parent=1 // pred_fallthru
      _
    // Predicated region
    $region14: #{tpu_custom_call.1} parent=1 // pred_check
      _
    $region15: #{tpu_custom_call.1} parent=1 // pred_check_branch
      %24 = sbr.rel (0) target = $region17
    $region16: #{tpu_custom_call.1} parent=1 // pred_region
      _
    $region17: #{tpu_custom_call.1} parent=1 // pred_fallthru
      _
    // Predicated region
    $region18: #{tpu_custom_call.1} parent=1 // pred_check
      _
    $region19: #{tpu_custom_call.1} parent=1 // pred_check_branch
      %26 = sbr.rel (0) target = $region21
    $region20: #{tpu_custom_call.1} parent=1 // pred_region
      _
    $region21: #{tpu_custom_call.1} parent=1 // pred_fallthru
      _
    // Predicated region
    $region22: #{tpu_custom_call.1} parent=1 // pred_check
      _
    $region23: #{tpu_custom_call.1} parent=1 // pred_check_branch
      %28 = sbr.rel (0) target = $region25
    $region24: #{tpu_custom_call.1} parent=1 // pred_region
      _
    $region25: #{tpu_custom_call.1} parent=1 // pred_fallthru
      _
    // Predicated region
    $region26: #{tpu_custom_call.1} parent=1 // pred_check
      _
    $region27: #{tpu_custom_call.1} parent=1 // pred_check_branch
      %30 = sbr.rel (0) target = $region29
    $region28: #{tpu_custom_call.1} parent=1 // pred_region
      _
    $region29: #{tpu_custom_call.1} parent=1 // pred_fallthru
      _
    // Predicated region
    $region30: #{tpu_custom_call.1} parent=1 // pred_check
      _
    $region31: #{tpu_custom_call.1} parent=1 // pred_check_branch
      %32 = sbr.rel (0) target = $region33
    $region32: #{tpu_custom_call.1} parent=1 // pred_region
      _
    $region33: #{tpu_custom_call.1} parent=1 // pred_fallthru
      _
    // Predicated region
    $region34: #{tpu_custom_call.1} parent=1 // pred_check
      _
    $region35: #{tpu_custom_call.1} parent=1 // pred_check_branch
      %34 = sbr.rel (0) target = $region37
    $region36: #{tpu_custom_call.1} parent=1 // pred_region
      _
    $region37: #{tpu_custom_call.1} parent=1 // pred_fallthru
      _
    %v36 = vld [vmem:[%s0] sm:$0xff]
    %v37 = vld [vmem:[%s0 + $0x8] sm:$0xff]
    %v38 = vld [vmem:[%s0 + $0x10] sm:$0xff]
    %v39 = vld [vmem:[%s0 + $0x18] sm:$0xff]
    %v40 = vld [vmem:[%s0 + $0x20] sm:$0xff]
    %v41 = vld [vmem:[%s0 + $0x28] sm:$0xff]
    %v42 = vld [vmem:[%s0 + $0x30] sm:$0xff]
    %v43 = vld [vmem:[%s0 + $0x38] sm:$0xff]
    %v44 = vld [vmem:[%s0 + $0x40] sm:$0xff]
    %v45 = vld [vmem:[%s0 + $0x48] sm:$0xff]
    %v46 = vld [vmem:[%s0 + $0x50] sm:$0xff]
    %v47 = vld [vmem:[%s0 + $0x58] sm:$0xff]
    %v48 = vld [vmem:[%s0 + $0x60] sm:$0xff]
    %v49 = vld [vmem:[%s0 + $0x68] sm:$0xff]
    %v50 = vld [vmem:[%s0 + $0x70] sm:$0xff]
    %v51 = vld [vmem:[%s0 + $0x78] sm:$0xff]
    %v52 = vld [vmem:[%s0 + $0x80] sm:$0xff]
    %v53 = vld [vmem:[%s0 + $0x88] sm:$0xff]
    %v54 = vld [vmem:[%s0 + $0x90] sm:$0xff]
    %v55 = vld [vmem:[%s0 + $0x98] sm:$0xff]
    %v56 = vld [vmem:[%s0 + $0xa0] sm:$0xff]
    %v57 = vld [vmem:[%s0 + $0xa8] sm:$0xff]
    %v58 = vld [vmem:[%s0 + $0xb0] sm:$0xff]
    %v59 = vld [vmem:[%s0 + $0xb8] sm:$0xff]
    %v60 = vld [vmem:[%s0 + $0xc0] sm:$0xff]
    %v61 = vld [vmem:[%s0 + $0xc8] sm:$0xff]
    %v62 = vld [vmem:[%s0 + $0xd0] sm:$0xff]
    %v63 = vld [vmem:[%s0 + $0xd8] sm:$0xff]
    %v64 = vld [vmem:[%s0 + $0xe0] sm:$0xff]
    %v65 = vld [vmem:[%s0 + $0xe8] sm:$0xff]
    %v66 = vld [vmem:[%s0 + $0xf0] sm:$0xff]
    %v67 = vld [vmem:[%s0 + $0xf8] sm:$0xff]
    %v68 = vld [vmem:[%s0 + $0x100] sm:$0xff]
    %v69 = vld [vmem:[%s0 + $0x108] sm:$0xff]
    %v70 = vld [vmem:[%s0 + $0x110] sm:$0xff]
    %v71 = vld [vmem:[%s0 + $0x118] sm:$0xff]
    %v72 = vld [vmem:[%s0 + $0x120] sm:$0xff]
    %v73 = vld [vmem:[%s0 + $0x128] sm:$0xff]
    %v74 = vld [vmem:[%s0 + $0x130] sm:$0xff]
    %v75 = vld [vmem:[%s0 + $0x138] sm:$0xff]
    %v76 = vld [vmem:[%s0 + $0x140] sm:$0xff]
    %v77 = vld [vmem:[%s0 + $0x148] sm:$0xff]
    %v78 = vld [vmem:[%s0 + $0x150] sm:$0xff]
    %v79 = vld [vmem:[%s0 + $0x158] sm:$0xff]
    %v80 = vld [vmem:[%s0 + $0x160] sm:$0xff]
    %v81 = vld [vmem:[%s0 + $0x168] sm:$0xff]
    %v82 = vld [vmem:[%s0 + $0x170] sm:$0xff]
    %v83 = vld [vmem:[%s0 + $0x178] sm:$0xff]
    %v84 = vld [vmem:[%s0 + $0x180] sm:$0xff]
    %v85 = vld [vmem:[%s0 + $0x188] sm:$0xff]
    %v86 = vld [vmem:[%s0 + $0x190] sm:$0xff]
    %v87 = vld [vmem:[%s0 + $0x198] sm:$0xff]
    %v88 = vld [vmem:[%s0 + $0x1a0] sm:$0xff]
    %v89 = vld [vmem:[%s0 + $0x1a8] sm:$0xff]
    %v90 = vld [vmem:[%s0 + $0x1b0] sm:$0xff]
    %v91 = vld [vmem:[%s0 + $0x1b8] sm:$0xff]
    %v92 = vld [vmem:[%s0 + $0x1c0] sm:$0xff]
    %v93 = vld [vmem:[%s0 + $0x1c8] sm:$0xff]
    %v94 = vld [vmem:[%s0 + $0x1d0] sm:$0xff]
    %v95 = vld [vmem:[%s0 + $0x1d8] sm:$0xff]
    %v96 = vld [vmem:[%s0 + $0x1e0] sm:$0xff]
    %v97 = vld [vmem:[%s0 + $0x1e8] sm:$0xff]
    %v98 = vld [vmem:[%s0 + $0x1f0] sm:$0xff]
    %v99 = vld [vmem:[%s0 + $0x1f8] sm:$0xff]
    %v100 = vld [vmem:[%s0 + $0x200] sm:$0xff]
    %v101 = vld [vmem:[%s0 + $0x208] sm:$0xff]
    %v102 = vld [vmem:[%s0 + $0x210] sm:$0xff]
    %v103 = vld [vmem:[%s0 + $0x218] sm:$0xff]
    %v104 = vld [vmem:[%s0 + $0x220] sm:$0xff]
    %v105 = vld [vmem:[%s0 + $0x228] sm:$0xff]
    %v106 = vld [vmem:[%s0 + $0x230] sm:$0xff]
    %v107 = vld [vmem:[%s0 + $0x238] sm:$0xff]
    %v108 = vld [vmem:[%s0 + $0x240] sm:$0xff]
    %v109 = vld [vmem:[%s0 + $0x248] sm:$0xff]
    %v110 = vld [vmem:[%s0 + $0x250] sm:$0xff]
    %v111 = vld [vmem:[%s0 + $0x258] sm:$0xff]
    %v112 = vld [vmem:[%s0 + $0x260] sm:$0xff]
    %v113 = vld [vmem:[%s0 + $0x268] sm:$0xff]
    %v114 = vld [vmem:[%s0 + $0x270] sm:$0xff]
    %v115 = vld [vmem:[%s0 + $0x278] sm:$0xff]
    %v116 = vld [vmem:[%s0 + $0x280] sm:$0xff]
    %v117 = vld [vmem:[%s0 + $0x288] sm:$0xff]
    %v118 = vld [vmem:[%s0 + $0x290] sm:$0xff]
    %v119 = vld [vmem:[%s0 + $0x298] sm:$0xff]
    %v120 = vld [vmem:[%s0 + $0x2a0] sm:$0xff]
    %v121 = vld [vmem:[%s0 + $0x2a8] sm:$0xff]
    %v122 = vld [vmem:[%s0 + $0x2b0] sm:$0xff]
    %v123 = vld [vmem:[%s0 + $0x2b8] sm:$0xff]
    %v124 = vld [vmem:[%s0 + $0x2c0] sm:$0xff]
    %v125 = vld [vmem:[%s0 + $0x2c8] sm:$0xff]
    %v126 = vld [vmem:[%s0 + $0x2d0] sm:$0xff]
    %v127 = vld [vmem:[%s0 + $0x2d8] sm:$0xff]
    %v128 = vld [vmem:[%s0 + $0x2e0] sm:$0xff]
    %v129 = vld [vmem:[%s0 + $0x2e8] sm:$0xff]
    %v130 = vld [vmem:[%s0 + $0x2f0] sm:$0xff]
    %v131 = vld [vmem:[%s0 + $0x2f8] sm:$0xff]
    %v132 = vld [vmem:[%s0 + $0x300] sm:$0xff]
    %v133 = vld [vmem:[%s0 + $0x308] sm:$0xff]
    %v134 = vld [vmem:[%s0 + $0x310] sm:$0xff]
    %v135 = vld [vmem:[%s0 + $0x318] sm:$0xff]
    %v136 = vld [vmem:[%s0 + $0x320] sm:$0xff]
    %v137 = vld [vmem:[%s0 + $0x328] sm:$0xff]
    %v138 = vld [vmem:[%s0 + $0x330] sm:$0xff]
    %v139 = vld [vmem:[%s0 + $0x338] sm:$0xff]
    %v140 = vld [vmem:[%s0 + $0x340] sm:$0xff]
    %v141 = vld [vmem:[%s0 + $0x348] sm:$0xff]
    %v142 = vld [vmem:[%s0 + $0x350] sm:$0xff]
    %v143 = vld [vmem:[%s0 + $0x358] sm:$0xff]
    %v144 = vld [vmem:[%s0 + $0x360] sm:$0xff]
    %v145 = vld [vmem:[%s0 + $0x368] sm:$0xff]
    %v146 = vld [vmem:[%s0 + $0x370] sm:$0xff]
    %v147 = vld [vmem:[%s0 + $0x378] sm:$0xff]
    %v148 = vld [vmem:[%s0 + $0x380] sm:$0xff]
    %v149 = vld [vmem:[%s0 + $0x388] sm:$0xff]
    %v150 = vld [vmem:[%s0 + $0x390] sm:$0xff]
    %v151 = vld [vmem:[%s0 + $0x398] sm:$0xff]
    %v152 = vld [vmem:[%s0 + $0x3a0] sm:$0xff]
    %v153 = vld [vmem:[%s0 + $0x3a8] sm:$0xff]
    %v154 = vld [vmem:[%s0 + $0x3b0] sm:$0xff]
    %v155 = vld [vmem:[%s0 + $0x3b8] sm:$0xff]
    %v156 = vld [vmem:[%s0 + $0x3c0] sm:$0xff]
    %v157 = vld [vmem:[%s0 + $0x3c8] sm:$0xff]
    %v158 = vld [vmem:[%s0 + $0x3d0] sm:$0xff]
    %v159 = vld [vmem:[%s0 + $0x3d8] sm:$0xff]
    %v160 = vld [vmem:[%s0 + $0x3e0] sm:$0xff]
    %v161 = vld [vmem:[%s0 + $0x3e8] sm:$0xff]
    %v162 = vld [vmem:[%s0 + $0x3f0] sm:$0xff]
    %v163 = vld [vmem:[%s0 + $0x3f8] sm:$0xff]
    %v164 = vpack.c.bf16 %v37, %v36
    %v165 = vpack.c.bf16 %v39, %v38
    %v166 = vpack.c.bf16 %v41, %v40
    %v167 = vpack.c.bf16 %v43, %v42
    %v168 = vpack.c.bf16 %v45, %v44
    %v169 = vpack.c.bf16 %v47, %v46
    %v170 = vpack.c.bf16 %v49, %v48
    %v171 = vpack.c.bf16 %v51, %v50
    %v172 = vpack.c.bf16 %v53, %v52
    %v173 = vpack.c.bf16 %v55, %v54
    %v174 = vpack.c.bf16 %v57, %v56
    %v175 = vpack.c.bf16 %v59, %v58
    %v176 = vpack.c.bf16 %v61, %v60
    %v177 = vpack.c.bf16 %v63, %v62
    %v178 = vpack.c.bf16 %v65, %v64
    %v179 = vpack.c.bf16 %v67, %v66
    %v180 = vpack.c.bf16 %v69, %v68
    %v181 = vpack.c.bf16 %v71, %v70
    %v182 = vpack.c.bf16 %v73, %v72
    %v183 = vpack.c.bf16 %v75, %v74
    %v184 = vpack.c.bf16 %v77, %v76
    %v185 = vpack.c.bf16 %v79, %v78
    %v186 = vpack.c.bf16 %v81, %v80
    %v187 = vpack.c.bf16 %v83, %v82
    %v188 = vpack.c.bf16 %v85, %v84
    %v189 = vpack.c.bf16 %v87, %v86
    %v190 = vpack.c.bf16 %v89, %v88
    %v191 = vpack.c.bf16 %v91, %v90
    %v192 = vpack.c.bf16 %v93, %v92
    %v193 = vpack.c.bf16 %v95, %v94
    %v194 = vpack.c.bf16 %v97, %v96
    %v195 = vpack.c.bf16 %v99, %v98
    %v196 = vpack.c.bf16 %v101, %v100
    %v197 = vpack.c.bf16 %v103, %v102
    %v198 = vpack.c.bf16 %v105, %v104
    %v199 = vpack.c.bf16 %v107, %v106
    %v200 = vpack.c.bf16 %v109, %v108
    %v201 = vpack.c.bf16 %v111, %v110
    %v202 = vpack.c.bf16 %v113, %v112
    %v203 = vpack.c.bf16 %v115, %v114
    %v204 = vpack.c.bf16 %v117, %v116
    %v205 = vpack.c.bf16 %v119, %v118
    %v206 = vpack.c.bf16 %v121, %v120
    %v207 = vpack.c.bf16 %v123, %v122
    %v208 = vpack.c.bf16 %v125, %v124
    %v209 = vpack.c.bf16 %v127, %v126
    %v210 = vpack.c.bf16 %v129, %v128
    %v211 = vpack.c.bf16 %v131, %v130
    %v212 = vpack.c.bf16 %v133, %v132
    %v213 = vpack.c.bf16 %v135, %v134
    %v214 = vpack.c.bf16 %v137, %v136
    %v215 = vpack.c.bf16 %v139, %v138
    %v216 = vpack.c.bf16 %v141, %v140
    %v217 = vpack.c.bf16 %v143, %v142
    %v218 = vpack.c.bf16 %v145, %v144
    %v219 = vpack.c.bf16 %v147, %v146
    %v220 = vpack.c.bf16 %v149, %v148
    %v221 = vpack.c.bf16 %v151, %v150
    %v222 = vpack.c.bf16 %v153, %v152
    %v223 = vpack.c.bf16 %v155, %v154
    %v224 = vpack.c.bf16 %v157, %v156
    %v225 = vpack.c.bf16 %v159, %v158
    %v226 = vpack.c.bf16 %v161, %v160
    %v227 = vpack.c.bf16 %v163, %v162
    %v228 = vld [vmem:[%s1] sm:$0xf]
    %v229 = vld [vmem:[%s1 + $0x4] sm:$0xf]
    %v230 = vld [vmem:[%s1 + $0x8] sm:$0xf]
    %v231 = vld [vmem:[%s1 + $0xc] sm:$0xf]
    %v232 = vld [vmem:[%s1 + $0x10] sm:$0xf]
    %v233 = vld [vmem:[%s1 + $0x14] sm:$0xf]
    %v234 = vld [vmem:[%s1 + $0x18] sm:$0xf]
    %v235 = vld [vmem:[%s2] sm:$0x1]
    %v237 = vlaneseq
    %v238 = vshrl.u32 %v237, 7
    %v239 = vsub.s32 0, %v238
    %v240 = vrot.slane %v235, %v239
    %v249 = vunpack.c.l.b16 %v228
    %v250 = vunpack.c.l.b16 %v229
    %v251 = vunpack.c.l.b16 %v230
    %v252 = vunpack.c.l.b16 %v231
    %v253 = vunpack.c.l.b16 %v232
    %v254 = vunpack.c.l.b16 %v233
    %v255 = vunpack.c.l.b16 %v234
    %v256 = vpack.c.b16 %v250, %v249
    %v257 = vpack.c.b16 %v252, %v251
    %v258 = vpack.c.b16 %v254, %v253
    %v259 = vpack.c.b16 %v255, %v255
    %vm263 = vcmask 457728
    %v265 = vsel %vm263, %v164, 0
    %v268 = vsel %vm263, %v165, 0
    %v271 = vsel %vm263, %v166, 0
    %v274 = vsel %vm263, %v167, 0
    %v277 = vsel %vm263, %v168, 0
    %v280 = vsel %vm263, %v169, 0
    %v283 = vsel %vm263, %v170, 0
    %v286 = vsel %vm263, %v171, 0
    %v289 = vsel %vm263, %v172, 0
    %v292 = vsel %vm263, %v173, 0
    %v295 = vsel %vm263, %v174, 0
    %v298 = vsel %vm263, %v175, 0
    %v301 = vsel %vm263, %v176, 0
    %v304 = vsel %vm263, %v177, 0
    %v307 = vsel %vm263, %v178, 0
    %v310 = vsel %vm263, %v179, 0
    %v313 = vsel %vm263, %v180, 0
    %v316 = vsel %vm263, %v181, 0
    %v319 = vsel %vm263, %v182, 0
    %v322 = vsel %vm263, %v183, 0
    %v325 = vsel %vm263, %v184, 0
    %v328 = vsel %vm263, %v185, 0
    %v331 = vsel %vm263, %v186, 0
    %v334 = vsel %vm263, %v187, 0
    %v337 = vsel %vm263, %v188, 0
    %v340 = vsel %vm263, %v189, 0
    %v343 = vsel %vm263, %v190, 0
    %v346 = vsel %vm263, %v191, 0
    %v349 = vsel %vm263, %v192, 0
    %v352 = vsel %vm263, %v193, 0
    %v355 = vsel %vm263, %v194, 0
    %v358 = vsel %vm263, %v195, 0
    %v361 = vsel %vm263, %v196, 0
    %v364 = vsel %vm263, %v197, 0
    %v367 = vsel %vm263, %v198, 0
    %v370 = vsel %vm263, %v199, 0
    %v373 = vsel %vm263, %v200, 0
    %v376 = vsel %vm263, %v201, 0
    %v379 = vsel %vm263, %v202, 0
    %v382 = vsel %vm263, %v203, 0
    %v385 = vsel %vm263, %v204, 0
    %v388 = vsel %vm263, %v205, 0
    %v391 = vsel %vm263, %v206, 0
    %v394 = vsel %vm263, %v207, 0
    %v397 = vsel %vm263, %v208, 0
    %v400 = vsel %vm263, %v209, 0
    %v403 = vsel %vm263, %v210, 0
    %v406 = vsel %vm263, %v211, 0
    %v409 = vsel %vm263, %v212, 0
    %v412 = vsel %vm263, %v213, 0
    %v415 = vsel %vm263, %v214, 0
    %v418 = vsel %vm263, %v215, 0
    %v421 = vsel %vm263, %v216, 0
    %v424 = vsel %vm263, %v217, 0
    %v427 = vsel %vm263, %v218, 0
    %v430 = vsel %vm263, %v219, 0
    %v433 = vsel %vm263, %v220, 0
    %v436 = vsel %vm263, %v221, 0
    %v439 = vsel %vm263, %v222, 0
    %v442 = vsel %vm263, %v223, 0
    %v445 = vsel %vm263, %v224, 0
    %v448 = vsel %vm263, %v225, 0
    %v451 = vsel %vm263, %v226, 0
    %v454 = vsel %vm263, %v227, 0
    %vm456 = vcmask 1043456
    %v458 = vsel %vm456, %v259, 0
    %460 = vmatprep.subr.bf16.mxu0 0
    %461 = vmatpush1.bf16.msra.mxu0 %v256
    %462 = vmatprep.subr.bf16.mxu0 0
    %463 = vmatpush1.bf16.msra.mxu0 %v257
    %464 = vmatprep.subr.bf16.mxu0 0
    %465 = vmatpush1.bf16.msra.mxu0 %v258
    %466 = vmatprep.subr.bf16.mxu0 0
    %467 = vmatpush1.bf16.msra.mxu0 %v458
    %468 = vmatprep.subr.bf16.mxu0 0
    %469 = vmatpush1.bf16.msra.mxu0 0
    %470 = vmatprep.subr.bf16.mxu0 0
    %471 = vmatpush1.bf16.msra.mxu0 0
    %472 = vmatprep.subr.bf16.mxu0 0
    %473 = vmatpush1.bf16.msra.mxu0 0
    %474 = vmatprep.subr.bf16.mxu0 0
    %475 = vmatpush1.bf16.msra.mxu0 0
    %476 = vmatprep.subr.bf16.mxu0 0
    %477 = vmatpush1.bf16.msra.mxu0 0
    %478 = vmatprep.subr.bf16.mxu0 0
    %479 = vmatpush1.bf16.msra.mxu0 0
    %480 = vmatprep.subr.bf16.mxu0 0
    %481 = vmatpush1.bf16.msra.mxu0 0
    %482 = vmatprep.subr.bf16.mxu0 0
    %483 = vmatpush1.bf16.msra.mxu0 0
    %484 = vmatprep.subr.bf16.mxu0 0
    %485 = vmatpush1.bf16.msra.mxu0 0
    %486 = vmatprep.subr.bf16.mxu0 0
    %487 = vmatpush1.bf16.msra.mxu0 0
    %488 = vmatprep.subr.bf16.mxu0 0
    %489 = vmatpush1.bf16.msra.mxu0 0
    %490 = vmatprep.subr.bf16.mxu0 0
    %491 = vmatpush1.bf16.msra.mxu0 0
    %492 = vmatprep.mubr.bf16.mxu0 0
    %493 = vmatmul.mubr.bf16.gmra.mrb[0].mxu0 %v265
    %v494 = vpop.f32.mrb[0].mxu0
    %v495 = vadd.f32 %v240, %v494
    %v496 = vpop.f32.mrb[0].mxu0
    %v497 = vpop.f32.mrb[0].mxu0
    %v498 = vadd.f32 %v240, %v497
    %v499 = vpop.f32.mrb[0].mxu0
    %500 = vmatprep.mubr.bf16.mxu0 0
    %501 = vmatmul.mubr.bf16.gmra.mrb[0].mxu0 %v268
    %v502 = vpop.f32.mrb[0].mxu0
    %v503 = vadd.f32 %v240, %v502
    %v504 = vpop.f32.mrb[0].mxu0
    %v505 = vpop.f32.mrb[0].mxu0
    %v506 = vadd.f32 %v240, %v505
    %v507 = vpop.f32.mrb[0].mxu0
    %508 = vmatprep.mubr.bf16.mxu0 0
    %509 = vmatmul.mubr.bf16.gmra.mrb[0].mxu0 %v271
    %v510 = vpop.f32.mrb[0].mxu0
    %v511 = vadd.f32 %v240, %v510
    %v512 = vpop.f32.mrb[0].mxu0
    %v513 = vpop.f32.mrb[0].mxu0
    %v514 = vadd.f32 %v240, %v513
    %v515 = vpop.f32.mrb[0].mxu0
    %516 = vmatprep.mubr.bf16.mxu0 0
    %517 = vmatmul.mubr.bf16.gmra.mrb[0].mxu0 %v274
    %v518 = vpop.f32.mrb[0].mxu0
    %v519 = vadd.f32 %v240, %v518
    %v520 = vpop.f32.mrb[0].mxu0
    %v521 = vpop.f32.mrb[0].mxu0
    %v522 = vadd.f32 %v240, %v521
    %v523 = vpop.f32.mrb[0].mxu0
    %524 = vmatprep.mubr.bf16.mxu0 0
    %525 = vmatmul.mubr.bf16.gmra.mrb[0].mxu0 %v277
    %v526 = vpop.f32.mrb[0].mxu0
    %v527 = vadd.f32 %v240, %v526
    %v528 = vpop.f32.mrb[0].mxu0
    %v529 = vpop.f32.mrb[0].mxu0
    %v530 = vadd.f32 %v240, %v529
    %v531 = vpop.f32.mrb[0].mxu0
    %532 = vmatprep.mubr.bf16.mxu0 0
    %533 = vmatmul.mubr.bf16.gmra.mrb[0].mxu0 %v280
    %v534 = vpop.f32.mrb[0].mxu0
    %v535 = vadd.f32 %v240, %v534
    %v536 = vpop.f32.mrb[0].mxu0
    %v537 = vpop.f32.mrb[0].mxu0
    %v538 = vadd.f32 %v240, %v537
    %v539 = vpop.f32.mrb[0].mxu0
    %540 = vmatprep.mubr.bf16.mxu0 0
    %541 = vmatmul.mubr.bf16.gmra.mrb[0].mxu0 %v283
    %v542 = vpop.f32.mrb[0].mxu0
    %v543 = vadd.f32 %v240, %v542
    %v544 = vpop.f32.mrb[0].mxu0
    %v545 = vpop.f32.mrb[0].mxu0
    %v546 = vadd.f32 %v240, %v545
    %v547 = vpop.f32.mrb[0].mxu0
    %548 = vmatprep.mubr.bf16.mxu0 0
    %549 = vmatmul.mubr.bf16.gmra.mrb[0].mxu0 %v286
    %v550 = vpop.f32.mrb[0].mxu0
    %v551 = vadd.f32 %v240, %v550
    %v552 = vpop.f32.mrb[0].mxu0
    %v553 = vpop.f32.mrb[0].mxu0
    %v554 = vadd.f32 %v240, %v553
    %v555 = vpop.f32.mrb[0].mxu0
    %556 = vmatprep.mubr.bf16.mxu0 0
    %557 = vmatmul.mubr.bf16.gmra.mrb[0].mxu0 %v289
    %v558 = vpop.f32.mrb[0].mxu0
    %v559 = vadd.f32 %v240, %v558
    %v560 = vpop.f32.mrb[0].mxu0
    %v561 = vpop.f32.mrb[0].mxu0
    %v562 = vadd.f32 %v240, %v561
    %v563 = vpop.f32.mrb[0].mxu0
    %564 = vmatprep.mubr.bf16.mxu0 0
    %565 = vmatmul.mubr.bf16.gmra.mrb[0].mxu0 %v292
    %v566 = vpop.f32.mrb[0].mxu0
    %v567 = vadd.f32 %v240, %v566
    %v568 = vpop.f32.mrb[0].mxu0
    %v569 = vpop.f32.mrb[0].mxu0
    %v570 = vadd.f32 %v240, %v569
    %v571 = vpop.f32.mrb[0].mxu0
    %572 = vmatprep.mubr.bf16.mxu0 0
    %573 = vmatmul.mubr.bf16.gmra.mrb[0].mxu0 %v295
    %v574 = vpop.f32.mrb[0].mxu0
    %v575 = vadd.f32 %v240, %v574
    %v576 = vpop.f32.mrb[0].mxu0
    %v577 = vpop.f32.mrb[0].mxu0
    %v578 = vadd.f32 %v240, %v577
    %v579 = vpop.f32.mrb[0].mxu0
    %580 = vmatprep.mubr.bf16.mxu0 0
    %581 = vmatmul.mubr.bf16.gmra.mrb[0].mxu0 %v298
    %v582 = vpop.f32.mrb[0].mxu0
    %v583 = vadd.f32 %v240, %v582
    %v584 = vpop.f32.mrb[0].mxu0
    %v585 = vpop.f32.mrb[0].mxu0
    %v586 = vadd.f32 %v240, %v585
    %v587 = vpop.f32.mrb[0].mxu0
    %588 = vmatprep.mubr.bf16.mxu0 0
    %589 = vmatmul.mubr.bf16.gmra.mrb[0].mxu0 %v301
    %v590 = vpop.f32.mrb[0].mxu0
    %v591 = vadd.f32 %v240, %v590
    %v592 = vpop.f32.mrb[0].mxu0
    %v593 = vpop.f32.mrb[0].mxu0
    %v594 = vadd.f32 %v240, %v593
    %v595 = vpop.f32.mrb[0].mxu0
    %596 = vmatprep.mubr.bf16.mxu0 0
    %597 = vmatmul.mubr.bf16.gmra.mrb[0].mxu0 %v304
    %v598 = vpop.f32.mrb[0].mxu0
    %v599 = vadd.f32 %v240, %v598
    %v600 = vpop.f32.mrb[0].mxu0
    %v601 = vpop.f32.mrb[0].mxu0
    %v602 = vadd.f32 %v240, %v601
    %v603 = vpop.f32.mrb[0].mxu0
    %604 = vmatprep.mubr.bf16.mxu0 0
    %605 = vmatmul.mubr.bf16.gmra.mrb[0].mxu0 %v307
    %v606 = vpop.f32.mrb[0].mxu0
    %v607 = vadd.f32 %v240, %v606
    %v608 = vpop.f32.mrb[0].mxu0
    %v609 = vpop.f32.mrb[0].mxu0
    %v610 = vadd.f32 %v240, %v609
    %v611 = vpop.f32.mrb[0].mxu0
    %612 = vmatprep.mubr.bf16.mxu0 0
    %613 = vmatmul.mubr.bf16.gmra.mrb[0].mxu0 %v310
    %v614 = vpop.f32.mrb[0].mxu0
    %v615 = vadd.f32 %v240, %v614
    %v616 = vpop.f32.mrb[0].mxu0
    %v617 = vpop.f32.mrb[0].mxu0
    %v618 = vadd.f32 %v240, %v617
    %v619 = vpop.f32.mrb[0].mxu0
    %620 = vmatprep.mubr.bf16.mxu0 0
    %621 = vmatmul.mubr.bf16.gmra.mrb[0].mxu0 %v313
    %v622 = vpop.f32.mrb[0].mxu0
    %v623 = vadd.f32 %v240, %v622
    %v624 = vpop.f32.mrb[0].mxu0
    %v625 = vpop.f32.mrb[0].mxu0
    %v626 = vadd.f32 %v240, %v625
    %v627 = vpop.f32.mrb[0].mxu0
    %628 = vmatprep.mubr.bf16.mxu0 0
    %629 = vmatmul.mubr.bf16.gmra.mrb[0].mxu0 %v316
    %v630 = vpop.f32.mrb[0].mxu0
    %v631 = vadd.f32 %v240, %v630
    %v632 = vpop.f32.mrb[0].mxu0
    %v633 = vpop.f32.mrb[0].mxu0
    %v634 = vadd.f32 %v240, %v633
    %v635 = vpop.f32.mrb[0].mxu0
    %636 = vmatprep.mubr.bf16.mxu0 0
    %637 = vmatmul.mubr.bf16.gmra.mrb[0].mxu0 %v319
    %v638 = vpop.f32.mrb[0].mxu0
    %v639 = vadd.f32 %v240, %v638
    %v640 = vpop.f32.mrb[0].mxu0
    %v641 = vpop.f32.mrb[0].mxu0
    %v642 = vadd.f32 %v240, %v641
    %v643 = vpop.f32.mrb[0].mxu0
    %644 = vmatprep.mubr.bf16.mxu0 0
    %645 = vmatmul.mubr.bf16.gmra.mrb[0].mxu0 %v322
    %v646 = vpop.f32.mrb[0].mxu0
    %v647 = vadd.f32 %v240, %v646
    %v648 = vpop.f32.mrb[0].mxu0
    %v649 = vpop.f32.mrb[0].mxu0
    %v650 = vadd.f32 %v240, %v649
    %v651 = vpop.f32.mrb[0].mxu0
    %652 = vmatprep.mubr.bf16.mxu0 0
    %653 = vmatmul.mubr.bf16.gmra.mrb[0].mxu0 %v325
    %v654 = vpop.f32.mrb[0].mxu0
    %v655 = vadd.f32 %v240, %v654
    %v656 = vpop.f32.mrb[0].mxu0
    %v657 = vpop.f32.mrb[0].mxu0
    %v658 = vadd.f32 %v240, %v657
    %v659 = vpop.f32.mrb[0].mxu0
    %660 = vmatprep.mubr.bf16.mxu0 0
    %661 = vmatmul.mubr.bf16.gmra.mrb[0].mxu0 %v328
    %v662 = vpop.f32.mrb[0].mxu0
    %v663 = vadd.f32 %v240, %v662
    %v664 = vpop.f32.mrb[0].mxu0
    %v665 = vpop.f32.mrb[0].mxu0
    %v666 = vadd.f32 %v240, %v665
    %v667 = vpop.f32.mrb[0].mxu0
    %668 = vmatprep.mubr.bf16.mxu0 0
    %669 = vmatmul.mubr.bf16.gmra.mrb[0].mxu0 %v331
    %v670 = vpop.f32.mrb[0].mxu0
    %v671 = vadd.f32 %v240, %v670
    %v672 = vpop.f32.mrb[0].mxu0
    %v673 = vpop.f32.mrb[0].mxu0
    %v674 = vadd.f32 %v240, %v673
    %v675 = vpop.f32.mrb[0].mxu0
    %676 = vmatprep.mubr.bf16.mxu0 0
    %677 = vmatmul.mubr.bf16.gmra.mrb[0].mxu0 %v334
    %v678 = vpop.f32.mrb[0].mxu0
    %v679 = vadd.f32 %v240, %v678
    %v680 = vpop.f32.mrb[0].mxu0
    %v681 = vpop.f32.mrb[0].mxu0
    %v682 = vadd.f32 %v240, %v681
    %v683 = vpop.f32.mrb[0].mxu0
    %684 = vmatprep.mubr.bf16.mxu0 0
    %685 = vmatmul.mubr.bf16.gmra.mrb[0].mxu0 %v337
    %v686 = vpop.f32.mrb[0].mxu0
    %v687 = vadd.f32 %v240, %v686
    %v688 = vpop.f32.mrb[0].mxu0
    %v689 = vpop.f32.mrb[0].mxu0
    %v690 = vadd.f32 %v240, %v689
    %v691 = vpop.f32.mrb[0].mxu0
    %692 = vmatprep.mubr.bf16.mxu0 0
    %693 = vmatmul.mubr.bf16.gmra.mrb[0].mxu0 %v340
    %v694 = vpop.f32.mrb[0].mxu0
    %v695 = vadd.f32 %v240, %v694
    %v696 = vpop.f32.mrb[0].mxu0
    %v697 = vpop.f32.mrb[0].mxu0
    %v698 = vadd.f32 %v240, %v697
    %v699 = vpop.f32.mrb[0].mxu0
    %700 = vmatprep.mubr.bf16.mxu0 0
    %701 = vmatmul.mubr.bf16.gmra.mrb[0].mxu0 %v343
    %v702 = vpop.f32.mrb[0].mxu0
    %v703 = vadd.f32 %v240, %v702
    %v704 = vpop.f32.mrb[0].mxu0
    %v705 = vpop.f32.mrb[0].mxu0
    %v706 = vadd.f32 %v240, %v705
    %v707 = vpop.f32.mrb[0].mxu0
    %708 = vmatprep.mubr.bf16.mxu0 0
    %709 = vmatmul.mubr.bf16.gmra.mrb[0].mxu0 %v346
    %v710 = vpop.f32.mrb[0].mxu0
    %v711 = vadd.f32 %v240, %v710
    %v712 = vpop.f32.mrb[0].mxu0
    %v713 = vpop.f32.mrb[0].mxu0
    %v714 = vadd.f32 %v240, %v713
    %v715 = vpop.f32.mrb[0].mxu0
    %716 = vmatprep.mubr.bf16.mxu0 0
    %717 = vmatmul.mubr.bf16.gmra.mrb[0].mxu0 %v349
    %v718 = vpop.f32.mrb[0].mxu0
    %v719 = vadd.f32 %v240, %v718
    %v720 = vpop.f32.mrb[0].mxu0
    %v721 = vpop.f32.mrb[0].mxu0
    %v722 = vadd.f32 %v240, %v721
    %v723 = vpop.f32.mrb[0].mxu0
    %724 = vmatprep.mubr.bf16.mxu0 0
    %725 = vmatmul.mubr.bf16.gmra.mrb[0].mxu0 %v352
    %v726 = vpop.f32.mrb[0].mxu0
    %v727 = vadd.f32 %v240, %v726
    %v728 = vpop.f32.mrb[0].mxu0
    %v729 = vpop.f32.mrb[0].mxu0
    %v730 = vadd.f32 %v240, %v729
    %v731 = vpop.f32.mrb[0].mxu0
    %732 = vmatprep.mubr.bf16.mxu0 0
    %733 = vmatmul.mubr.bf16.gmra.mrb[0].mxu0 %v355
    %v734 = vpop.f32.mrb[0].mxu0
    %v735 = vadd.f32 %v240, %v734
    %v736 = vpop.f32.mrb[0].mxu0
    %v737 = vpop.f32.mrb[0].mxu0
    %v738 = vadd.f32 %v240, %v737
    %v739 = vpop.f32.mrb[0].mxu0
    %740 = vmatprep.mubr.bf16.mxu0 0
    %741 = vmatmul.mubr.bf16.gmra.mrb[0].mxu0 %v358
    %v742 = vpop.f32.mrb[0].mxu0
    %v743 = vadd.f32 %v240, %v742
    %v744 = vpop.f32.mrb[0].mxu0
    %v745 = vpop.f32.mrb[0].mxu0
    %v746 = vadd.f32 %v240, %v745
    %v747 = vpop.f32.mrb[0].mxu0
    %748 = vmatprep.mubr.bf16.mxu0 0
    %749 = vmatmul.mubr.bf16.gmra.mrb[0].mxu0 %v361
    %v750 = vpop.f32.mrb[0].mxu0
    %v751 = vadd.f32 %v240, %v750
    %v752 = vpop.f32.mrb[0].mxu0
    %v753 = vpop.f32.mrb[0].mxu0
    %v754 = vadd.f32 %v240, %v753
    %v755 = vpop.f32.mrb[0].mxu0
    %756 = vmatprep.mubr.bf16.mxu0 0
    %757 = vmatmul.mubr.bf16.gmra.mrb[0].mxu0 %v364
    %v758 = vpop.f32.mrb[0].mxu0
    %v759 = vadd.f32 %v240, %v758
    %v760 = vpop.f32.mrb[0].mxu0
    %v761 = vpop.f32.mrb[0].mxu0
    %v762 = vadd.f32 %v240, %v761
    %v763 = vpop.f32.mrb[0].mxu0
    %764 = vmatprep.mubr.bf16.mxu0 0
    %765 = vmatmul.mubr.bf16.gmra.mrb[0].mxu0 %v367
    %v766 = vpop.f32.mrb[0].mxu0
    %v767 = vadd.f32 %v240, %v766
    %v768 = vpop.f32.mrb[0].mxu0
    %v769 = vpop.f32.mrb[0].mxu0
    %v770 = vadd.f32 %v240, %v769
    %v771 = vpop.f32.mrb[0].mxu0
    %772 = vmatprep.mubr.bf16.mxu0 0
    %773 = vmatmul.mubr.bf16.gmra.mrb[0].mxu0 %v370
    %v774 = vpop.f32.mrb[0].mxu0
    %v775 = vadd.f32 %v240, %v774
    %v776 = vpop.f32.mrb[0].mxu0
    %v777 = vpop.f32.mrb[0].mxu0
    %v778 = vadd.f32 %v240, %v777
    %v779 = vpop.f32.mrb[0].mxu0
    %780 = vmatprep.mubr.bf16.mxu0 0
    %781 = vmatmul.mubr.bf16.gmra.mrb[0].mxu0 %v373
    %v782 = vpop.f32.mrb[0].mxu0
    %v783 = vadd.f32 %v240, %v782
    %v784 = vpop.f32.mrb[0].mxu0
    %v785 = vpop.f32.mrb[0].mxu0
    %v786 = vadd.f32 %v240, %v785
    %v787 = vpop.f32.mrb[0].mxu0
    %788 = vmatprep.mubr.bf16.mxu0 0
    %789 = vmatmul.mubr.bf16.gmra.mrb[0].mxu0 %v376
    %v790 = vpop.f32.mrb[0].mxu0
    %v791 = vadd.f32 %v240, %v790
    %v792 = vpop.f32.mrb[0].mxu0
    %v793 = vpop.f32.mrb[0].mxu0
    %v794 = vadd.f32 %v240, %v793
    %v795 = vpop.f32.mrb[0].mxu0
    %796 = vmatprep.mubr.bf16.mxu0 0
    %797 = vmatmul.mubr.bf16.gmra.mrb[0].mxu0 %v379
    %v798 = vpop.f32.mrb[0].mxu0
    %v799 = vadd.f32 %v240, %v798
    %v800 = vpop.f32.mrb[0].mxu0
    %v801 = vpop.f32.mrb[0].mxu0
    %v802 = vadd.f32 %v240, %v801
    %v803 = vpop.f32.mrb[0].mxu0
    %804 = vmatprep.mubr.bf16.mxu0 0
    %805 = vmatmul.mubr.bf16.gmra.mrb[0].mxu0 %v382
    %v806 = vpop.f32.mrb[0].mxu0
    %v807 = vadd.f32 %v240, %v806
    %v808 = vpop.f32.mrb[0].mxu0
    %v809 = vpop.f32.mrb[0].mxu0
    %v810 = vadd.f32 %v240, %v809
    %v811 = vpop.f32.mrb[0].mxu0
    %812 = vmatprep.mubr.bf16.mxu0 0
    %813 = vmatmul.mubr.bf16.gmra.mrb[0].mxu0 %v385
    %v814 = vpop.f32.mrb[0].mxu0
    %v815 = vadd.f32 %v240, %v814
    %v816 = vpop.f32.mrb[0].mxu0
    %v817 = vpop.f32.mrb[0].mxu0
    %v818 = vadd.f32 %v240, %v817
    %v819 = vpop.f32.mrb[0].mxu0
    %820 = vmatprep.mubr.bf16.mxu0 0
    %821 = vmatmul.mubr.bf16.gmra.mrb[0].mxu0 %v388
    %v822 = vpop.f32.mrb[0].mxu0
    %v823 = vadd.f32 %v240, %v822
    %v824 = vpop.f32.mrb[0].mxu0
    %v825 = vpop.f32.mrb[0].mxu0
    %v826 = vadd.f32 %v240, %v825
    %v827 = vpop.f32.mrb[0].mxu0
    %828 = vmatprep.mubr.bf16.mxu0 0
    %829 = vmatmul.mubr.bf16.gmra.mrb[0].mxu0 %v391
    %v830 = vpop.f32.mrb[0].mxu0
    %v831 = vadd.f32 %v240, %v830
    %v832 = vpop.f32.mrb[0].mxu0
    %v833 = vpop.f32.mrb[0].mxu0
    %v834 = vadd.f32 %v240, %v833
    %v835 = vpop.f32.mrb[0].mxu0
    %836 = vmatprep.mubr.bf16.mxu0 0
    %837 = vmatmul.mubr.bf16.gmra.mrb[0].mxu0 %v394
    %v838 = vpop.f32.mrb[0].mxu0
    %v839 = vadd.f32 %v240, %v838
    %v840 = vpop.f32.mrb[0].mxu0
    %v841 = vpop.f32.mrb[0].mxu0
    %v842 = vadd.f32 %v240, %v841
    %v843 = vpop.f32.mrb[0].mxu0
    %844 = vmatprep.mubr.bf16.mxu0 0
    %845 = vmatmul.mubr.bf16.gmra.mrb[0].mxu0 %v397
    %v846 = vpop.f32.mrb[0].mxu0
    %v847 = vadd.f32 %v240, %v846
    %v848 = vpop.f32.mrb[0].mxu0
    %v849 = vpop.f32.mrb[0].mxu0
    %v850 = vadd.f32 %v240, %v849
    %v851 = vpop.f32.mrb[0].mxu0
    %852 = vmatprep.mubr.bf16.mxu0 0
    %853 = vmatmul.mubr.bf16.gmra.mrb[0].mxu0 %v400
    %v854 = vpop.f32.mrb[0].mxu0
    %v855 = vadd.f32 %v240, %v854
    %v856 = vpop.f32.mrb[0].mxu0
    %v857 = vpop.f32.mrb[0].mxu0
    %v858 = vadd.f32 %v240, %v857
    %v859 = vpop.f32.mrb[0].mxu0
    %860 = vmatprep.mubr.bf16.mxu0 0
    %861 = vmatmul.mubr.bf16.gmra.mrb[0].mxu0 %v403
    %v862 = vpop.f32.mrb[0].mxu0
    %v863 = vadd.f32 %v240, %v862
    %v864 = vpop.f32.mrb[0].mxu0
    %v865 = vpop.f32.mrb[0].mxu0
    %v866 = vadd.f32 %v240, %v865
    %v867 = vpop.f32.mrb[0].mxu0
    %868 = vmatprep.mubr.bf16.mxu0 0
    %869 = vmatmul.mubr.bf16.gmra.mrb[0].mxu0 %v406
    %v870 = vpop.f32.mrb[0].mxu0
    %v871 = vadd.f32 %v240, %v870
    %v872 = vpop.f32.mrb[0].mxu0
    %v873 = vpop.f32.mrb[0].mxu0
    %v874 = vadd.f32 %v240, %v873
    %v875 = vpop.f32.mrb[0].mxu0
    %876 = vmatprep.mubr.bf16.mxu0 0
    %877 = vmatmul.mubr.bf16.gmra.mrb[0].mxu0 %v409
    %v878 = vpop.f32.mrb[0].mxu0
    %v879 = vadd.f32 %v240, %v878
    %v880 = vpop.f32.mrb[0].mxu0
    %v881 = vpop.f32.mrb[0].mxu0
    %v882 = vadd.f32 %v240, %v881
    %v883 = vpop.f32.mrb[0].mxu0
    %884 = vmatprep.mubr.bf16.mxu0 0
    %885 = vmatmul.mubr.bf16.gmra.mrb[0].mxu0 %v412
    %v886 = vpop.f32.mrb[0].mxu0
    %v887 = vadd.f32 %v240, %v886
    %v888 = vpop.f32.mrb[0].mxu0
    %v889 = vpop.f32.mrb[0].mxu0
    %v890 = vadd.f32 %v240, %v889
    %v891 = vpop.f32.mrb[0].mxu0
    %892 = vmatprep.mubr.bf16.mxu0 0
    %893 = vmatmul.mubr.bf16.gmra.mrb[0].mxu0 %v415
    %v894 = vpop.f32.mrb[0].mxu0
    %v895 = vadd.f32 %v240, %v894
    %v896 = vpop.f32.mrb[0].mxu0
    %v897 = vpop.f32.mrb[0].mxu0
    %v898 = vadd.f32 %v240, %v897
    %v899 = vpop.f32.mrb[0].mxu0
    %900 = vmatprep.mubr.bf16.mxu0 0
    %901 = vmatmul.mubr.bf16.gmra.mrb[0].mxu0 %v418
    %v902 = vpop.f32.mrb[0].mxu0
    %v903 = vadd.f32 %v240, %v902
    %v904 = vpop.f32.mrb[0].mxu0
    %v905 = vpop.f32.mrb[0].mxu0
    %v906 = vadd.f32 %v240, %v905
    %v907 = vpop.f32.mrb[0].mxu0
    %908 = vmatprep.mubr.bf16.mxu0 0
    %909 = vmatmul.mubr.bf16.gmra.mrb[0].mxu0 %v421
    %v910 = vpop.f32.mrb[0].mxu0
    %v911 = vadd.f32 %v240, %v910
    %v912 = vpop.f32.mrb[0].mxu0
    %v913 = vpop.f32.mrb[0].mxu0
    %v914 = vadd.f32 %v240, %v913
    %v915 = vpop.f32.mrb[0].mxu0
    %916 = vmatprep.mubr.bf16.mxu0 0
    %917 = vmatmul.mubr.bf16.gmra.mrb[0].mxu0 %v424
    %v918 = vpop.f32.mrb[0].mxu0
    %v919 = vadd.f32 %v240, %v918
    %v920 = vpop.f32.mrb[0].mxu0
    %v921 = vpop.f32.mrb[0].mxu0
    %v922 = vadd.f32 %v240, %v921
    %v923 = vpop.f32.mrb[0].mxu0
    %924 = vmatprep.mubr.bf16.mxu0 0
    %925 = vmatmul.mubr.bf16.gmra.mrb[0].mxu0 %v427
    %v926 = vpop.f32.mrb[0].mxu0
    %v927 = vadd.f32 %v240, %v926
    %v928 = vpop.f32.mrb[0].mxu0
    %v929 = vpop.f32.mrb[0].mxu0
    %v930 = vadd.f32 %v240, %v929
    %v931 = vpop.f32.mrb[0].mxu0
    %932 = vmatprep.mubr.bf16.mxu0 0
    %933 = vmatmul.mubr.bf16.gmra.mrb[0].mxu0 %v430
    %v934 = vpop.f32.mrb[0].mxu0
    %v935 = vadd.f32 %v240, %v934
    %v936 = vpop.f32.mrb[0].mxu0
    %v937 = vpop.f32.mrb[0].mxu0
    %v938 = vadd.f32 %v240, %v937
    %v939 = vpop.f32.mrb[0].mxu0
    %940 = vmatprep.mubr.bf16.mxu0 0
    %941 = vmatmul.mubr.bf16.gmra.mrb[0].mxu0 %v433
    %v942 = vpop.f32.mrb[0].mxu0
    %v943 = vadd.f32 %v240, %v942
    %v944 = vpop.f32.mrb[0].mxu0
    %v945 = vpop.f32.mrb[0].mxu0
    %v946 = vadd.f32 %v240, %v945
    %v947 = vpop.f32.mrb[0].mxu0
    %948 = vmatprep.mubr.bf16.mxu0 0
    %949 = vmatmul.mubr.bf16.gmra.mrb[0].mxu0 %v436
    %v950 = vpop.f32.mrb[0].mxu0
    %v951 = vadd.f32 %v240, %v950
    %v952 = vpop.f32.mrb[0].mxu0
    %v953 = vpop.f32.mrb[0].mxu0
    %v954 = vadd.f32 %v240, %v953
    %v955 = vpop.f32.mrb[0].mxu0
    %956 = vmatprep.mubr.bf16.mxu0 0
    %957 = vmatmul.mubr.bf16.gmra.mrb[0].mxu0 %v439
    %v958 = vpop.f32.mrb[0].mxu0
    %v959 = vadd.f32 %v240, %v958
    %v960 = vpop.f32.mrb[0].mxu0
    %v961 = vpop.f32.mrb[0].mxu0
    %v962 = vadd.f32 %v240, %v961
    %v963 = vpop.f32.mrb[0].mxu0
    %964 = vmatprep.mubr.bf16.mxu0 0
    %965 = vmatmul.mubr.bf16.gmra.mrb[0].mxu0 %v442
    %v966 = vpop.f32.mrb[0].mxu0
    %v967 = vadd.f32 %v240, %v966
    %v968 = vpop.f32.mrb[0].mxu0
    %v969 = vpop.f32.mrb[0].mxu0
    %v970 = vadd.f32 %v240, %v969
    %v971 = vpop.f32.mrb[0].mxu0
    %972 = vmatprep.mubr.bf16.mxu0 0
    %973 = vmatmul.mubr.bf16.gmra.mrb[0].mxu0 %v445
    %v974 = vpop.f32.mrb[0].mxu0
    %v975 = vadd.f32 %v240, %v974
    %v976 = vpop.f32.mrb[0].mxu0
    %v977 = vpop.f32.mrb[0].mxu0
    %v978 = vadd.f32 %v240, %v977
    %v979 = vpop.f32.mrb[0].mxu0
    %980 = vmatprep.mubr.bf16.mxu0 0
    %981 = vmatmul.mubr.bf16.gmra.mrb[0].mxu0 %v448
    %v982 = vpop.f32.mrb[0].mxu0
    %v983 = vadd.f32 %v240, %v982
    %v984 = vpop.f32.mrb[0].mxu0
    %v985 = vpop.f32.mrb[0].mxu0
    %v986 = vadd.f32 %v240, %v985
    %v987 = vpop.f32.mrb[0].mxu0
    %988 = vmatprep.mubr.bf16.mxu0 0
    %989 = vmatmul.mubr.bf16.gmra.mrb[0].mxu0 %v451
    %v990 = vpop.f32.mrb[0].mxu0
    %v991 = vadd.f32 %v240, %v990
    %v992 = vpop.f32.mrb[0].mxu0
    %v993 = vpop.f32.mrb[0].mxu0
    %v994 = vadd.f32 %v240, %v993
    %v995 = vpop.f32.mrb[0].mxu0
    %996 = vmatprep.mubr.bf16.mxu0 0
    %997 = vmatmul.mubr.bf16.gmra.mrb[0].mxu0 %v454
    %v998 = vpop.f32.mrb[0].mxu0
    %v999 = vadd.f32 %v240, %v998
    %v1000 = vpop.f32.mrb[0].mxu0
    %v1001 = vpop.f32.mrb[0].mxu0
    %v1002 = vadd.f32 %v240, %v1001
    %v1003 = vpop.f32.mrb[0].mxu0
    %1004 = vdwg.mxu0
    %v1005 = vmax.f32 %v495, 0.0
    %v1006 = vmax.f32 %v498, 0.0
    %v1007 = vmax.f32 %v503, 0.0
    %v1008 = vmax.f32 %v506, 0.0
    %v1009 = vmax.f32 %v511, 0.0
    %v1010 = vmax.f32 %v514, 0.0
    %v1011 = vmax.f32 %v519, 0.0
    %v1012 = vmax.f32 %v522, 0.0
    %v1013 = vmax.f32 %v527, 0.0
    %v1014 = vmax.f32 %v530, 0.0
    %v1015 = vmax.f32 %v535, 0.0
    %v1016 = vmax.f32 %v538, 0.0
    %v1017 = vmax.f32 %v543, 0.0
    %v1018 = vmax.f32 %v546, 0.0
    %v1019 = vmax.f32 %v551, 0.0
    %v1020 = vmax.f32 %v554, 0.0
    %v1021 = vmax.f32 %v559, 0.0
    %v1022 = vmax.f32 %v562, 0.0
    %v1023 = vmax.f32 %v567, 0.0
    %v1024 = vmax.f32 %v570, 0.0
    %v1025 = vmax.f32 %v575, 0.0
    %v1026 = vmax.f32 %v578, 0.0
    %v1027 = vmax.f32 %v583, 0.0
    %v1028 = vmax.f32 %v586, 0.0
    %v1029 = vmax.f32 %v591, 0.0
    %v1030 = vmax.f32 %v594, 0.0
    %v1031 = vmax.f32 %v599, 0.0
    %v1032 = vmax.f32 %v602, 0.0
    %v1033 = vmax.f32 %v607, 0.0
    %v1034 = vmax.f32 %v610, 0.0
    %v1035 = vmax.f32 %v615, 0.0
    %v1036 = vmax.f32 %v618, 0.0
    %v1037 = vmax.f32 %v623, 0.0
    %v1038 = vmax.f32 %v626, 0.0
    %v1039 = vmax.f32 %v631, 0.0
    %v1040 = vmax.f32 %v634, 0.0
    %v1041 = vmax.f32 %v639, 0.0
    %v1042 = vmax.f32 %v642, 0.0
    %v1043 = vmax.f32 %v647, 0.0
    %v1044 = vmax.f32 %v650, 0.0
    %v1045 = vmax.f32 %v655, 0.0
    %v1046 = vmax.f32 %v658, 0.0
    %v1047 = vmax.f32 %v663, 0.0
    %v1048 = vmax.f32 %v666, 0.0
    %v1049 = vmax.f32 %v671, 0.0
    %v1050 = vmax.f32 %v674, 0.0
    %v1051 = vmax.f32 %v679, 0.0
    %v1052 = vmax.f32 %v682, 0.0
    %v1053 = vmax.f32 %v687, 0.0
    %v1054 = vmax.f32 %v690, 0.0
    %v1055 = vmax.f32 %v695, 0.0
    %v1056 = vmax.f32 %v698, 0.0
    %v1057 = vmax.f32 %v703, 0.0
    %v1058 = vmax.f32 %v706, 0.0
    %v1059 = vmax.f32 %v711, 0.0
    %v1060 = vmax.f32 %v714, 0.0
    %v1061 = vmax.f32 %v719, 0.0
    %v1062 = vmax.f32 %v722, 0.0
    %v1063 = vmax.f32 %v727, 0.0
    %v1064 = vmax.f32 %v730, 0.0
    %v1065 = vmax.f32 %v735, 0.0
    %v1066 = vmax.f32 %v738, 0.0
    %v1067 = vmax.f32 %v743, 0.0
    %v1068 = vmax.f32 %v746, 0.0
    %v1069 = vmax.f32 %v751, 0.0
    %v1070 = vmax.f32 %v754, 0.0
    %v1071 = vmax.f32 %v759, 0.0
    %v1072 = vmax.f32 %v762, 0.0
    %v1073 = vmax.f32 %v767, 0.0
    %v1074 = vmax.f32 %v770, 0.0
    %v1075 = vmax.f32 %v775, 0.0
    %v1076 = vmax.f32 %v778, 0.0
    %v1077 = vmax.f32 %v783, 0.0
    %v1078 = vmax.f32 %v786, 0.0
    %v1079 = vmax.f32 %v791, 0.0
    %v1080 = vmax.f32 %v794, 0.0
    %v1081 = vmax.f32 %v799, 0.0
    %v1082 = vmax.f32 %v802, 0.0
    %v1083 = vmax.f32 %v807, 0.0
    %v1084 = vmax.f32 %v810, 0.0
    %v1085 = vmax.f32 %v815, 0.0
    %v1086 = vmax.f32 %v818, 0.0
    %v1087 = vmax.f32 %v823, 0.0
    %v1088 = vmax.f32 %v826, 0.0
    %v1089 = vmax.f32 %v831, 0.0
    %v1090 = vmax.f32 %v834, 0.0
    %v1091 = vmax.f32 %v839, 0.0
    %v1092 = vmax.f32 %v842, 0.0
    %v1093 = vmax.f32 %v847, 0.0
    %v1094 = vmax.f32 %v850, 0.0
    %v1095 = vmax.f32 %v855, 0.0
    %v1096 = vmax.f32 %v858, 0.0
    %v1097 = vmax.f32 %v863, 0.0
    %v1098 = vmax.f32 %v866, 0.0
    %v1099 = vmax.f32 %v871, 0.0
    %v1100 = vmax.f32 %v874, 0.0
    %v1101 = vmax.f32 %v879, 0.0
    %v1102 = vmax.f32 %v882, 0.0
    %v1103 = vmax.f32 %v887, 0.0
    %v1104 = vmax.f32 %v890, 0.0
    %v1105 = vmax.f32 %v895, 0.0
    %v1106 = vmax.f32 %v898, 0.0
    %v1107 = vmax.f32 %v903, 0.0
    %v1108 = vmax.f32 %v906, 0.0
    %v1109 = vmax.f32 %v911, 0.0
    %v1110 = vmax.f32 %v914, 0.0
    %v1111 = vmax.f32 %v919, 0.0
    %v1112 = vmax.f32 %v922, 0.0
    %v1113 = vmax.f32 %v927, 0.0
    %v1114 = vmax.f32 %v930, 0.0
    %v1115 = vmax.f32 %v935, 0.0
    %v1116 = vmax.f32 %v938, 0.0
    %v1117 = vmax.f32 %v943, 0.0
    %v1118 = vmax.f32 %v946, 0.0
    %v1119 = vmax.f32 %v951, 0.0
    %v1120 = vmax.f32 %v954, 0.0
    %v1121 = vmax.f32 %v959, 0.0
    %v1122 = vmax.f32 %v962, 0.0
    %v1123 = vmax.f32 %v967, 0.0
    %v1124 = vmax.f32 %v970, 0.0
    %v1125 = vmax.f32 %v975, 0.0
    %v1126 = vmax.f32 %v978, 0.0
    %v1127 = vmax.f32 %v983, 0.0
    %v1128 = vmax.f32 %v986, 0.0
    %v1129 = vmax.f32 %v991, 0.0
    %v1130 = vmax.f32 %v994, 0.0
    %v1131 = vmax.f32 %v999, 0.0
    %v1132 = vmax.f32 %v1002, 0.0
    %v1133 = vpack.c.bf16 %v1006, %v1005
    %v1134 = vpack.c.bf16 %v1008, %v1007
    %v1135 = vpack.c.bf16 %v1010, %v1009
    %v1136 = vpack.c.bf16 %v1012, %v1011
    %v1137 = vpack.c.bf16 %v1014, %v1013
    %v1138 = vpack.c.bf16 %v1016, %v1015
    %v1139 = vpack.c.bf16 %v1018, %v1017
    %v1140 = vpack.c.bf16 %v1020, %v1019
    %v1141 = vpack.c.bf16 %v1022, %v1021
    %v1142 = vpack.c.bf16 %v1024, %v1023
    %v1143 = vpack.c.bf16 %v1026, %v1025
    %v1144 = vpack.c.bf16 %v1028, %v1027
    %v1145 = vpack.c.bf16 %v1030, %v1029
    %v1146 = vpack.c.bf16 %v1032, %v1031
    %v1147 = vpack.c.bf16 %v1034, %v1033
    %v1148 = vpack.c.bf16 %v1036, %v1035
    %v1149 = vpack.c.bf16 %v1038, %v1037
    %v1150 = vpack.c.bf16 %v1040, %v1039
    %v1151 = vpack.c.bf16 %v1042, %v1041
    %v1152 = vpack.c.bf16 %v1044, %v1043
    %v1153 = vpack.c.bf16 %v1046, %v1045
    %v1154 = vpack.c.bf16 %v1048, %v1047
    %v1155 = vpack.c.bf16 %v1050, %v1049
    %v1156 = vpack.c.bf16 %v1052, %v1051
    %v1157 = vpack.c.bf16 %v1054, %v1053
    %v1158 = vpack.c.bf16 %v1056, %v1055
    %v1159 = vpack.c.bf16 %v1058, %v1057
    %v1160 = vpack.c.bf16 %v1060, %v1059
    %v1161 = vpack.c.bf16 %v1062, %v1061
    %v1162 = vpack.c.bf16 %v1064, %v1063
    %v1163 = vpack.c.bf16 %v1066, %v1065
    %v1164 = vpack.c.bf16 %v1068, %v1067
    %v1165 = vpack.c.bf16 %v1070, %v1069
    %v1166 = vpack.c.bf16 %v1072, %v1071
    %v1167 = vpack.c.bf16 %v1074, %v1073
    %v1168 = vpack.c.bf16 %v1076, %v1075
    %v1169 = vpack.c.bf16 %v1078, %v1077
    %v1170 = vpack.c.bf16 %v1080, %v1079
    %v1171 = vpack.c.bf16 %v1082, %v1081
    %v1172 = vpack.c.bf16 %v1084, %v1083
    %v1173 = vpack.c.bf16 %v1086, %v1085
    %v1174 = vpack.c.bf16 %v1088, %v1087
    %v1175 = vpack.c.bf16 %v1090, %v1089
    %v1176 = vpack.c.bf16 %v1092, %v1091
    %v1177 = vpack.c.bf16 %v1094, %v1093
    %v1178 = vpack.c.bf16 %v1096, %v1095
    %v1179 = vpack.c.bf16 %v1098, %v1097
    %v1180 = vpack.c.bf16 %v1100, %v1099
    %v1181 = vpack.c.bf16 %v1102, %v1101
    %v1182 = vpack.c.bf16 %v1104, %v1103
    %v1183 = vpack.c.bf16 %v1106, %v1105
    %v1184 = vpack.c.bf16 %v1108, %v1107
    %v1185 = vpack.c.bf16 %v1110, %v1109
    %v1186 = vpack.c.bf16 %v1112, %v1111
    %v1187 = vpack.c.bf16 %v1114, %v1113
    %v1188 = vpack.c.bf16 %v1116, %v1115
    %v1189 = vpack.c.bf16 %v1118, %v1117
    %v1190 = vpack.c.bf16 %v1120, %v1119
    %v1191 = vpack.c.bf16 %v1122, %v1121
    %v1192 = vpack.c.bf16 %v1124, %v1123
    %v1193 = vpack.c.bf16 %v1126, %v1125
    %v1194 = vpack.c.bf16 %v1128, %v1127
    %v1195 = vpack.c.bf16 %v1130, %v1129
    %v1196 = vpack.c.bf16 %v1132, %v1131
    %v1197 = vld [vmem:[%s3] sm:$0xf]
    %v1198 = vld [vmem:[%s3 + $0x4] sm:$0xf]
    %v1199 = vld [vmem:[%s3 + $0x8] sm:$0xf]
    %v1200 = vld [vmem:[%s3 + $0xc] sm:$0xf]
    %v1201 = vld [vmem:[%s3 + $0x10] sm:$0xf]
    %v1202 = vld [vmem:[%s3 + $0x14] sm:$0xf]
    %v1203 = vld [vmem:[%s3 + $0x18] sm:$0xf]
    %v1204 = vld [vmem:[%s3 + $0x1c] sm:$0xf]
    %v1205 = vld [vmem:[%s3 + $0x20] sm:$0xf]
    %v1206 = vld [vmem:[%s3 + $0x24] sm:$0xf]
    %v1207 = vld [vmem:[%s3 + $0x28] sm:$0xf]
    %v1208 = vld [vmem:[%s3 + $0x2c] sm:$0xf]
    %v1209 = vld [vmem:[%s3 + $0x30] sm:$0xf]
    %v1210 = vld [vmem:[%s3 + $0x34] sm:$0xf]
    %v1211 = vld [vmem:[%s3 + $0x38] sm:$0xf]
    %v1212 = vld [vmem:[%s3 + $0x3c] sm:$0xf]
    %v1213 = vld [vmem:[%s4] sm:$0x1]
    %v1215 = vlaneseq
    %v1216 = vshrl.u32 %v1215, 7
    %v1217 = vsub.s32 0, %v1216
    %v1218 = vrot.slane %v1213, %v1217
    %v1236 = vunpack.c.l.b16 %v1197
    %v1237 = vunpack.c.l.b16 %v1198
    %v1238 = vunpack.c.l.b16 %v1199
    %v1239 = vunpack.c.l.b16 %v1200
    %v1240 = vunpack.c.l.b16 %v1201
    %v1241 = vunpack.c.l.b16 %v1202
    %v1242 = vunpack.c.l.b16 %v1203
    %v1243 = vunpack.c.l.b16 %v1204
    %v1244 = vunpack.c.l.b16 %v1205
    %v1245 = vunpack.c.l.b16 %v1206
    %v1246 = vunpack.c.l.b16 %v1207
    %v1247 = vunpack.c.l.b16 %v1208
    %v1248 = vunpack.c.l.b16 %v1209
    %v1249 = vunpack.c.l.b16 %v1210
    %v1250 = vunpack.c.l.b16 %v1211
    %v1251 = vunpack.c.l.b16 %v1212
    %v1252 = vpack.c.b16 %v1237, %v1236
    %v1253 = vpack.c.b16 %v1239, %v1238
    %v1254 = vpack.c.b16 %v1241, %v1240
    %v1255 = vpack.c.b16 %v1243, %v1242
    %v1256 = vpack.c.b16 %v1245, %v1244
    %v1257 = vpack.c.b16 %v1247, %v1246
    %v1258 = vpack.c.b16 %v1249, %v1248
    %v1259 = vpack.c.b16 %v1251, %v1250
    %1268 = vmatprep.subr.bf16.mxu0 0
    %1269 = vmatpush1.bf16.msra.mxu0 %v1252
    %1270 = vmatprep.subr.bf16.mxu0 0
    %1271 = vmatpush1.bf16.msra.mxu0 %v1253
    %1272 = vmatprep.subr.bf16.mxu0 0
    %1273 = vmatpush1.bf16.msra.mxu0 %v1254
    %1274 = vmatprep.subr.bf16.mxu0 0
    %1275 = vmatpush1.bf16.msra.mxu0 %v1255
    %1276 = vmatprep.subr.bf16.mxu0 0
    %1277 = vmatpush1.bf16.msra.mxu0 %v1256
    %1278 = vmatprep.subr.bf16.mxu0 0
    %1279 = vmatpush1.bf16.msra.mxu0 %v1257
    %1280 = vmatprep.subr.bf16.mxu0 0
    %1281 = vmatpush1.bf16.msra.mxu0 %v1258
    %1282 = vmatprep.subr.bf16.mxu0 0
    %1283 = vmatpush1.bf16.msra.mxu0 %v1259
    %1284 = vmatprep.subr.bf16.mxu0 0
    %1285 = vmatpush1.bf16.msra.mxu0 0
    %1286 = vmatprep.subr.bf16.mxu0 0
    %1287 = vmatpush1.bf16.msra.mxu0 0
    %1288 = vmatprep.subr.bf16.mxu0 0
    %1289 = vmatpush1.bf16.msra.mxu0 0
    %1290 = vmatprep.subr.bf16.mxu0 0
    %1291 = vmatpush1.bf16.msra.mxu0 0
    %1292 = vmatprep.subr.bf16.mxu0 0
    %1293 = vmatpush1.bf16.msra.mxu0 0
    %1294 = vmatprep.subr.bf16.mxu0 0
    %1295 = vmatpush1.bf16.msra.mxu0 0
    %1296 = vmatprep.subr.bf16.mxu0 0
    %1297 = vmatpush1.bf16.msra.mxu0 0
    %1298 = vmatprep.subr.bf16.mxu0 0
    %1299 = vmatpush1.bf16.msra.mxu0 0
    %1300 = vmatprep.mubr.bf16.mxu0 0
    %1301 = vmatmul.mubr.bf16.gmra.mrb[0].mxu0 %v1133
    %v1302 = vpop.f32.mrb[0].mxu0
    %v1303 = vadd.f32 %v1218, %v1302
    %v1304 = vpop.f32.mrb[0].mxu0
    %v1305 = vpop.f32.mrb[0].mxu0
    %v1306 = vadd.f32 %v1218, %v1305
    %v1307 = vpop.f32.mrb[0].mxu0
    %1308 = vmatprep.mubr.bf16.mxu0 0
    %1309 = vmatmul.mubr.bf16.gmra.mrb[0].mxu0 %v1134
    %v1310 = vpop.f32.mrb[0].mxu0
    %v1311 = vadd.f32 %v1218, %v1310
    %v1312 = vpop.f32.mrb[0].mxu0
    %v1313 = vpop.f32.mrb[0].mxu0
    %v1314 = vadd.f32 %v1218, %v1313
    %v1315 = vpop.f32.mrb[0].mxu0
    %1316 = vmatprep.mubr.bf16.mxu0 0
    %1317 = vmatmul.mubr.bf16.gmra.mrb[0].mxu0 %v1135
    %v1318 = vpop.f32.mrb[0].mxu0
    %v1319 = vadd.f32 %v1218, %v1318
    %v1320 = vpop.f32.mrb[0].mxu0
    %v1321 = vpop.f32.mrb[0].mxu0
    %v1322 = vadd.f32 %v1218, %v1321
    %v1323 = vpop.f32.mrb[0].mxu0
    %1324 = vmatprep.mubr.bf16.mxu0 0
    %1325 = vmatmul.mubr.bf16.gmra.mrb[0].mxu0 %v1136
    %v1326 = vpop.f32.mrb[0].mxu0
    %v1327 = vadd.f32 %v1218, %v1326
    %v1328 = vpop.f32.mrb[0].mxu0
    %v1329 = vpop.f32.mrb[0].mxu0
    %v1330 = vadd.f32 %v1218, %v1329
    %v1331 = vpop.f32.mrb[0].mxu0
    %1332 = vmatprep.mubr.bf16.mxu0 0
    %1333 = vmatmul.mubr.bf16.gmra.mrb[0].mxu0 %v1137
    %v1334 = vpop.f32.mrb[0].mxu0
    %v1335 = vadd.f32 %v1218, %v1334
    %v1336 = vpop.f32.mrb[0].mxu0
    %v1337 = vpop.f32.mrb[0].mxu0
    %v1338 = vadd.f32 %v1218, %v1337
    %v1339 = vpop.f32.mrb[0].mxu0
    %1340 = vmatprep.mubr.bf16.mxu0 0
    %1341 = vmatmul.mubr.bf16.gmra.mrb[0].mxu0 %v1138
    %v1342 = vpop.f32.mrb[0].mxu0
    %v1343 = vadd.f32 %v1218, %v1342
    %v1344 = vpop.f32.mrb[0].mxu0
    %v1345 = vpop.f32.mrb[0].mxu0
    %v1346 = vadd.f32 %v1218, %v1345
    %v1347 = vpop.f32.mrb[0].mxu0
    %1348 = vmatprep.mubr.bf16.mxu0 0
    %1349 = vmatmul.mubr.bf16.gmra.mrb[0].mxu0 %v1139
    %v1350 = vpop.f32.mrb[0].mxu0
    %v1351 = vadd.f32 %v1218, %v1350
    %v1352 = vpop.f32.mrb[0].mxu0
    %v1353 = vpop.f32.mrb[0].mxu0
    %v1354 = vadd.f32 %v1218, %v1353
    %v1355 = vpop.f32.mrb[0].mxu0
    %1356 = vmatprep.mubr.bf16.mxu0 0
    %1357 = vmatmul.mubr.bf16.gmra.mrb[0].mxu0 %v1140
    %v1358 = vpop.f32.mrb[0].mxu0
    %v1359 = vadd.f32 %v1218, %v1358
    %v1360 = vpop.f32.mrb[0].mxu0
    %v1361 = vpop.f32.mrb[0].mxu0
    %v1362 = vadd.f32 %v1218, %v1361
    %v1363 = vpop.f32.mrb[0].mxu0
    %1364 = vmatprep.mubr.bf16.mxu0 0
    %1365 = vmatmul.mubr.bf16.gmra.mrb[0].mxu0 %v1141
    %v1366 = vpop.f32.mrb[0].mxu0
    %v1367 = vadd.f32 %v1218, %v1366
    %v1368 = vpop.f32.mrb[0].mxu0
    %v1369 = vpop.f32.mrb[0].mxu0
    %v1370 = vadd.f32 %v1218, %v1369
    %v1371 = vpop.f32.mrb[0].mxu0
    %1372 = vmatprep.mubr.bf16.mxu0 0
    %1373 = vmatmul.mubr.bf16.gmra.mrb[0].mxu0 %v1142
    %v1374 = vpop.f32.mrb[0].mxu0
    %v1375 = vadd.f32 %v1218, %v1374
    %v1376 = vpop.f32.mrb[0].mxu0
    %v1377 = vpop.f32.mrb[0].mxu0
    %v1378 = vadd.f32 %v1218, %v1377
    %v1379 = vpop.f32.mrb[0].mxu0
    %1380 = vmatprep.mubr.bf16.mxu0 0
    %1381 = vmatmul.mubr.bf16.gmra.mrb[0].mxu0 %v1143
    %v1382 = vpop.f32.mrb[0].mxu0
    %v1383 = vadd.f32 %v1218, %v1382
    %v1384 = vpop.f32.mrb[0].mxu0
    %v1385 = vpop.f32.mrb[0].mxu0
    %v1386 = vadd.f32 %v1218, %v1385
    %v1387 = vpop.f32.mrb[0].mxu0
    %1388 = vmatprep.mubr.bf16.mxu0 0
    %1389 = vmatmul.mubr.bf16.gmra.mrb[0].mxu0 %v1144
    %v1390 = vpop.f32.mrb[0].mxu0
    %v1391 = vadd.f32 %v1218, %v1390
    %v1392 = vpop.f32.mrb[0].mxu0
    %v1393 = vpop.f32.mrb[0].mxu0
    %v1394 = vadd.f32 %v1218, %v1393
    %v1395 = vpop.f32.mrb[0].mxu0
    %1396 = vmatprep.mubr.bf16.mxu0 0
    %1397 = vmatmul.mubr.bf16.gmra.mrb[0].mxu0 %v1145
    %v1398 = vpop.f32.mrb[0].mxu0
    %v1399 = vadd.f32 %v1218, %v1398
    %v1400 = vpop.f32.mrb[0].mxu0
    %v1401 = vpop.f32.mrb[0].mxu0
    %v1402 = vadd.f32 %v1218, %v1401
    %v1403 = vpop.f32.mrb[0].mxu0
    %1404 = vmatprep.mubr.bf16.mxu0 0
    %1405 = vmatmul.mubr.bf16.gmra.mrb[0].mxu0 %v1146
    %v1406 = vpop.f32.mrb[0].mxu0
    %v1407 = vadd.f32 %v1218, %v1406
    %v1408 = vpop.f32.mrb[0].mxu0
    %v1409 = vpop.f32.mrb[0].mxu0
    %v1410 = vadd.f32 %v1218, %v1409
    %v1411 = vpop.f32.mrb[0].mxu0
    %1412 = vmatprep.mubr.bf16.mxu0 0
    %1413 = vmatmul.mubr.bf16.gmra.mrb[0].mxu0 %v1147
    %v1414 = vpop.f32.mrb[0].mxu0
    %v1415 = vadd.f32 %v1218, %v1414
    %v1416 = vpop.f32.mrb[0].mxu0
    %v1417 = vpop.f32.mrb[0].mxu0
    %v1418 = vadd.f32 %v1218, %v1417
    %v1419 = vpop.f32.mrb[0].mxu0
    %1420 = vmatprep.mubr.bf16.mxu0 0
    %1421 = vmatmul.mubr.bf16.gmra.mrb[0].mxu0 %v1148
    %v1422 = vpop.f32.mrb[0].mxu0
    %v1423 = vadd.f32 %v1218, %v1422
    %v1424 = vpop.f32.mrb[0].mxu0
    %v1425 = vpop.f32.mrb[0].mxu0
    %v1426 = vadd.f32 %v1218, %v1425
    %v1427 = vpop.f32.mrb[0].mxu0
    %1428 = vmatprep.mubr.bf16.mxu0 0
    %1429 = vmatmul.mubr.bf16.gmra.mrb[0].mxu0 %v1149
    %v1430 = vpop.f32.mrb[0].mxu0
    %v1431 = vadd.f32 %v1218, %v1430
    %v1432 = vpop.f32.mrb[0].mxu0
    %v1433 = vpop.f32.mrb[0].mxu0
    %v1434 = vadd.f32 %v1218, %v1433
    %v1435 = vpop.f32.mrb[0].mxu0
    %1436 = vmatprep.mubr.bf16.mxu0 0
    %1437 = vmatmul.mubr.bf16.gmra.mrb[0].mxu0 %v1150
    %v1438 = vpop.f32.mrb[0].mxu0
    %v1439 = vadd.f32 %v1218, %v1438
    %v1440 = vpop.f32.mrb[0].mxu0
    %v1441 = vpop.f32.mrb[0].mxu0
    %v1442 = vadd.f32 %v1218, %v1441
    %v1443 = vpop.f32.mrb[0].mxu0
    %1444 = vmatprep.mubr.bf16.mxu0 0
    %1445 = vmatmul.mubr.bf16.gmra.mrb[0].mxu0 %v1151
    %v1446 = vpop.f32.mrb[0].mxu0
    %v1447 = vadd.f32 %v1218, %v1446
    %v1448 = vpop.f32.mrb[0].mxu0
    %v1449 = vpop.f32.mrb[0].mxu0
    %v1450 = vadd.f32 %v1218, %v1449
    %v1451 = vpop.f32.mrb[0].mxu0
    %1452 = vmatprep.mubr.bf16.mxu0 0
    %1453 = vmatmul.mubr.bf16.gmra.mrb[0].mxu0 %v1152
    %v1454 = vpop.f32.mrb[0].mxu0
    %v1455 = vadd.f32 %v1218, %v1454
    %v1456 = vpop.f32.mrb[0].mxu0
    %v1457 = vpop.f32.mrb[0].mxu0
    %v1458 = vadd.f32 %v1218, %v1457
    %v1459 = vpop.f32.mrb[0].mxu0
    %1460 = vmatprep.mubr.bf16.mxu0 0
    %1461 = vmatmul.mubr.bf16.gmra.mrb[0].mxu0 %v1153
    %v1462 = vpop.f32.mrb[0].mxu0
    %v1463 = vadd.f32 %v1218, %v1462
    %v1464 = vpop.f32.mrb[0].mxu0
    %v1465 = vpop.f32.mrb[0].mxu0
    %v1466 = vadd.f32 %v1218, %v1465
    %v1467 = vpop.f32.mrb[0].mxu0
    %1468 = vmatprep.mubr.bf16.mxu0 0
    %1469 = vmatmul.mubr.bf16.gmra.mrb[0].mxu0 %v1154
    %v1470 = vpop.f32.mrb[0].mxu0
    %v1471 = vadd.f32 %v1218, %v1470
    %v1472 = vpop.f32.mrb[0].mxu0
    %v1473 = vpop.f32.mrb[0].mxu0
    %v1474 = vadd.f32 %v1218, %v1473
    %v1475 = vpop.f32.mrb[0].mxu0
    %1476 = vmatprep.mubr.bf16.mxu0 0
    %1477 = vmatmul.mubr.bf16.gmra.mrb[0].mxu0 %v1155
    %v1478 = vpop.f32.mrb[0].mxu0
    %v1479 = vadd.f32 %v1218, %v1478
    %v1480 = vpop.f32.mrb[0].mxu0
    %v1481 = vpop.f32.mrb[0].mxu0
    %v1482 = vadd.f32 %v1218, %v1481
    %v1483 = vpop.f32.mrb[0].mxu0
    %1484 = vmatprep.mubr.bf16.mxu0 0
    %1485 = vmatmul.mubr.bf16.gmra.mrb[0].mxu0 %v1156
    %v1486 = vpop.f32.mrb[0].mxu0
    %v1487 = vadd.f32 %v1218, %v1486
    %v1488 = vpop.f32.mrb[0].mxu0
    %v1489 = vpop.f32.mrb[0].mxu0
    %v1490 = vadd.f32 %v1218, %v1489
    %v1491 = vpop.f32.mrb[0].mxu0
    %1492 = vmatprep.mubr.bf16.mxu0 0
    %1493 = vmatmul.mubr.bf16.gmra.mrb[0].mxu0 %v1157
    %v1494 = vpop.f32.mrb[0].mxu0
    %v1495 = vadd.f32 %v1218, %v1494
    %v1496 = vpop.f32.mrb[0].mxu0
    %v1497 = vpop.f32.mrb[0].mxu0
    %v1498 = vadd.f32 %v1218, %v1497
    %v1499 = vpop.f32.mrb[0].mxu0
    %1500 = vmatprep.mubr.bf16.mxu0 0
    %1501 = vmatmul.mubr.bf16.gmra.mrb[0].mxu0 %v1158
    %v1502 = vpop.f32.mrb[0].mxu0
    %v1503 = vadd.f32 %v1218, %v1502
    %v1504 = vpop.f32.mrb[0].mxu0
    %v1505 = vpop.f32.mrb[0].mxu0
    %v1506 = vadd.f32 %v1218, %v1505
    %v1507 = vpop.f32.mrb[0].mxu0
    %1508 = vmatprep.mubr.bf16.mxu0 0
    %1509 = vmatmul.mubr.bf16.gmra.mrb[0].mxu0 %v1159
    %v1510 = vpop.f32.mrb[0].mxu0
    %v1511 = vadd.f32 %v1218, %v1510
    %v1512 = vpop.f32.mrb[0].mxu0
    %v1513 = vpop.f32.mrb[0].mxu0
    %v1514 = vadd.f32 %v1218, %v1513
    %v1515 = vpop.f32.mrb[0].mxu0
    %1516 = vmatprep.mubr.bf16.mxu0 0
    %1517 = vmatmul.mubr.bf16.gmra.mrb[0].mxu0 %v1160
    %v1518 = vpop.f32.mrb[0].mxu0
    %v1519 = vadd.f32 %v1218, %v1518
    %v1520 = vpop.f32.mrb[0].mxu0
    %v1521 = vpop.f32.mrb[0].mxu0
    %v1522 = vadd.f32 %v1218, %v1521
    %v1523 = vpop.f32.mrb[0].mxu0
    %1524 = vmatprep.mubr.bf16.mxu0 0
    %1525 = vmatmul.mubr.bf16.gmra.mrb[0].mxu0 %v1161
    %v1526 = vpop.f32.mrb[0].mxu0
    %v1527 = vadd.f32 %v1218, %v1526
    %v1528 = vpop.f32.mrb[0].mxu0
    %v1529 = vpop.f32.mrb[0].mxu0
    %v1530 = vadd.f32 %v1218, %v1529
    %v1531 = vpop.f32.mrb[0].mxu0
    %1532 = vmatprep.mubr.bf16.mxu0 0
    %1533 = vmatmul.mubr.bf16.gmra.mrb[0].mxu0 %v1162
    %v1534 = vpop.f32.mrb[0].mxu0
    %v1535 = vadd.f32 %v1218, %v1534
    %v1536 = vpop.f32.mrb[0].mxu0
    %v1537 = vpop.f32.mrb[0].mxu0
    %v1538 = vadd.f32 %v1218, %v1537
    %v1539 = vpop.f32.mrb[0].mxu0
    %1540 = vmatprep.mubr.bf16.mxu0 0
    %1541 = vmatmul.mubr.bf16.gmra.mrb[0].mxu0 %v1163
    %v1542 = vpop.f32.mrb[0].mxu0
    %v1543 = vadd.f32 %v1218, %v1542
    %v1544 = vpop.f32.mrb[0].mxu0
    %v1545 = vpop.f32.mrb[0].mxu0
    %v1546 = vadd.f32 %v1218, %v1545
    %v1547 = vpop.f32.mrb[0].mxu0
    %1548 = vmatprep.mubr.bf16.mxu0 0
    %1549 = vmatmul.mubr.bf16.gmra.mrb[0].mxu0 %v1164
    %v1550 = vpop.f32.mrb[0].mxu0
    %v1551 = vadd.f32 %v1218, %v1550
    %v1552 = vpop.f32.mrb[0].mxu0
    %v1553 = vpop.f32.mrb[0].mxu0
    %v1554 = vadd.f32 %v1218, %v1553
    %v1555 = vpop.f32.mrb[0].mxu0
    %1556 = vmatprep.mubr.bf16.mxu0 0
    %1557 = vmatmul.mubr.bf16.gmra.mrb[0].mxu0 %v1165
    %v1558 = vpop.f32.mrb[0].mxu0
    %v1559 = vadd.f32 %v1218, %v1558
    %v1560 = vpop.f32.mrb[0].mxu0
    %v1561 = vpop.f32.mrb[0].mxu0
    %v1562 = vadd.f32 %v1218, %v1561
    %v1563 = vpop.f32.mrb[0].mxu0
    %1564 = vmatprep.mubr.bf16.mxu0 0
    %1565 = vmatmul.mubr.bf16.gmra.mrb[0].mxu0 %v1166
    %v1566 = vpop.f32.mrb[0].mxu0
    %v1567 = vadd.f32 %v1218, %v1566
    %v1568 = vpop.f32.mrb[0].mxu0
    %v1569 = vpop.f32.mrb[0].mxu0
    %v1570 = vadd.f32 %v1218, %v1569
    %v1571 = vpop.f32.mrb[0].mxu0
    %1572 = vmatprep.mubr.bf16.mxu0 0
    %1573 = vmatmul.mubr.bf16.gmra.mrb[0].mxu0 %v1167
    %v1574 = vpop.f32.mrb[0].mxu0
    %v1575 = vadd.f32 %v1218, %v1574
    %v1576 = vpop.f32.mrb[0].mxu0
    %v1577 = vpop.f32.mrb[0].mxu0
    %v1578 = vadd.f32 %v1218, %v1577
    %v1579 = vpop.f32.mrb[0].mxu0
    %1580 = vmatprep.mubr.bf16.mxu0 0
    %1581 = vmatmul.mubr.bf16.gmra.mrb[0].mxu0 %v1168
    %v1582 = vpop.f32.mrb[0].mxu0
    %v1583 = vadd.f32 %v1218, %v1582
    %v1584 = vpop.f32.mrb[0].mxu0
    %v1585 = vpop.f32.mrb[0].mxu0
    %v1586 = vadd.f32 %v1218, %v1585
    %v1587 = vpop.f32.mrb[0].mxu0
    %1588 = vmatprep.mubr.bf16.mxu0 0
    %1589 = vmatmul.mubr.bf16.gmra.mrb[0].mxu0 %v1169
    %v1590 = vpop.f32.mrb[0].mxu0
    %v1591 = vadd.f32 %v1218, %v1590
    %v1592 = vpop.f32.mrb[0].mxu0
    %v1593 = vpop.f32.mrb[0].mxu0
    %v1594 = vadd.f32 %v1218, %v1593
    %v1595 = vpop.f32.mrb[0].mxu0
    %1596 = vmatprep.mubr.bf16.mxu0 0
    %1597 = vmatmul.mubr.bf16.gmra.mrb[0].mxu0 %v1170
    %v1598 = vpop.f32.mrb[0].mxu0
    %v1599 = vadd.f32 %v1218, %v1598
    %v1600 = vpop.f32.mrb[0].mxu0
    %v1601 = vpop.f32.mrb[0].mxu0
    %v1602 = vadd.f32 %v1218, %v1601
    %v1603 = vpop.f32.mrb[0].mxu0
    %1604 = vmatprep.mubr.bf16.mxu0 0
    %1605 = vmatmul.mubr.bf16.gmra.mrb[0].mxu0 %v1171
    %v1606 = vpop.f32.mrb[0].mxu0
    %v1607 = vadd.f32 %v1218, %v1606
    %v1608 = vpop.f32.mrb[0].mxu0
    %v1609 = vpop.f32.mrb[0].mxu0
    %v1610 = vadd.f32 %v1218, %v1609
    %v1611 = vpop.f32.mrb[0].mxu0
    %1612 = vmatprep.mubr.bf16.mxu0 0
    %1613 = vmatmul.mubr.bf16.gmra.mrb[0].mxu0 %v1172
    %v1614 = vpop.f32.mrb[0].mxu0
    %v1615 = vadd.f32 %v1218, %v1614
    %v1616 = vpop.f32.mrb[0].mxu0
    %v1617 = vpop.f32.mrb[0].mxu0
    %v1618 = vadd.f32 %v1218, %v1617
    %v1619 = vpop.f32.mrb[0].mxu0
    %1620 = vmatprep.mubr.bf16.mxu0 0
    %1621 = vmatmul.mubr.bf16.gmra.mrb[0].mxu0 %v1173
    %v1622 = vpop.f32.mrb[0].mxu0
    %v1623 = vadd.f32 %v1218, %v1622
    %v1624 = vpop.f32.mrb[0].mxu0
    %v1625 = vpop.f32.mrb[0].mxu0
    %v1626 = vadd.f32 %v1218, %v1625
    %v1627 = vpop.f32.mrb[0].mxu0
    %1628 = vmatprep.mubr.bf16.mxu0 0
    %1629 = vmatmul.mubr.bf16.gmra.mrb[0].mxu0 %v1174
    %v1630 = vpop.f32.mrb[0].mxu0
    %v1631 = vadd.f32 %v1218, %v1630
    %v1632 = vpop.f32.mrb[0].mxu0
    %v1633 = vpop.f32.mrb[0].mxu0
    %v1634 = vadd.f32 %v1218, %v1633
    %v1635 = vpop.f32.mrb[0].mxu0
    %1636 = vmatprep.mubr.bf16.mxu0 0
    %1637 = vmatmul.mubr.bf16.gmra.mrb[0].mxu0 %v1175
    %v1638 = vpop.f32.mrb[0].mxu0
    %v1639 = vadd.f32 %v1218, %v1638
    %v1640 = vpop.f32.mrb[0].mxu0
    %v1641 = vpop.f32.mrb[0].mxu0
    %v1642 = vadd.f32 %v1218, %v1641
    %v1643 = vpop.f32.mrb[0].mxu0
    %1644 = vmatprep.mubr.bf16.mxu0 0
    %1645 = vmatmul.mubr.bf16.gmra.mrb[0].mxu0 %v1176
    %v1646 = vpop.f32.mrb[0].mxu0
    %v1647 = vadd.f32 %v1218, %v1646
    %v1648 = vpop.f32.mrb[0].mxu0
    %v1649 = vpop.f32.mrb[0].mxu0
    %v1650 = vadd.f32 %v1218, %v1649
    %v1651 = vpop.f32.mrb[0].mxu0
    %1652 = vmatprep.mubr.bf16.mxu0 0
    %1653 = vmatmul.mubr.bf16.gmra.mrb[0].mxu0 %v1177
    %v1654 = vpop.f32.mrb[0].mxu0
    %v1655 = vadd.f32 %v1218, %v1654
    %v1656 = vpop.f32.mrb[0].mxu0
    %v1657 = vpop.f32.mrb[0].mxu0
    %v1658 = vadd.f32 %v1218, %v1657
    %v1659 = vpop.f32.mrb[0].mxu0
    %1660 = vmatprep.mubr.bf16.mxu0 0
    %1661 = vmatmul.mubr.bf16.gmra.mrb[0].mxu0 %v1178
    %v1662 = vpop.f32.mrb[0].mxu0
    %v1663 = vadd.f32 %v1218, %v1662
    %v1664 = vpop.f32.mrb[0].mxu0
    %v1665 = vpop.f32.mrb[0].mxu0
    %v1666 = vadd.f32 %v1218, %v1665
    %v1667 = vpop.f32.mrb[0].mxu0
    %1668 = vmatprep.mubr.bf16.mxu0 0
    %1669 = vmatmul.mubr.bf16.gmra.mrb[0].mxu0 %v1179
    %v1670 = vpop.f32.mrb[0].mxu0
    %v1671 = vadd.f32 %v1218, %v1670
    %v1672 = vpop.f32.mrb[0].mxu0
    %v1673 = vpop.f32.mrb[0].mxu0
    %v1674 = vadd.f32 %v1218, %v1673
    %v1675 = vpop.f32.mrb[0].mxu0
    %1676 = vmatprep.mubr.bf16.mxu0 0
    %1677 = vmatmul.mubr.bf16.gmra.mrb[0].mxu0 %v1180
    %v1678 = vpop.f32.mrb[0].mxu0
    %v1679 = vadd.f32 %v1218, %v1678
    %v1680 = vpop.f32.mrb[0].mxu0
    %v1681 = vpop.f32.mrb[0].mxu0
    %v1682 = vadd.f32 %v1218, %v1681
    %v1683 = vpop.f32.mrb[0].mxu0
    %1684 = vmatprep.mubr.bf16.mxu0 0
    %1685 = vmatmul.mubr.bf16.gmra.mrb[0].mxu0 %v1181
    %v1686 = vpop.f32.mrb[0].mxu0
    %v1687 = vadd.f32 %v1218, %v1686
    %v1688 = vpop.f32.mrb[0].mxu0
    %v1689 = vpop.f32.mrb[0].mxu0
    %v1690 = vadd.f32 %v1218, %v1689
    %v1691 = vpop.f32.mrb[0].mxu0
    %1692 = vmatprep.mubr.bf16.mxu0 0
    %1693 = vmatmul.mubr.bf16.gmra.mrb[0].mxu0 %v1182
    %v1694 = vpop.f32.mrb[0].mxu0
    %v1695 = vadd.f32 %v1218, %v1694
    %v1696 = vpop.f32.mrb[0].mxu0
    %v1697 = vpop.f32.mrb[0].mxu0
    %v1698 = vadd.f32 %v1218, %v1697
    %v1699 = vpop.f32.mrb[0].mxu0
    %1700 = vmatprep.mubr.bf16.mxu0 0
    %1701 = vmatmul.mubr.bf16.gmra.mrb[0].mxu0 %v1183
    %v1702 = vpop.f32.mrb[0].mxu0
    %v1703 = vadd.f32 %v1218, %v1702
    %v1704 = vpop.f32.mrb[0].mxu0
    %v1705 = vpop.f32.mrb[0].mxu0
    %v1706 = vadd.f32 %v1218, %v1705
    %v1707 = vpop.f32.mrb[0].mxu0
    %1708 = vmatprep.mubr.bf16.mxu0 0
    %1709 = vmatmul.mubr.bf16.gmra.mrb[0].mxu0 %v1184
    %v1710 = vpop.f32.mrb[0].mxu0
    %v1711 = vadd.f32 %v1218, %v1710
    %v1712 = vpop.f32.mrb[0].mxu0
    %v1713 = vpop.f32.mrb[0].mxu0
    %v1714 = vadd.f32 %v1218, %v1713
    %v1715 = vpop.f32.mrb[0].mxu0
    %1716 = vmatprep.mubr.bf16.mxu0 0
    %1717 = vmatmul.mubr.bf16.gmra.mrb[0].mxu0 %v1185
    %v1718 = vpop.f32.mrb[0].mxu0
    %v1719 = vadd.f32 %v1218, %v1718
    %v1720 = vpop.f32.mrb[0].mxu0
    %v1721 = vpop.f32.mrb[0].mxu0
    %v1722 = vadd.f32 %v1218, %v1721
    %v1723 = vpop.f32.mrb[0].mxu0
    %1724 = vmatprep.mubr.bf16.mxu0 0
    %1725 = vmatmul.mubr.bf16.gmra.mrb[0].mxu0 %v1186
    %v1726 = vpop.f32.mrb[0].mxu0
    %v1727 = vadd.f32 %v1218, %v1726
    %v1728 = vpop.f32.mrb[0].mxu0
    %v1729 = vpop.f32.mrb[0].mxu0
    %v1730 = vadd.f32 %v1218, %v1729
    %v1731 = vpop.f32.mrb[0].mxu0
    %1732 = vmatprep.mubr.bf16.mxu0 0
    %1733 = vmatmul.mubr.bf16.gmra.mrb[0].mxu0 %v1187
    %v1734 = vpop.f32.mrb[0].mxu0
    %v1735 = vadd.f32 %v1218, %v1734
    %v1736 = vpop.f32.mrb[0].mxu0
    %v1737 = vpop.f32.mrb[0].mxu0
    %v1738 = vadd.f32 %v1218, %v1737
    %v1739 = vpop.f32.mrb[0].mxu0
    %1740 = vmatprep.mubr.bf16.mxu0 0
    %1741 = vmatmul.mubr.bf16.gmra.mrb[0].mxu0 %v1188
    %v1742 = vpop.f32.mrb[0].mxu0
    %v1743 = vadd.f32 %v1218, %v1742
    %v1744 = vpop.f32.mrb[0].mxu0
    %v1745 = vpop.f32.mrb[0].mxu0
    %v1746 = vadd.f32 %v1218, %v1745
    %v1747 = vpop.f32.mrb[0].mxu0
    %1748 = vmatprep.mubr.bf16.mxu0 0
    %1749 = vmatmul.mubr.bf16.gmra.mrb[0].mxu0 %v1189
    %v1750 = vpop.f32.mrb[0].mxu0
    %v1751 = vadd.f32 %v1218, %v1750
    %v1752 = vpop.f32.mrb[0].mxu0
    %v1753 = vpop.f32.mrb[0].mxu0
    %v1754 = vadd.f32 %v1218, %v1753
    %v1755 = vpop.f32.mrb[0].mxu0
    %1756 = vmatprep.mubr.bf16.mxu0 0
    %1757 = vmatmul.mubr.bf16.gmra.mrb[0].mxu0 %v1190
    %v1758 = vpop.f32.mrb[0].mxu0
    %v1759 = vadd.f32 %v1218, %v1758
    %v1760 = vpop.f32.mrb[0].mxu0
    %v1761 = vpop.f32.mrb[0].mxu0
    %v1762 = vadd.f32 %v1218, %v1761
    %v1763 = vpop.f32.mrb[0].mxu0
    %1764 = vmatprep.mubr.bf16.mxu0 0
    %1765 = vmatmul.mubr.bf16.gmra.mrb[0].mxu0 %v1191
    %v1766 = vpop.f32.mrb[0].mxu0
    %v1767 = vadd.f32 %v1218, %v1766
    %v1768 = vpop.f32.mrb[0].mxu0
    %v1769 = vpop.f32.mrb[0].mxu0
    %v1770 = vadd.f32 %v1218, %v1769
    %v1771 = vpop.f32.mrb[0].mxu0
    %1772 = vmatprep.mubr.bf16.mxu0 0
    %1773 = vmatmul.mubr.bf16.gmra.mrb[0].mxu0 %v1192
    %v1774 = vpop.f32.mrb[0].mxu0
    %v1775 = vadd.f32 %v1218, %v1774
    %v1776 = vpop.f32.mrb[0].mxu0
    %v1777 = vpop.f32.mrb[0].mxu0
    %v1778 = vadd.f32 %v1218, %v1777
    %v1779 = vpop.f32.mrb[0].mxu0
    %1780 = vmatprep.mubr.bf16.mxu0 0
    %1781 = vmatmul.mubr.bf16.gmra.mrb[0].mxu0 %v1193
    %v1782 = vpop.f32.mrb[0].mxu0
    %v1783 = vadd.f32 %v1218, %v1782
    %v1784 = vpop.f32.mrb[0].mxu0
    %v1785 = vpop.f32.mrb[0].mxu0
    %v1786 = vadd.f32 %v1218, %v1785
    %v1787 = vpop.f32.mrb[0].mxu0
    %1788 = vmatprep.mubr.bf16.mxu0 0
    %1789 = vmatmul.mubr.bf16.gmra.mrb[0].mxu0 %v1194
    %v1790 = vpop.f32.mrb[0].mxu0
    %v1791 = vadd.f32 %v1218, %v1790
    %v1792 = vpop.f32.mrb[0].mxu0
    %v1793 = vpop.f32.mrb[0].mxu0
    %v1794 = vadd.f32 %v1218, %v1793
    %v1795 = vpop.f32.mrb[0].mxu0
    %1796 = vmatprep.mubr.bf16.mxu0 0
    %1797 = vmatmul.mubr.bf16.gmra.mrb[0].mxu0 %v1195
    %v1798 = vpop.f32.mrb[0].mxu0
    %v1799 = vadd.f32 %v1218, %v1798
    %v1800 = vpop.f32.mrb[0].mxu0
    %v1801 = vpop.f32.mrb[0].mxu0
    %v1802 = vadd.f32 %v1218, %v1801
    %v1803 = vpop.f32.mrb[0].mxu0
    %1804 = vmatprep.mubr.bf16.mxu0 0
    %1805 = vmatmul.mubr.bf16.gmra.mrb[0].mxu0 %v1196
    %v1806 = vpop.f32.mrb[0].mxu0
    %v1807 = vadd.f32 %v1218, %v1806
    %v1808 = vpop.f32.mrb[0].mxu0
    %v1809 = vpop.f32.mrb[0].mxu0
    %v1810 = vadd.f32 %v1218, %v1809
    %v1811 = vpop.f32.mrb[0].mxu0
    %1812 = vdwg.mxu0
    %v1813 = vmax.f32 %v1303, 0.0
    %v1814 = vmax.f32 %v1306, 0.0
    %v1815 = vmax.f32 %v1311, 0.0
    %v1816 = vmax.f32 %v1314, 0.0
    %v1817 = vmax.f32 %v1319, 0.0
    %v1818 = vmax.f32 %v1322, 0.0
    %v1819 = vmax.f32 %v1327, 0.0
    %v1820 = vmax.f32 %v1330, 0.0
    %v1821 = vmax.f32 %v1335, 0.0
    %v1822 = vmax.f32 %v1338, 0.0
    %v1823 = vmax.f32 %v1343, 0.0
    %v1824 = vmax.f32 %v1346, 0.0
    %v1825 = vmax.f32 %v1351, 0.0
    %v1826 = vmax.f32 %v1354, 0.0
    %v1827 = vmax.f32 %v1359, 0.0
    %v1828 = vmax.f32 %v1362, 0.0
    %v1829 = vmax.f32 %v1367, 0.0
    %v1830 = vmax.f32 %v1370, 0.0
    %v1831 = vmax.f32 %v1375, 0.0
    %v1832 = vmax.f32 %v1378, 0.0
    %v1833 = vmax.f32 %v1383, 0.0
    %v1834 = vmax.f32 %v1386, 0.0
    %v1835 = vmax.f32 %v1391, 0.0
    %v1836 = vmax.f32 %v1394, 0.0
    %v1837 = vmax.f32 %v1399, 0.0
    %v1838 = vmax.f32 %v1402, 0.0
    %v1839 = vmax.f32 %v1407, 0.0
    %v1840 = vmax.f32 %v1410, 0.0
    %v1841 = vmax.f32 %v1415, 0.0
    %v1842 = vmax.f32 %v1418, 0.0
    %v1843 = vmax.f32 %v1423, 0.0
    %v1844 = vmax.f32 %v1426, 0.0
    %v1845 = vmax.f32 %v1431, 0.0
    %v1846 = vmax.f32 %v1434, 0.0
    %v1847 = vmax.f32 %v1439, 0.0
    %v1848 = vmax.f32 %v1442, 0.0
    %v1849 = vmax.f32 %v1447, 0.0
    %v1850 = vmax.f32 %v1450, 0.0
    %v1851 = vmax.f32 %v1455, 0.0
    %v1852 = vmax.f32 %v1458, 0.0
    %v1853 = vmax.f32 %v1463, 0.0
    %v1854 = vmax.f32 %v1466, 0.0
    %v1855 = vmax.f32 %v1471, 0.0
    %v1856 = vmax.f32 %v1474, 0.0
    %v1857 = vmax.f32 %v1479, 0.0
    %v1858 = vmax.f32 %v1482, 0.0
    %v1859 = vmax.f32 %v1487, 0.0
    %v1860 = vmax.f32 %v1490, 0.0
    %v1861 = vmax.f32 %v1495, 0.0
    %v1862 = vmax.f32 %v1498, 0.0
    %v1863 = vmax.f32 %v1503, 0.0
    %v1864 = vmax.f32 %v1506, 0.0
    %v1865 = vmax.f32 %v1511, 0.0
    %v1866 = vmax.f32 %v1514, 0.0
    %v1867 = vmax.f32 %v1519, 0.0
    %v1868 = vmax.f32 %v1522, 0.0
    %v1869 = vmax.f32 %v1527, 0.0
    %v1870 = vmax.f32 %v1530, 0.0
    %v1871 = vmax.f32 %v1535, 0.0
    %v1872 = vmax.f32 %v1538, 0.0
    %v1873 = vmax.f32 %v1543, 0.0
    %v1874 = vmax.f32 %v1546, 0.0
    %v1875 = vmax.f32 %v1551, 0.0
    %v1876 = vmax.f32 %v1554, 0.0
    %v1877 = vmax.f32 %v1559, 0.0
    %v1878 = vmax.f32 %v1562, 0.0
    %v1879 = vmax.f32 %v1567, 0.0
    %v1880 = vmax.f32 %v1570, 0.0
    %v1881 = vmax.f32 %v1575, 0.0
    %v1882 = vmax.f32 %v1578, 0.0
    %v1883 = vmax.f32 %v1583, 0.0
    %v1884 = vmax.f32 %v1586, 0.0
    %v1885 = vmax.f32 %v1591, 0.0
    %v1886 = vmax.f32 %v1594, 0.0
    %v1887 = vmax.f32 %v1599, 0.0
    %v1888 = vmax.f32 %v1602, 0.0
    %v1889 = vmax.f32 %v1607, 0.0
    %v1890 = vmax.f32 %v1610, 0.0
    %v1891 = vmax.f32 %v1615, 0.0
    %v1892 = vmax.f32 %v1618, 0.0
    %v1893 = vmax.f32 %v1623, 0.0
    %v1894 = vmax.f32 %v1626, 0.0
    %v1895 = vmax.f32 %v1631, 0.0
    %v1896 = vmax.f32 %v1634, 0.0
    %v1897 = vmax.f32 %v1639, 0.0
    %v1898 = vmax.f32 %v1642, 0.0
    %v1899 = vmax.f32 %v1647, 0.0
    %v1900 = vmax.f32 %v1650, 0.0
    %v1901 = vmax.f32 %v1655, 0.0
    %v1902 = vmax.f32 %v1658, 0.0
    %v1903 = vmax.f32 %v1663, 0.0
    %v1904 = vmax.f32 %v1666, 0.0
    %v1905 = vmax.f32 %v1671, 0.0
    %v1906 = vmax.f32 %v1674, 0.0
    %v1907 = vmax.f32 %v1679, 0.0
    %v1908 = vmax.f32 %v1682, 0.0
    %v1909 = vmax.f32 %v1687, 0.0
    %v1910 = vmax.f32 %v1690, 0.0
    %v1911 = vmax.f32 %v1695, 0.0
    %v1912 = vmax.f32 %v1698, 0.0
    %v1913 = vmax.f32 %v1703, 0.0
    %v1914 = vmax.f32 %v1706, 0.0
    %v1915 = vmax.f32 %v1711, 0.0
    %v1916 = vmax.f32 %v1714, 0.0
    %v1917 = vmax.f32 %v1719, 0.0
    %v1918 = vmax.f32 %v1722, 0.0
    %v1919 = vmax.f32 %v1727, 0.0
    %v1920 = vmax.f32 %v1730, 0.0
    %v1921 = vmax.f32 %v1735, 0.0
    %v1922 = vmax.f32 %v1738, 0.0
    %v1923 = vmax.f32 %v1743, 0.0
    %v1924 = vmax.f32 %v1746, 0.0
    %v1925 = vmax.f32 %v1751, 0.0
    %v1926 = vmax.f32 %v1754, 0.0
    %v1927 = vmax.f32 %v1759, 0.0
    %v1928 = vmax.f32 %v1762, 0.0
    %v1929 = vmax.f32 %v1767, 0.0
    %v1930 = vmax.f32 %v1770, 0.0
    %v1931 = vmax.f32 %v1775, 0.0
    %v1932 = vmax.f32 %v1778, 0.0
    %v1933 = vmax.f32 %v1783, 0.0
    %v1934 = vmax.f32 %v1786, 0.0
    %v1935 = vmax.f32 %v1791, 0.0
    %v1936 = vmax.f32 %v1794, 0.0
    %v1937 = vmax.f32 %v1799, 0.0
    %v1938 = vmax.f32 %v1802, 0.0
    %v1939 = vmax.f32 %v1807, 0.0
    %v1940 = vmax.f32 %v1810, 0.0
    %v1941 = vpack.c.bf16 %v1814, %v1813
    %v1942 = vpack.c.bf16 %v1816, %v1815
    %v1943 = vpack.c.bf16 %v1818, %v1817
    %v1944 = vpack.c.bf16 %v1820, %v1819
    %v1945 = vpack.c.bf16 %v1822, %v1821
    %v1946 = vpack.c.bf16 %v1824, %v1823
    %v1947 = vpack.c.bf16 %v1826, %v1825
    %v1948 = vpack.c.bf16 %v1828, %v1827
    %v1949 = vpack.c.bf16 %v1830, %v1829
    %v1950 = vpack.c.bf16 %v1832, %v1831
    %v1951 = vpack.c.bf16 %v1834, %v1833
    %v1952 = vpack.c.bf16 %v1836, %v1835
    %v1953 = vpack.c.bf16 %v1838, %v1837
    %v1954 = vpack.c.bf16 %v1840, %v1839
    %v1955 = vpack.c.bf16 %v1842, %v1841
    %v1956 = vpack.c.bf16 %v1844, %v1843
    %v1957 = vpack.c.bf16 %v1846, %v1845
    %v1958 = vpack.c.bf16 %v1848, %v1847
    %v1959 = vpack.c.bf16 %v1850, %v1849
    %v1960 = vpack.c.bf16 %v1852, %v1851
    %v1961 = vpack.c.bf16 %v1854, %v1853
    %v1962 = vpack.c.bf16 %v1856, %v1855
    %v1963 = vpack.c.bf16 %v1858, %v1857
    %v1964 = vpack.c.bf16 %v1860, %v1859
    %v1965 = vpack.c.bf16 %v1862, %v1861
    %v1966 = vpack.c.bf16 %v1864, %v1863
    %v1967 = vpack.c.bf16 %v1866, %v1865
    %v1968 = vpack.c.bf16 %v1868, %v1867
    %v1969 = vpack.c.bf16 %v1870, %v1869
    %v1970 = vpack.c.bf16 %v1872, %v1871
    %v1971 = vpack.c.bf16 %v1874, %v1873
    %v1972 = vpack.c.bf16 %v1876, %v1875
    %v1973 = vpack.c.bf16 %v1878, %v1877
    %v1974 = vpack.c.bf16 %v1880, %v1879
    %v1975 = vpack.c.bf16 %v1882, %v1881
    %v1976 = vpack.c.bf16 %v1884, %v1883
    %v1977 = vpack.c.bf16 %v1886, %v1885
    %v1978 = vpack.c.bf16 %v1888, %v1887
    %v1979 = vpack.c.bf16 %v1890, %v1889
    %v1980 = vpack.c.bf16 %v1892, %v1891
    %v1981 = vpack.c.bf16 %v1894, %v1893
    %v1982 = vpack.c.bf16 %v1896, %v1895
    %v1983 = vpack.c.bf16 %v1898, %v1897
    %v1984 = vpack.c.bf16 %v1900, %v1899
    %v1985 = vpack.c.bf16 %v1902, %v1901
    %v1986 = vpack.c.bf16 %v1904, %v1903
    %v1987 = vpack.c.bf16 %v1906, %v1905
    %v1988 = vpack.c.bf16 %v1908, %v1907
    %v1989 = vpack.c.bf16 %v1910, %v1909
    %v1990 = vpack.c.bf16 %v1912, %v1911
    %v1991 = vpack.c.bf16 %v1914, %v1913
    %v1992 = vpack.c.bf16 %v1916, %v1915
    %v1993 = vpack.c.bf16 %v1918, %v1917
    %v1994 = vpack.c.bf16 %v1920, %v1919
    %v1995 = vpack.c.bf16 %v1922, %v1921
    %v1996 = vpack.c.bf16 %v1924, %v1923
    %v1997 = vpack.c.bf16 %v1926, %v1925
    %v1998 = vpack.c.bf16 %v1928, %v1927
    %v1999 = vpack.c.bf16 %v1930, %v1929
    %v2000 = vpack.c.bf16 %v1932, %v1931
    %v2001 = vpack.c.bf16 %v1934, %v1933
    %v2002 = vpack.c.bf16 %v1936, %v1935
    %v2003 = vpack.c.bf16 %v1938, %v1937
    %v2004 = vpack.c.bf16 %v1940, %v1939
    %v2005 = vld [vmem:[%s5] sm:$0xf]
    %v2006 = vld [vmem:[%s5 + $0x4] sm:$0xf]
    %v2007 = vld [vmem:[%s5 + $0x8] sm:$0xf]
    %v2008 = vld [vmem:[%s5 + $0xc] sm:$0xf]
    %v2009 = vld [vmem:[%s5 + $0x10] sm:$0xf]
    %v2010 = vld [vmem:[%s5 + $0x14] sm:$0xf]
    %v2011 = vld [vmem:[%s5 + $0x18] sm:$0xf]
    %v2012 = vld [vmem:[%s5 + $0x1c] sm:$0xf]
    %v2013 = vld [vmem:[%s6] sm:$0x1]
    %v2015 = vlaneseq
    %v2016 = vshrl.u32 %v2015, 7
    %v2017 = vsub.s32 0, %v2016
    %v2018 = vrot.slane %v2013, %v2017
    %v2028 = vunpack.c.l.b16 %v2005
    %v2029 = vunpack.c.l.b16 %v2006
    %v2030 = vunpack.c.l.b16 %v2007
    %v2031 = vunpack.c.l.b16 %v2008
    %v2032 = vunpack.c.l.b16 %v2009
    %v2033 = vunpack.c.l.b16 %v2010
    %v2034 = vunpack.c.l.b16 %v2011
    %v2035 = vunpack.c.l.b16 %v2012
    %v2036 = vpack.c.b16 %v2029, %v2028
    %v2037 = vpack.c.b16 %v2031, %v2030
    %v2038 = vpack.c.b16 %v2033, %v2032
    %v2039 = vpack.c.b16 %v2035, %v2034
    %vm2044 = vcmask 523264
    %v2046 = vsel %vm2044, %v1941, 0
    %v2049 = vsel %vm2044, %v1942, 0
    %v2052 = vsel %vm2044, %v1943, 0
    %v2055 = vsel %vm2044, %v1944, 0
    %v2058 = vsel %vm2044, %v1945, 0
    %v2061 = vsel %vm2044, %v1946, 0
    %v2064 = vsel %vm2044, %v1947, 0
    %v2067 = vsel %vm2044, %v1948, 0
    %v2070 = vsel %vm2044, %v1949, 0
    %v2073 = vsel %vm2044, %v1950, 0
    %v2076 = vsel %vm2044, %v1951, 0
    %v2079 = vsel %vm2044, %v1952, 0
    %v2082 = vsel %vm2044, %v1953, 0
    %v2085 = vsel %vm2044, %v1954, 0
    %v2088 = vsel %vm2044, %v1955, 0
    %v2091 = vsel %vm2044, %v1956, 0
    %v2094 = vsel %vm2044, %v1957, 0
    %v2097 = vsel %vm2044, %v1958, 0
    %v2100 = vsel %vm2044, %v1959, 0
    %v2103 = vsel %vm2044, %v1960, 0
    %v2106 = vsel %vm2044, %v1961, 0
    %v2109 = vsel %vm2044, %v1962, 0
    %v2112 = vsel %vm2044, %v1963, 0
    %v2115 = vsel %vm2044, %v1964, 0
    %v2118 = vsel %vm2044, %v1965, 0
    %v2121 = vsel %vm2044, %v1966, 0
    %v2124 = vsel %vm2044, %v1967, 0
    %v2127 = vsel %vm2044, %v1968, 0
    %v2130 = vsel %vm2044, %v1969, 0
    %v2133 = vsel %vm2044, %v1970, 0
    %v2136 = vsel %vm2044, %v1971, 0
    %v2139 = vsel %vm2044, %v1972, 0
    %v2142 = vsel %vm2044, %v1973, 0
    %v2145 = vsel %vm2044, %v1974, 0
    %v2148 = vsel %vm2044, %v1975, 0
    %v2151 = vsel %vm2044, %v1976, 0
    %v2154 = vsel %vm2044, %v1977, 0
    %v2157 = vsel %vm2044, %v1978, 0
    %v2160 = vsel %vm2044, %v1979, 0
    %v2163 = vsel %vm2044, %v1980, 0
    %v2166 = vsel %vm2044, %v1981, 0
    %v2169 = vsel %vm2044, %v1982, 0
    %v2172 = vsel %vm2044, %v1983, 0
    %v2175 = vsel %vm2044, %v1984, 0
    %v2178 = vsel %vm2044, %v1985, 0
    %v2181 = vsel %vm2044, %v1986, 0
    %v2184 = vsel %vm2044, %v1987, 0
    %v2187 = vsel %vm2044, %v1988, 0
    %v2190 = vsel %vm2044, %v1989, 0
    %v2193 = vsel %vm2044, %v1990, 0
    %v2196 = vsel %vm2044, %v1991, 0
    %v2199 = vsel %vm2044, %v1992, 0
    %v2202 = vsel %vm2044, %v1993, 0
    %v2205 = vsel %vm2044, %v1994, 0
    %v2208 = vsel %vm2044, %v1995, 0
    %v2211 = vsel %vm2044, %v1996, 0
    %v2214 = vsel %vm2044, %v1997, 0
    %v2217 = vsel %vm2044, %v1998, 0
    %v2220 = vsel %vm2044, %v1999, 0
    %v2223 = vsel %vm2044, %v2000, 0
    %v2226 = vsel %vm2044, %v2001, 0
    %v2229 = vsel %vm2044, %v2002, 0
    %v2232 = vsel %vm2044, %v2003, 0
    %v2235 = vsel %vm2044, %v2004, 0
    %2237 = vmatprep.subr.bf16.mxu0 0
    %2238 = vmatpush1.bf16.msra.mxu0 %v2036
    %2239 = vmatprep.subr.bf16.mxu0 0
    %2240 = vmatpush1.bf16.msra.mxu0 %v2037
    %2241 = vmatprep.subr.bf16.mxu0 0
    %2242 = vmatpush1.bf16.msra.mxu0 %v2038
    %2243 = vmatprep.subr.bf16.mxu0 0
    %2244 = vmatpush1.bf16.msra.mxu0 %v2039
    %2245 = vmatprep.subr.bf16.mxu0 0
    %2246 = vmatpush1.bf16.msra.mxu0 0
    %2247 = vmatprep.subr.bf16.mxu0 0
    %2248 = vmatpush1.bf16.msra.mxu0 0
    %2249 = vmatprep.subr.bf16.mxu0 0
    %2250 = vmatpush1.bf16.msra.mxu0 0
    %2251 = vmatprep.subr.bf16.mxu0 0
    %2252 = vmatpush1.bf16.msra.mxu0 0
    %2253 = vmatprep.subr.bf16.mxu0 0
    %2254 = vmatpush1.bf16.msra.mxu0 0
    %2255 = vmatprep.subr.bf16.mxu0 0
    %2256 = vmatpush1.bf16.msra.mxu0 0
    %2257 = vmatprep.subr.bf16.mxu0 0
    %2258 = vmatpush1.bf16.msra.mxu0 0
    %2259 = vmatprep.subr.bf16.mxu0 0
    %2260 = vmatpush1.bf16.msra.mxu0 0
    %2261 = vmatprep.subr.bf16.mxu0 0
    %2262 = vmatpush1.bf16.msra.mxu0 0
    %2263 = vmatprep.subr.bf16.mxu0 0
    %2264 = vmatpush1.bf16.msra.mxu0 0
    %2265 = vmatprep.subr.bf16.mxu0 0
    %2266 = vmatpush1.bf16.msra.mxu0 0
    %2267 = vmatprep.subr.bf16.mxu0 0
    %2268 = vmatpush1.bf16.msra.mxu0 0
    %2269 = vmatprep.mubr.bf16.mxu0 0
    %2270 = vmatmul.mubr.bf16.gmra.mrb[0].mxu0 %v2046
    %v2271 = vpop.f32.mrb[0].mxu0
    %v2272 = vadd.f32 %v2018, %v2271
    %v2273 = vpop.f32.mrb[0].mxu0
    %v2274 = vpop.f32.mrb[0].mxu0
    %v2275 = vadd.f32 %v2018, %v2274
    %v2276 = vpop.f32.mrb[0].mxu0
    %2277 = vmatprep.mubr.bf16.mxu0 0
    %2278 = vmatmul.mubr.bf16.gmra.mrb[0].mxu0 %v2049
    %v2279 = vpop.f32.mrb[0].mxu0
    %v2280 = vadd.f32 %v2018, %v2279
    %v2281 = vpop.f32.mrb[0].mxu0
    %v2282 = vpop.f32.mrb[0].mxu0
    %v2283 = vadd.f32 %v2018, %v2282
    %v2284 = vpop.f32.mrb[0].mxu0
    %2285 = vmatprep.mubr.bf16.mxu0 0
    %2286 = vmatmul.mubr.bf16.gmra.mrb[0].mxu0 %v2052
    %v2287 = vpop.f32.mrb[0].mxu0
    %v2288 = vadd.f32 %v2018, %v2287
    %v2289 = vpop.f32.mrb[0].mxu0
    %v2290 = vpop.f32.mrb[0].mxu0
    %v2291 = vadd.f32 %v2018, %v2290
    %v2292 = vpop.f32.mrb[0].mxu0
    %2293 = vmatprep.mubr.bf16.mxu0 0
    %2294 = vmatmul.mubr.bf16.gmra.mrb[0].mxu0 %v2055
    %v2295 = vpop.f32.mrb[0].mxu0
    %v2296 = vadd.f32 %v2018, %v2295
    %v2297 = vpop.f32.mrb[0].mxu0
    %v2298 = vpop.f32.mrb[0].mxu0
    %v2299 = vadd.f32 %v2018, %v2298
    %v2300 = vpop.f32.mrb[0].mxu0
    %2301 = vmatprep.mubr.bf16.mxu0 0
    %2302 = vmatmul.mubr.bf16.gmra.mrb[0].mxu0 %v2058
    %v2303 = vpop.f32.mrb[0].mxu0
    %v2304 = vadd.f32 %v2018, %v2303
    %v2305 = vpop.f32.mrb[0].mxu0
    %v2306 = vpop.f32.mrb[0].mxu0
    %v2307 = vadd.f32 %v2018, %v2306
    %v2308 = vpop.f32.mrb[0].mxu0
    %2309 = vmatprep.mubr.bf16.mxu0 0
    %2310 = vmatmul.mubr.bf16.gmra.mrb[0].mxu0 %v2061
    %v2311 = vpop.f32.mrb[0].mxu0
    %v2312 = vadd.f32 %v2018, %v2311
    %v2313 = vpop.f32.mrb[0].mxu0
    %v2314 = vpop.f32.mrb[0].mxu0
    %v2315 = vadd.f32 %v2018, %v2314
    %v2316 = vpop.f32.mrb[0].mxu0
    %2317 = vmatprep.mubr.bf16.mxu0 0
    %2318 = vmatmul.mubr.bf16.gmra.mrb[0].mxu0 %v2064
    %v2319 = vpop.f32.mrb[0].mxu0
    %v2320 = vadd.f32 %v2018, %v2319
    %v2321 = vpop.f32.mrb[0].mxu0
    %v2322 = vpop.f32.mrb[0].mxu0
    %v2323 = vadd.f32 %v2018, %v2322
    %v2324 = vpop.f32.mrb[0].mxu0
    %2325 = vmatprep.mubr.bf16.mxu0 0
    %2326 = vmatmul.mubr.bf16.gmra.mrb[0].mxu0 %v2067
    %v2327 = vpop.f32.mrb[0].mxu0
    %v2328 = vadd.f32 %v2018, %v2327
    %v2329 = vpop.f32.mrb[0].mxu0
    %v2330 = vpop.f32.mrb[0].mxu0
    %v2331 = vadd.f32 %v2018, %v2330
    %v2332 = vpop.f32.mrb[0].mxu0
    %2333 = vmatprep.mubr.bf16.mxu0 0
    %2334 = vmatmul.mubr.bf16.gmra.mrb[0].mxu0 %v2070
    %v2335 = vpop.f32.mrb[0].mxu0
    %v2336 = vadd.f32 %v2018, %v2335
    %v2337 = vpop.f32.mrb[0].mxu0
    %v2338 = vpop.f32.mrb[0].mxu0
    %v2339 = vadd.f32 %v2018, %v2338
    %v2340 = vpop.f32.mrb[0].mxu0
    %2341 = vmatprep.mubr.bf16.mxu0 0
    %2342 = vmatmul.mubr.bf16.gmra.mrb[0].mxu0 %v2073
    %v2343 = vpop.f32.mrb[0].mxu0
    %v2344 = vadd.f32 %v2018, %v2343
    %v2345 = vpop.f32.mrb[0].mxu0
    %v2346 = vpop.f32.mrb[0].mxu0
    %v2347 = vadd.f32 %v2018, %v2346
    %v2348 = vpop.f32.mrb[0].mxu0
    %2349 = vmatprep.mubr.bf16.mxu0 0
    %2350 = vmatmul.mubr.bf16.gmra.mrb[0].mxu0 %v2076
    %v2351 = vpop.f32.mrb[0].mxu0
    %v2352 = vadd.f32 %v2018, %v2351
    %v2353 = vpop.f32.mrb[0].mxu0
    %v2354 = vpop.f32.mrb[0].mxu0
    %v2355 = vadd.f32 %v2018, %v2354
    %v2356 = vpop.f32.mrb[0].mxu0
    %2357 = vmatprep.mubr.bf16.mxu0 0
    %2358 = vmatmul.mubr.bf16.gmra.mrb[0].mxu0 %v2079
    %v2359 = vpop.f32.mrb[0].mxu0
    %v2360 = vadd.f32 %v2018, %v2359
    %v2361 = vpop.f32.mrb[0].mxu0
    %v2362 = vpop.f32.mrb[0].mxu0
    %v2363 = vadd.f32 %v2018, %v2362
    %v2364 = vpop.f32.mrb[0].mxu0
    %2365 = vmatprep.mubr.bf16.mxu0 0
    %2366 = vmatmul.mubr.bf16.gmra.mrb[0].mxu0 %v2082
    %v2367 = vpop.f32.mrb[0].mxu0
    %v2368 = vadd.f32 %v2018, %v2367
    %v2369 = vpop.f32.mrb[0].mxu0
    %v2370 = vpop.f32.mrb[0].mxu0
    %v2371 = vadd.f32 %v2018, %v2370
    %v2372 = vpop.f32.mrb[0].mxu0
    %2373 = vmatprep.mubr.bf16.mxu0 0
    %2374 = vmatmul.mubr.bf16.gmra.mrb[0].mxu0 %v2085
    %v2375 = vpop.f32.mrb[0].mxu0
    %v2376 = vadd.f32 %v2018, %v2375
    %v2377 = vpop.f32.mrb[0].mxu0
    %v2378 = vpop.f32.mrb[0].mxu0
    %v2379 = vadd.f32 %v2018, %v2378
    %v2380 = vpop.f32.mrb[0].mxu0
    %2381 = vmatprep.mubr.bf16.mxu0 0
    %2382 = vmatmul.mubr.bf16.gmra.mrb[0].mxu0 %v2088
    %v2383 = vpop.f32.mrb[0].mxu0
    %v2384 = vadd.f32 %v2018, %v2383
    %v2385 = vpop.f32.mrb[0].mxu0
    %v2386 = vpop.f32.mrb[0].mxu0
    %v2387 = vadd.f32 %v2018, %v2386
    %v2388 = vpop.f32.mrb[0].mxu0
    %2389 = vmatprep.mubr.bf16.mxu0 0
    %2390 = vmatmul.mubr.bf16.gmra.mrb[0].mxu0 %v2091
    %v2391 = vpop.f32.mrb[0].mxu0
    %v2392 = vadd.f32 %v2018, %v2391
    %v2393 = vpop.f32.mrb[0].mxu0
    %v2394 = vpop.f32.mrb[0].mxu0
    %v2395 = vadd.f32 %v2018, %v2394
    %v2396 = vpop.f32.mrb[0].mxu0
    %2397 = vmatprep.mubr.bf16.mxu0 0
    %2398 = vmatmul.mubr.bf16.gmra.mrb[0].mxu0 %v2094
    %v2399 = vpop.f32.mrb[0].mxu0
    %v2400 = vadd.f32 %v2018, %v2399
    %v2401 = vpop.f32.mrb[0].mxu0
    %v2402 = vpop.f32.mrb[0].mxu0
    %v2403 = vadd.f32 %v2018, %v2402
    %v2404 = vpop.f32.mrb[0].mxu0
    %2405 = vmatprep.mubr.bf16.mxu0 0
    %2406 = vmatmul.mubr.bf16.gmra.mrb[0].mxu0 %v2097
    %v2407 = vpop.f32.mrb[0].mxu0
    %v2408 = vadd.f32 %v2018, %v2407
    %v2409 = vpop.f32.mrb[0].mxu0
    %v2410 = vpop.f32.mrb[0].mxu0
    %v2411 = vadd.f32 %v2018, %v2410
    %v2412 = vpop.f32.mrb[0].mxu0
    %2413 = vmatprep.mubr.bf16.mxu0 0
    %2414 = vmatmul.mubr.bf16.gmra.mrb[0].mxu0 %v2100
    %v2415 = vpop.f32.mrb[0].mxu0
    %v2416 = vadd.f32 %v2018, %v2415
    %v2417 = vpop.f32.mrb[0].mxu0
    %v2418 = vpop.f32.mrb[0].mxu0
    %v2419 = vadd.f32 %v2018, %v2418
    %v2420 = vpop.f32.mrb[0].mxu0
    %2421 = vmatprep.mubr.bf16.mxu0 0
    %2422 = vmatmul.mubr.bf16.gmra.mrb[0].mxu0 %v2103
    %v2423 = vpop.f32.mrb[0].mxu0
    %v2424 = vadd.f32 %v2018, %v2423
    %v2425 = vpop.f32.mrb[0].mxu0
    %v2426 = vpop.f32.mrb[0].mxu0
    %v2427 = vadd.f32 %v2018, %v2426
    %v2428 = vpop.f32.mrb[0].mxu0
    %2429 = vmatprep.mubr.bf16.mxu0 0
    %2430 = vmatmul.mubr.bf16.gmra.mrb[0].mxu0 %v2106
    %v2431 = vpop.f32.mrb[0].mxu0
    %v2432 = vadd.f32 %v2018, %v2431
    %v2433 = vpop.f32.mrb[0].mxu0
    %v2434 = vpop.f32.mrb[0].mxu0
    %v2435 = vadd.f32 %v2018, %v2434
    %v2436 = vpop.f32.mrb[0].mxu0
    %2437 = vmatprep.mubr.bf16.mxu0 0
    %2438 = vmatmul.mubr.bf16.gmra.mrb[0].mxu0 %v2109
    %v2439 = vpop.f32.mrb[0].mxu0
    %v2440 = vadd.f32 %v2018, %v2439
    %v2441 = vpop.f32.mrb[0].mxu0
    %v2442 = vpop.f32.mrb[0].mxu0
    %v2443 = vadd.f32 %v2018, %v2442
    %v2444 = vpop.f32.mrb[0].mxu0
    %2445 = vmatprep.mubr.bf16.mxu0 0
    %2446 = vmatmul.mubr.bf16.gmra.mrb[0].mxu0 %v2112
    %v2447 = vpop.f32.mrb[0].mxu0
    %v2448 = vadd.f32 %v2018, %v2447
    %v2449 = vpop.f32.mrb[0].mxu0
    %v2450 = vpop.f32.mrb[0].mxu0
    %v2451 = vadd.f32 %v2018, %v2450
    %v2452 = vpop.f32.mrb[0].mxu0
    %2453 = vmatprep.mubr.bf16.mxu0 0
    %2454 = vmatmul.mubr.bf16.gmra.mrb[0].mxu0 %v2115
    %v2455 = vpop.f32.mrb[0].mxu0
    %v2456 = vadd.f32 %v2018, %v2455
    %v2457 = vpop.f32.mrb[0].mxu0
    %v2458 = vpop.f32.mrb[0].mxu0
    %v2459 = vadd.f32 %v2018, %v2458
    %v2460 = vpop.f32.mrb[0].mxu0
    %2461 = vmatprep.mubr.bf16.mxu0 0
    %2462 = vmatmul.mubr.bf16.gmra.mrb[0].mxu0 %v2118
    %v2463 = vpop.f32.mrb[0].mxu0
    %v2464 = vadd.f32 %v2018, %v2463
    %v2465 = vpop.f32.mrb[0].mxu0
    %v2466 = vpop.f32.mrb[0].mxu0
    %v2467 = vadd.f32 %v2018, %v2466
    %v2468 = vpop.f32.mrb[0].mxu0
    %2469 = vmatprep.mubr.bf16.mxu0 0
    %2470 = vmatmul.mubr.bf16.gmra.mrb[0].mxu0 %v2121
    %v2471 = vpop.f32.mrb[0].mxu0
    %v2472 = vadd.f32 %v2018, %v2471
    %v2473 = vpop.f32.mrb[0].mxu0
    %v2474 = vpop.f32.mrb[0].mxu0
    %v2475 = vadd.f32 %v2018, %v2474
    %v2476 = vpop.f32.mrb[0].mxu0
    %2477 = vmatprep.mubr.bf16.mxu0 0
    %2478 = vmatmul.mubr.bf16.gmra.mrb[0].mxu0 %v2124
    %v2479 = vpop.f32.mrb[0].mxu0
    %v2480 = vadd.f32 %v2018, %v2479
    %v2481 = vpop.f32.mrb[0].mxu0
    %v2482 = vpop.f32.mrb[0].mxu0
    %v2483 = vadd.f32 %v2018, %v2482
    %v2484 = vpop.f32.mrb[0].mxu0
    %2485 = vmatprep.mubr.bf16.mxu0 0
    %2486 = vmatmul.mubr.bf16.gmra.mrb[0].mxu0 %v2127
    %v2487 = vpop.f32.mrb[0].mxu0
    %v2488 = vadd.f32 %v2018, %v2487
    %v2489 = vpop.f32.mrb[0].mxu0
    %v2490 = vpop.f32.mrb[0].mxu0
    %v2491 = vadd.f32 %v2018, %v2490
    %v2492 = vpop.f32.mrb[0].mxu0
    %2493 = vmatprep.mubr.bf16.mxu0 0
    %2494 = vmatmul.mubr.bf16.gmra.mrb[0].mxu0 %v2130
    %v2495 = vpop.f32.mrb[0].mxu0
    %v2496 = vadd.f32 %v2018, %v2495
    %v2497 = vpop.f32.mrb[0].mxu0
    %v2498 = vpop.f32.mrb[0].mxu0
    %v2499 = vadd.f32 %v2018, %v2498
    %v2500 = vpop.f32.mrb[0].mxu0
    %2501 = vmatprep.mubr.bf16.mxu0 0
    %2502 = vmatmul.mubr.bf16.gmra.mrb[0].mxu0 %v2133
    %v2503 = vpop.f32.mrb[0].mxu0
    %v2504 = vadd.f32 %v2018, %v2503
    %v2505 = vpop.f32.mrb[0].mxu0
    %v2506 = vpop.f32.mrb[0].mxu0
    %v2507 = vadd.f32 %v2018, %v2506
    %v2508 = vpop.f32.mrb[0].mxu0
    %2509 = vmatprep.mubr.bf16.mxu0 0
    %2510 = vmatmul.mubr.bf16.gmra.mrb[0].mxu0 %v2136
    %v2511 = vpop.f32.mrb[0].mxu0
    %v2512 = vadd.f32 %v2018, %v2511
    %v2513 = vpop.f32.mrb[0].mxu0
    %v2514 = vpop.f32.mrb[0].mxu0
    %v2515 = vadd.f32 %v2018, %v2514
    %v2516 = vpop.f32.mrb[0].mxu0
    %2517 = vmatprep.mubr.bf16.mxu0 0
    %2518 = vmatmul.mubr.bf16.gmra.mrb[0].mxu0 %v2139
    %v2519 = vpop.f32.mrb[0].mxu0
    %v2520 = vadd.f32 %v2018, %v2519
    %v2521 = vpop.f32.mrb[0].mxu0
    %v2522 = vpop.f32.mrb[0].mxu0
    %v2523 = vadd.f32 %v2018, %v2522
    %v2524 = vpop.f32.mrb[0].mxu0
    %2525 = vmatprep.mubr.bf16.mxu0 0
    %2526 = vmatmul.mubr.bf16.gmra.mrb[0].mxu0 %v2142
    %v2527 = vpop.f32.mrb[0].mxu0
    %v2528 = vadd.f32 %v2018, %v2527
    %v2529 = vpop.f32.mrb[0].mxu0
    %v2530 = vpop.f32.mrb[0].mxu0
    %v2531 = vadd.f32 %v2018, %v2530
    %v2532 = vpop.f32.mrb[0].mxu0
    %2533 = vmatprep.mubr.bf16.mxu0 0
    %2534 = vmatmul.mubr.bf16.gmra.mrb[0].mxu0 %v2145
    %v2535 = vpop.f32.mrb[0].mxu0
    %v2536 = vadd.f32 %v2018, %v2535
    %v2537 = vpop.f32.mrb[0].mxu0
    %v2538 = vpop.f32.mrb[0].mxu0
    %v2539 = vadd.f32 %v2018, %v2538
    %v2540 = vpop.f32.mrb[0].mxu0
    %2541 = vmatprep.mubr.bf16.mxu0 0
    %2542 = vmatmul.mubr.bf16.gmra.mrb[0].mxu0 %v2148
    %v2543 = vpop.f32.mrb[0].mxu0
    %v2544 = vadd.f32 %v2018, %v2543
    %v2545 = vpop.f32.mrb[0].mxu0
    %v2546 = vpop.f32.mrb[0].mxu0
    %v2547 = vadd.f32 %v2018, %v2546
    %v2548 = vpop.f32.mrb[0].mxu0
    %2549 = vmatprep.mubr.bf16.mxu0 0
    %2550 = vmatmul.mubr.bf16.gmra.mrb[0].mxu0 %v2151
    %v2551 = vpop.f32.mrb[0].mxu0
    %v2552 = vadd.f32 %v2018, %v2551
    %v2553 = vpop.f32.mrb[0].mxu0
    %v2554 = vpop.f32.mrb[0].mxu0
    %v2555 = vadd.f32 %v2018, %v2554
    %v2556 = vpop.f32.mrb[0].mxu0
    %2557 = vmatprep.mubr.bf16.mxu0 0
    %2558 = vmatmul.mubr.bf16.gmra.mrb[0].mxu0 %v2154
    %v2559 = vpop.f32.mrb[0].mxu0
    %v2560 = vadd.f32 %v2018, %v2559
    %v2561 = vpop.f32.mrb[0].mxu0
    %v2562 = vpop.f32.mrb[0].mxu0
    %v2563 = vadd.f32 %v2018, %v2562
    %v2564 = vpop.f32.mrb[0].mxu0
    %2565 = vmatprep.mubr.bf16.mxu0 0
    %2566 = vmatmul.mubr.bf16.gmra.mrb[0].mxu0 %v2157
    %v2567 = vpop.f32.mrb[0].mxu0
    %v2568 = vadd.f32 %v2018, %v2567
    %v2569 = vpop.f32.mrb[0].mxu0
    %v2570 = vpop.f32.mrb[0].mxu0
    %v2571 = vadd.f32 %v2018, %v2570
    %v2572 = vpop.f32.mrb[0].mxu0
    %2573 = vmatprep.mubr.bf16.mxu0 0
    %2574 = vmatmul.mubr.bf16.gmra.mrb[0].mxu0 %v2160
    %v2575 = vpop.f32.mrb[0].mxu0
    %v2576 = vadd.f32 %v2018, %v2575
    %v2577 = vpop.f32.mrb[0].mxu0
    %v2578 = vpop.f32.mrb[0].mxu0
    %v2579 = vadd.f32 %v2018, %v2578
    %v2580 = vpop.f32.mrb[0].mxu0
    %2581 = vmatprep.mubr.bf16.mxu0 0
    %2582 = vmatmul.mubr.bf16.gmra.mrb[0].mxu0 %v2163
    %v2583 = vpop.f32.mrb[0].mxu0
    %v2584 = vadd.f32 %v2018, %v2583
    %v2585 = vpop.f32.mrb[0].mxu0
    %v2586 = vpop.f32.mrb[0].mxu0
    %v2587 = vadd.f32 %v2018, %v2586
    %v2588 = vpop.f32.mrb[0].mxu0
    %2589 = vmatprep.mubr.bf16.mxu0 0
    %2590 = vmatmul.mubr.bf16.gmra.mrb[0].mxu0 %v2166
    %v2591 = vpop.f32.mrb[0].mxu0
    %v2592 = vadd.f32 %v2018, %v2591
    %v2593 = vpop.f32.mrb[0].mxu0
    %v2594 = vpop.f32.mrb[0].mxu0
    %v2595 = vadd.f32 %v2018, %v2594
    %v2596 = vpop.f32.mrb[0].mxu0
    %2597 = vmatprep.mubr.bf16.mxu0 0
    %2598 = vmatmul.mubr.bf16.gmra.mrb[0].mxu0 %v2169
    %v2599 = vpop.f32.mrb[0].mxu0
    %v2600 = vadd.f32 %v2018, %v2599
    %v2601 = vpop.f32.mrb[0].mxu0
    %v2602 = vpop.f32.mrb[0].mxu0
    %v2603 = vadd.f32 %v2018, %v2602
    %v2604 = vpop.f32.mrb[0].mxu0
    %2605 = vmatprep.mubr.bf16.mxu0 0
    %2606 = vmatmul.mubr.bf16.gmra.mrb[0].mxu0 %v2172
    %v2607 = vpop.f32.mrb[0].mxu0
    %v2608 = vadd.f32 %v2018, %v2607
    %v2609 = vpop.f32.mrb[0].mxu0
    %v2610 = vpop.f32.mrb[0].mxu0
    %v2611 = vadd.f32 %v2018, %v2610
    %v2612 = vpop.f32.mrb[0].mxu0
    %2613 = vmatprep.mubr.bf16.mxu0 0
    %2614 = vmatmul.mubr.bf16.gmra.mrb[0].mxu0 %v2175
    %v2615 = vpop.f32.mrb[0].mxu0
    %v2616 = vadd.f32 %v2018, %v2615
    %v2617 = vpop.f32.mrb[0].mxu0
    %v2618 = vpop.f32.mrb[0].mxu0
    %v2619 = vadd.f32 %v2018, %v2618
    %v2620 = vpop.f32.mrb[0].mxu0
    %2621 = vmatprep.mubr.bf16.mxu0 0
    %2622 = vmatmul.mubr.bf16.gmra.mrb[0].mxu0 %v2178
    %v2623 = vpop.f32.mrb[0].mxu0
    %v2624 = vadd.f32 %v2018, %v2623
    %v2625 = vpop.f32.mrb[0].mxu0
    %v2626 = vpop.f32.mrb[0].mxu0
    %v2627 = vadd.f32 %v2018, %v2626
    %v2628 = vpop.f32.mrb[0].mxu0
    %2629 = vmatprep.mubr.bf16.mxu0 0
    %2630 = vmatmul.mubr.bf16.gmra.mrb[0].mxu0 %v2181
    %v2631 = vpop.f32.mrb[0].mxu0
    %v2632 = vadd.f32 %v2018, %v2631
    %v2633 = vpop.f32.mrb[0].mxu0
    %v2634 = vpop.f32.mrb[0].mxu0
    %v2635 = vadd.f32 %v2018, %v2634
    %v2636 = vpop.f32.mrb[0].mxu0
    %2637 = vmatprep.mubr.bf16.mxu0 0
    %2638 = vmatmul.mubr.bf16.gmra.mrb[0].mxu0 %v2184
    %v2639 = vpop.f32.mrb[0].mxu0
    %v2640 = vadd.f32 %v2018, %v2639
    %v2641 = vpop.f32.mrb[0].mxu0
    %v2642 = vpop.f32.mrb[0].mxu0
    %v2643 = vadd.f32 %v2018, %v2642
    %v2644 = vpop.f32.mrb[0].mxu0
    %2645 = vmatprep.mubr.bf16.mxu0 0
    %2646 = vmatmul.mubr.bf16.gmra.mrb[0].mxu0 %v2187
    %v2647 = vpop.f32.mrb[0].mxu0
    %v2648 = vadd.f32 %v2018, %v2647
    %v2649 = vpop.f32.mrb[0].mxu0
    %v2650 = vpop.f32.mrb[0].mxu0
    %v2651 = vadd.f32 %v2018, %v2650
    %v2652 = vpop.f32.mrb[0].mxu0
    %2653 = vmatprep.mubr.bf16.mxu0 0
    %2654 = vmatmul.mubr.bf16.gmra.mrb[0].mxu0 %v2190
    %v2655 = vpop.f32.mrb[0].mxu0
    %v2656 = vadd.f32 %v2018, %v2655
    %v2657 = vpop.f32.mrb[0].mxu0
    %v2658 = vpop.f32.mrb[0].mxu0
    %v2659 = vadd.f32 %v2018, %v2658
    %v2660 = vpop.f32.mrb[0].mxu0
    %2661 = vmatprep.mubr.bf16.mxu0 0
    %2662 = vmatmul.mubr.bf16.gmra.mrb[0].mxu0 %v2193
    %v2663 = vpop.f32.mrb[0].mxu0
    %v2664 = vadd.f32 %v2018, %v2663
    %v2665 = vpop.f32.mrb[0].mxu0
    %v2666 = vpop.f32.mrb[0].mxu0
    %v2667 = vadd.f32 %v2018, %v2666
    %v2668 = vpop.f32.mrb[0].mxu0
    %2669 = vmatprep.mubr.bf16.mxu0 0
    %2670 = vmatmul.mubr.bf16.gmra.mrb[0].mxu0 %v2196
    %v2671 = vpop.f32.mrb[0].mxu0
    %v2672 = vadd.f32 %v2018, %v2671
    %v2673 = vpop.f32.mrb[0].mxu0
    %v2674 = vpop.f32.mrb[0].mxu0
    %v2675 = vadd.f32 %v2018, %v2674
    %v2676 = vpop.f32.mrb[0].mxu0
    %2677 = vmatprep.mubr.bf16.mxu0 0
    %2678 = vmatmul.mubr.bf16.gmra.mrb[0].mxu0 %v2199
    %v2679 = vpop.f32.mrb[0].mxu0
    %v2680 = vadd.f32 %v2018, %v2679
    %v2681 = vpop.f32.mrb[0].mxu0
    %v2682 = vpop.f32.mrb[0].mxu0
    %v2683 = vadd.f32 %v2018, %v2682
    %v2684 = vpop.f32.mrb[0].mxu0
    %2685 = vmatprep.mubr.bf16.mxu0 0
    %2686 = vmatmul.mubr.bf16.gmra.mrb[0].mxu0 %v2202
    %v2687 = vpop.f32.mrb[0].mxu0
    %v2688 = vadd.f32 %v2018, %v2687
    %v2689 = vpop.f32.mrb[0].mxu0
    %v2690 = vpop.f32.mrb[0].mxu0
    %v2691 = vadd.f32 %v2018, %v2690
    %v2692 = vpop.f32.mrb[0].mxu0
    %2693 = vmatprep.mubr.bf16.mxu0 0
    %2694 = vmatmul.mubr.bf16.gmra.mrb[0].mxu0 %v2205
    %v2695 = vpop.f32.mrb[0].mxu0
    %v2696 = vadd.f32 %v2018, %v2695
    %v2697 = vpop.f32.mrb[0].mxu0
    %v2698 = vpop.f32.mrb[0].mxu0
    %v2699 = vadd.f32 %v2018, %v2698
    %v2700 = vpop.f32.mrb[0].mxu0
    %2701 = vmatprep.mubr.bf16.mxu0 0
    %2702 = vmatmul.mubr.bf16.gmra.mrb[0].mxu0 %v2208
    %v2703 = vpop.f32.mrb[0].mxu0
    %v2704 = vadd.f32 %v2018, %v2703
    %v2705 = vpop.f32.mrb[0].mxu0
    %v2706 = vpop.f32.mrb[0].mxu0
    %v2707 = vadd.f32 %v2018, %v2706
    %v2708 = vpop.f32.mrb[0].mxu0
    %2709 = vmatprep.mubr.bf16.mxu0 0
    %2710 = vmatmul.mubr.bf16.gmra.mrb[0].mxu0 %v2211
    %v2711 = vpop.f32.mrb[0].mxu0
    %v2712 = vadd.f32 %v2018, %v2711
    %v2713 = vpop.f32.mrb[0].mxu0
    %v2714 = vpop.f32.mrb[0].mxu0
    %v2715 = vadd.f32 %v2018, %v2714
    %v2716 = vpop.f32.mrb[0].mxu0
    %2717 = vmatprep.mubr.bf16.mxu0 0
    %2718 = vmatmul.mubr.bf16.gmra.mrb[0].mxu0 %v2214
    %v2719 = vpop.f32.mrb[0].mxu0
    %v2720 = vadd.f32 %v2018, %v2719
    %v2721 = vpop.f32.mrb[0].mxu0
    %v2722 = vpop.f32.mrb[0].mxu0
    %v2723 = vadd.f32 %v2018, %v2722
    %v2724 = vpop.f32.mrb[0].mxu0
    %2725 = vmatprep.mubr.bf16.mxu0 0
    %2726 = vmatmul.mubr.bf16.gmra.mrb[0].mxu0 %v2217
    %v2727 = vpop.f32.mrb[0].mxu0
    %v2728 = vadd.f32 %v2018, %v2727
    %v2729 = vpop.f32.mrb[0].mxu0
    %v2730 = vpop.f32.mrb[0].mxu0
    %v2731 = vadd.f32 %v2018, %v2730
    %v2732 = vpop.f32.mrb[0].mxu0
    %2733 = vmatprep.mubr.bf16.mxu0 0
    %2734 = vmatmul.mubr.bf16.gmra.mrb[0].mxu0 %v2220
    %v2735 = vpop.f32.mrb[0].mxu0
    %v2736 = vadd.f32 %v2018, %v2735
    %v2737 = vpop.f32.mrb[0].mxu0
    %v2738 = vpop.f32.mrb[0].mxu0
    %v2739 = vadd.f32 %v2018, %v2738
    %v2740 = vpop.f32.mrb[0].mxu0
    %2741 = vmatprep.mubr.bf16.mxu0 0
    %2742 = vmatmul.mubr.bf16.gmra.mrb[0].mxu0 %v2223
    %v2743 = vpop.f32.mrb[0].mxu0
    %v2744 = vadd.f32 %v2018, %v2743
    %v2745 = vpop.f32.mrb[0].mxu0
    %v2746 = vpop.f32.mrb[0].mxu0
    %v2747 = vadd.f32 %v2018, %v2746
    %v2748 = vpop.f32.mrb[0].mxu0
    %2749 = vmatprep.mubr.bf16.mxu0 0
    %2750 = vmatmul.mubr.bf16.gmra.mrb[0].mxu0 %v2226
    %v2751 = vpop.f32.mrb[0].mxu0
    %v2752 = vadd.f32 %v2018, %v2751
    %v2753 = vpop.f32.mrb[0].mxu0
    %v2754 = vpop.f32.mrb[0].mxu0
    %v2755 = vadd.f32 %v2018, %v2754
    %v2756 = vpop.f32.mrb[0].mxu0
    %2757 = vmatprep.mubr.bf16.mxu0 0
    %2758 = vmatmul.mubr.bf16.gmra.mrb[0].mxu0 %v2229
    %v2759 = vpop.f32.mrb[0].mxu0
    %v2760 = vadd.f32 %v2018, %v2759
    %v2761 = vpop.f32.mrb[0].mxu0
    %v2762 = vpop.f32.mrb[0].mxu0
    %v2763 = vadd.f32 %v2018, %v2762
    %v2764 = vpop.f32.mrb[0].mxu0
    %2765 = vmatprep.mubr.bf16.mxu0 0
    %2766 = vmatmul.mubr.bf16.gmra.mrb[0].mxu0 %v2232
    %v2767 = vpop.f32.mrb[0].mxu0
    %v2768 = vadd.f32 %v2018, %v2767
    %v2769 = vpop.f32.mrb[0].mxu0
    %v2770 = vpop.f32.mrb[0].mxu0
    %v2771 = vadd.f32 %v2018, %v2770
    %v2772 = vpop.f32.mrb[0].mxu0
    %2773 = vmatprep.mubr.bf16.mxu0 0
    %2774 = vmatmul.mubr.bf16.gmra.mrb[0].mxu0 %v2235
    %v2775 = vpop.f32.mrb[0].mxu0
    %v2776 = vadd.f32 %v2018, %v2775
    %v2777 = vpop.f32.mrb[0].mxu0
    %v2778 = vpop.f32.mrb[0].mxu0
    %v2779 = vadd.f32 %v2018, %v2778
    %v2780 = vpop.f32.mrb[0].mxu0
    %2781 = vdwg.mxu0
    %v2782 = vmax.f32 %v2272, 0.0
    %v2783 = vmax.f32 %v2275, 0.0
    %v2784 = vmax.f32 %v2280, 0.0
    %v2785 = vmax.f32 %v2283, 0.0
    %v2786 = vmax.f32 %v2288, 0.0
    %v2787 = vmax.f32 %v2291, 0.0
    %v2788 = vmax.f32 %v2296, 0.0
    %v2789 = vmax.f32 %v2299, 0.0
    %v2790 = vmax.f32 %v2304, 0.0
    %v2791 = vmax.f32 %v2307, 0.0
    %v2792 = vmax.f32 %v2312, 0.0
    %v2793 = vmax.f32 %v2315, 0.0
    %v2794 = vmax.f32 %v2320, 0.0
    %v2795 = vmax.f32 %v2323, 0.0
    %v2796 = vmax.f32 %v2328, 0.0
    %v2797 = vmax.f32 %v2331, 0.0
    %v2798 = vmax.f32 %v2336, 0.0
    %v2799 = vmax.f32 %v2339, 0.0
    %v2800 = vmax.f32 %v2344, 0.0
    %v2801 = vmax.f32 %v2347, 0.0
    %v2802 = vmax.f32 %v2352, 0.0
    %v2803 = vmax.f32 %v2355, 0.0
    %v2804 = vmax.f32 %v2360, 0.0
    %v2805 = vmax.f32 %v2363, 0.0
    %v2806 = vmax.f32 %v2368, 0.0
    %v2807 = vmax.f32 %v2371, 0.0
    %v2808 = vmax.f32 %v2376, 0.0
    %v2809 = vmax.f32 %v2379, 0.0
    %v2810 = vmax.f32 %v2384, 0.0
    %v2811 = vmax.f32 %v2387, 0.0
    %v2812 = vmax.f32 %v2392, 0.0
    %v2813 = vmax.f32 %v2395, 0.0
    %v2814 = vmax.f32 %v2400, 0.0
    %v2815 = vmax.f32 %v2403, 0.0
    %v2816 = vmax.f32 %v2408, 0.0
    %v2817 = vmax.f32 %v2411, 0.0
    %v2818 = vmax.f32 %v2416, 0.0
    %v2819 = vmax.f32 %v2419, 0.0
    %v2820 = vmax.f32 %v2424, 0.0
    %v2821 = vmax.f32 %v2427, 0.0
    %v2822 = vmax.f32 %v2432, 0.0
    %v2823 = vmax.f32 %v2435, 0.0
    %v2824 = vmax.f32 %v2440, 0.0
    %v2825 = vmax.f32 %v2443, 0.0
    %v2826 = vmax.f32 %v2448, 0.0
    %v2827 = vmax.f32 %v2451, 0.0
    %v2828 = vmax.f32 %v2456, 0.0
    %v2829 = vmax.f32 %v2459, 0.0
    %v2830 = vmax.f32 %v2464, 0.0
    %v2831 = vmax.f32 %v2467, 0.0
    %v2832 = vmax.f32 %v2472, 0.0
    %v2833 = vmax.f32 %v2475, 0.0
    %v2834 = vmax.f32 %v2480, 0.0
    %v2835 = vmax.f32 %v2483, 0.0
    %v2836 = vmax.f32 %v2488, 0.0
    %v2837 = vmax.f32 %v2491, 0.0
    %v2838 = vmax.f32 %v2496, 0.0
    %v2839 = vmax.f32 %v2499, 0.0
    %v2840 = vmax.f32 %v2504, 0.0
    %v2841 = vmax.f32 %v2507, 0.0
    %v2842 = vmax.f32 %v2512, 0.0
    %v2843 = vmax.f32 %v2515, 0.0
    %v2844 = vmax.f32 %v2520, 0.0
    %v2845 = vmax.f32 %v2523, 0.0
    %v2846 = vmax.f32 %v2528, 0.0
    %v2847 = vmax.f32 %v2531, 0.0
    %v2848 = vmax.f32 %v2536, 0.0
    %v2849 = vmax.f32 %v2539, 0.0
    %v2850 = vmax.f32 %v2544, 0.0
    %v2851 = vmax.f32 %v2547, 0.0
    %v2852 = vmax.f32 %v2552, 0.0
    %v2853 = vmax.f32 %v2555, 0.0
    %v2854 = vmax.f32 %v2560, 0.0
    %v2855 = vmax.f32 %v2563, 0.0
    %v2856 = vmax.f32 %v2568, 0.0
    %v2857 = vmax.f32 %v2571, 0.0
    %v2858 = vmax.f32 %v2576, 0.0
    %v2859 = vmax.f32 %v2579, 0.0
    %v2860 = vmax.f32 %v2584, 0.0
    %v2861 = vmax.f32 %v2587, 0.0
    %v2862 = vmax.f32 %v2592, 0.0
    %v2863 = vmax.f32 %v2595, 0.0
    %v2864 = vmax.f32 %v2600, 0.0
    %v2865 = vmax.f32 %v2603, 0.0
    %v2866 = vmax.f32 %v2608, 0.0
    %v2867 = vmax.f32 %v2611, 0.0
    %v2868 = vmax.f32 %v2616, 0.0
    %v2869 = vmax.f32 %v2619, 0.0
    %v2870 = vmax.f32 %v2624, 0.0
    %v2871 = vmax.f32 %v2627, 0.0
    %v2872 = vmax.f32 %v2632, 0.0
    %v2873 = vmax.f32 %v2635, 0.0
    %v2874 = vmax.f32 %v2640, 0.0
    %v2875 = vmax.f32 %v2643, 0.0
    %v2876 = vmax.f32 %v2648, 0.0
    %v2877 = vmax.f32 %v2651, 0.0
    %v2878 = vmax.f32 %v2656, 0.0
    %v2879 = vmax.f32 %v2659, 0.0
    %v2880 = vmax.f32 %v2664, 0.0
    %v2881 = vmax.f32 %v2667, 0.0
    %v2882 = vmax.f32 %v2672, 0.0
    %v2883 = vmax.f32 %v2675, 0.0
    %v2884 = vmax.f32 %v2680, 0.0
    %v2885 = vmax.f32 %v2683, 0.0
    %v2886 = vmax.f32 %v2688, 0.0
    %v2887 = vmax.f32 %v2691, 0.0
    %v2888 = vmax.f32 %v2696, 0.0
    %v2889 = vmax.f32 %v2699, 0.0
    %v2890 = vmax.f32 %v2704, 0.0
    %v2891 = vmax.f32 %v2707, 0.0
    %v2892 = vmax.f32 %v2712, 0.0
    %v2893 = vmax.f32 %v2715, 0.0
    %v2894 = vmax.f32 %v2720, 0.0
    %v2895 = vmax.f32 %v2723, 0.0
    %v2896 = vmax.f32 %v2728, 0.0
    %v2897 = vmax.f32 %v2731, 0.0
    %v2898 = vmax.f32 %v2736, 0.0
    %v2899 = vmax.f32 %v2739, 0.0
    %v2900 = vmax.f32 %v2744, 0.0
    %v2901 = vmax.f32 %v2747, 0.0
    %v2902 = vmax.f32 %v2752, 0.0
    %v2903 = vmax.f32 %v2755, 0.0
    %v2904 = vmax.f32 %v2760, 0.0
    %v2905 = vmax.f32 %v2763, 0.0
    %v2906 = vmax.f32 %v2768, 0.0
    %v2907 = vmax.f32 %v2771, 0.0
    %v2908 = vmax.f32 %v2776, 0.0
    %v2909 = vmax.f32 %v2779, 0.0
    %v2910 = vld [vmem:[%s7] sm:$0x1]
    %v2912 = vlaneseq
    %v2913 = vshrl.u32 %v2912, 7
    %v2914 = vsub.s32 0, %v2913
    %v2915 = vrot.slane %v2910, %v2914
    %v2917 = vmul.f32 %v2782, %v2915
    %v2918 = vmul.f32 %v2783, %v2915
    %v2919 = vmul.f32 %v2784, %v2915
    %v2920 = vmul.f32 %v2785, %v2915
    %v2921 = vmul.f32 %v2786, %v2915
    %v2922 = vmul.f32 %v2787, %v2915
    %v2923 = vmul.f32 %v2788, %v2915
    %v2924 = vmul.f32 %v2789, %v2915
    %v2925 = vmul.f32 %v2790, %v2915
    %v2926 = vmul.f32 %v2791, %v2915
    %v2927 = vmul.f32 %v2792, %v2915
    %v2928 = vmul.f32 %v2793, %v2915
    %v2929 = vmul.f32 %v2794, %v2915
    %v2930 = vmul.f32 %v2795, %v2915
    %v2931 = vmul.f32 %v2796, %v2915
    %v2932 = vmul.f32 %v2797, %v2915
    %v2933 = vmul.f32 %v2798, %v2915
    %v2934 = vmul.f32 %v2799, %v2915
    %v2935 = vmul.f32 %v2800, %v2915
    %v2936 = vmul.f32 %v2801, %v2915
    %v2937 = vmul.f32 %v2802, %v2915
    %v2938 = vmul.f32 %v2803, %v2915
    %v2939 = vmul.f32 %v2804, %v2915
    %v2940 = vmul.f32 %v2805, %v2915
    %v2941 = vmul.f32 %v2806, %v2915
    %v2942 = vmul.f32 %v2807, %v2915
    %v2943 = vmul.f32 %v2808, %v2915
    %v2944 = vmul.f32 %v2809, %v2915
    %v2945 = vmul.f32 %v2810, %v2915
    %v2946 = vmul.f32 %v2811, %v2915
    %v2947 = vmul.f32 %v2812, %v2915
    %v2948 = vmul.f32 %v2813, %v2915
    %v2949 = vmul.f32 %v2814, %v2915
    %v2950 = vmul.f32 %v2815, %v2915
    %v2951 = vmul.f32 %v2816, %v2915
    %v2952 = vmul.f32 %v2817, %v2915
    %v2953 = vmul.f32 %v2818, %v2915
    %v2954 = vmul.f32 %v2819, %v2915
    %v2955 = vmul.f32 %v2820, %v2915
    %v2956 = vmul.f32 %v2821, %v2915
    %v2957 = vmul.f32 %v2822, %v2915
    %v2958 = vmul.f32 %v2823, %v2915
    %v2959 = vmul.f32 %v2824, %v2915
    %v2960 = vmul.f32 %v2825, %v2915
    %v2961 = vmul.f32 %v2826, %v2915
    %v2962 = vmul.f32 %v2827, %v2915
    %v2963 = vmul.f32 %v2828, %v2915
    %v2964 = vmul.f32 %v2829, %v2915
    %v2965 = vmul.f32 %v2830, %v2915
    %v2966 = vmul.f32 %v2831, %v2915
    %v2967 = vmul.f32 %v2832, %v2915
    %v2968 = vmul.f32 %v2833, %v2915
    %v2969 = vmul.f32 %v2834, %v2915
    %v2970 = vmul.f32 %v2835, %v2915
    %v2971 = vmul.f32 %v2836, %v2915
    %v2972 = vmul.f32 %v2837, %v2915
    %v2973 = vmul.f32 %v2838, %v2915
    %v2974 = vmul.f32 %v2839, %v2915
    %v2975 = vmul.f32 %v2840, %v2915
    %v2976 = vmul.f32 %v2841, %v2915
    %v2977 = vmul.f32 %v2842, %v2915
    %v2978 = vmul.f32 %v2843, %v2915
    %v2979 = vmul.f32 %v2844, %v2915
    %v2980 = vmul.f32 %v2845, %v2915
    %v2981 = vmul.f32 %v2846, %v2915
    %v2982 = vmul.f32 %v2847, %v2915
    %v2983 = vmul.f32 %v2848, %v2915
    %v2984 = vmul.f32 %v2849, %v2915
    %v2985 = vmul.f32 %v2850, %v2915
    %v2986 = vmul.f32 %v2851, %v2915
    %v2987 = vmul.f32 %v2852, %v2915
    %v2988 = vmul.f32 %v2853, %v2915
    %v2989 = vmul.f32 %v2854, %v2915
    %v2990 = vmul.f32 %v2855, %v2915
    %v2991 = vmul.f32 %v2856, %v2915
    %v2992 = vmul.f32 %v2857, %v2915
    %v2993 = vmul.f32 %v2858, %v2915
    %v2994 = vmul.f32 %v2859, %v2915
    %v2995 = vmul.f32 %v2860, %v2915
    %v2996 = vmul.f32 %v2861, %v2915
    %v2997 = vmul.f32 %v2862, %v2915
    %v2998 = vmul.f32 %v2863, %v2915
    %v2999 = vmul.f32 %v2864, %v2915
    %v3000 = vmul.f32 %v2865, %v2915
    %v3001 = vmul.f32 %v2866, %v2915
    %v3002 = vmul.f32 %v2867, %v2915
    %v3003 = vmul.f32 %v2868, %v2915
    %v3004 = vmul.f32 %v2869, %v2915
    %v3005 = vmul.f32 %v2870, %v2915
    %v3006 = vmul.f32 %v2871, %v2915
    %v3007 = vmul.f32 %v2872, %v2915
    %v3008 = vmul.f32 %v2873, %v2915
    %v3009 = vmul.f32 %v2874, %v2915
    %v3010 = vmul.f32 %v2875, %v2915
    %v3011 = vmul.f32 %v2876, %v2915
    %v3012 = vmul.f32 %v2877, %v2915
    %v3013 = vmul.f32 %v2878, %v2915
    %v3014 = vmul.f32 %v2879, %v2915
    %v3015 = vmul.f32 %v2880, %v2915
    %v3016 = vmul.f32 %v2881, %v2915
    %v3017 = vmul.f32 %v2882, %v2915
    %v3018 = vmul.f32 %v2883, %v2915
    %v3019 = vmul.f32 %v2884, %v2915
    %v3020 = vmul.f32 %v2885, %v2915
    %v3021 = vmul.f32 %v2886, %v2915
    %v3022 = vmul.f32 %v2887, %v2915
    %v3023 = vmul.f32 %v2888, %v2915
    %v3024 = vmul.f32 %v2889, %v2915
    %v3025 = vmul.f32 %v2890, %v2915
    %v3026 = vmul.f32 %v2891, %v2915
    %v3027 = vmul.f32 %v2892, %v2915
    %v3028 = vmul.f32 %v2893, %v2915
    %v3029 = vmul.f32 %v2894, %v2915
    %v3030 = vmul.f32 %v2895, %v2915
    %v3031 = vmul.f32 %v2896, %v2915
    %v3032 = vmul.f32 %v2897, %v2915
    %v3033 = vmul.f32 %v2898, %v2915
    %v3034 = vmul.f32 %v2899, %v2915
    %v3035 = vmul.f32 %v2900, %v2915
    %v3036 = vmul.f32 %v2901, %v2915
    %v3037 = vmul.f32 %v2902, %v2915
    %v3038 = vmul.f32 %v2903, %v2915
    %v3039 = vmul.f32 %v2904, %v2915
    %v3040 = vmul.f32 %v2905, %v2915
    %v3041 = vmul.f32 %v2906, %v2915
    %v3042 = vmul.f32 %v2907, %v2915
    %v3043 = vmul.f32 %v2908, %v2915
    %v3044 = vmul.f32 %v2909, %v2915
    %vm3045 = vcmask 261120
    %v3046 = vsel %vm3045, %v2917, 0.0
    %3047 = vadd.xlane.f32.xlu0 %v3046
    %v3048 = vpop.xlane.xlu0 %3047
    %v3049 = vsel %vm3045, %v2918, 0.0
    %3050 = vadd.xlane.f32.xlu0 %v3049
    %v3051 = vpop.xlane.xlu0 %3050
    %v3052 = vsel %vm3045, %v2919, 0.0
    %3053 = vadd.xlane.f32.xlu0 %v3052
    %v3054 = vpop.xlane.xlu0 %3053
    %v3055 = vsel %vm3045, %v2920, 0.0
    %3056 = vadd.xlane.f32.xlu0 %v3055
    %v3057 = vpop.xlane.xlu0 %3056
    %v3058 = vsel %vm3045, %v2921, 0.0
    %3059 = vadd.xlane.f32.xlu0 %v3058
    %v3060 = vpop.xlane.xlu0 %3059
    %v3061 = vsel %vm3045, %v2922, 0.0
    %3062 = vadd.xlane.f32.xlu0 %v3061
    %v3063 = vpop.xlane.xlu0 %3062
    %v3064 = vsel %vm3045, %v2923, 0.0
    %3065 = vadd.xlane.f32.xlu0 %v3064
    %v3066 = vpop.xlane.xlu0 %3065
    %v3067 = vsel %vm3045, %v2924, 0.0
    %3068 = vadd.xlane.f32.xlu0 %v3067
    %v3069 = vpop.xlane.xlu0 %3068
    %v3070 = vsel %vm3045, %v2925, 0.0
    %3071 = vadd.xlane.f32.xlu0 %v3070
    %v3072 = vpop.xlane.xlu0 %3071
    %v3073 = vsel %vm3045, %v2926, 0.0
    %3074 = vadd.xlane.f32.xlu0 %v3073
    %v3075 = vpop.xlane.xlu0 %3074
    %v3076 = vsel %vm3045, %v2927, 0.0
    %3077 = vadd.xlane.f32.xlu0 %v3076
    %v3078 = vpop.xlane.xlu0 %3077
    %v3079 = vsel %vm3045, %v2928, 0.0
    %3080 = vadd.xlane.f32.xlu0 %v3079
    %v3081 = vpop.xlane.xlu0 %3080
    %v3082 = vsel %vm3045, %v2929, 0.0
    %3083 = vadd.xlane.f32.xlu0 %v3082
    %v3084 = vpop.xlane.xlu0 %3083
    %v3085 = vsel %vm3045, %v2930, 0.0
    %3086 = vadd.xlane.f32.xlu0 %v3085
    %v3087 = vpop.xlane.xlu0 %3086
    %v3088 = vsel %vm3045, %v2931, 0.0
    %3089 = vadd.xlane.f32.xlu0 %v3088
    %v3090 = vpop.xlane.xlu0 %3089
    %v3091 = vsel %vm3045, %v2932, 0.0
    %3092 = vadd.xlane.f32.xlu0 %v3091
    %v3093 = vpop.xlane.xlu0 %3092
    %v3094 = vsel %vm3045, %v2933, 0.0
    %3095 = vadd.xlane.f32.xlu0 %v3094
    %v3096 = vpop.xlane.xlu0 %3095
    %v3097 = vsel %vm3045, %v2934, 0.0
    %3098 = vadd.xlane.f32.xlu0 %v3097
    %v3099 = vpop.xlane.xlu0 %3098
    %v3100 = vsel %vm3045, %v2935, 0.0
    %3101 = vadd.xlane.f32.xlu0 %v3100
    %v3102 = vpop.xlane.xlu0 %3101
    %v3103 = vsel %vm3045, %v2936, 0.0
    %3104 = vadd.xlane.f32.xlu0 %v3103
    %v3105 = vpop.xlane.xlu0 %3104
    %v3106 = vsel %vm3045, %v2937, 0.0
    %3107 = vadd.xlane.f32.xlu0 %v3106
    %v3108 = vpop.xlane.xlu0 %3107
    %v3109 = vsel %vm3045, %v2938, 0.0
    %3110 = vadd.xlane.f32.xlu0 %v3109
    %v3111 = vpop.xlane.xlu0 %3110
    %v3112 = vsel %vm3045, %v2939, 0.0
    %3113 = vadd.xlane.f32.xlu0 %v3112
    %v3114 = vpop.xlane.xlu0 %3113
    %v3115 = vsel %vm3045, %v2940, 0.0
    %3116 = vadd.xlane.f32.xlu0 %v3115
    %v3117 = vpop.xlane.xlu0 %3116
    %v3118 = vsel %vm3045, %v2941, 0.0
    %3119 = vadd.xlane.f32.xlu0 %v3118
    %v3120 = vpop.xlane.xlu0 %3119
    %v3121 = vsel %vm3045, %v2942, 0.0
    %3122 = vadd.xlane.f32.xlu0 %v3121
    %v3123 = vpop.xlane.xlu0 %3122
    %v3124 = vsel %vm3045, %v2943, 0.0
    %3125 = vadd.xlane.f32.xlu0 %v3124
    %v3126 = vpop.xlane.xlu0 %3125
    %v3127 = vsel %vm3045, %v2944, 0.0
    %3128 = vadd.xlane.f32.xlu0 %v3127
    %v3129 = vpop.xlane.xlu0 %3128
    %v3130 = vsel %vm3045, %v2945, 0.0
    %3131 = vadd.xlane.f32.xlu0 %v3130
    %v3132 = vpop.xlane.xlu0 %3131
    %v3133 = vsel %vm3045, %v2946, 0.0
    %3134 = vadd.xlane.f32.xlu0 %v3133
    %v3135 = vpop.xlane.xlu0 %3134
    %v3136 = vsel %vm3045, %v2947, 0.0
    %3137 = vadd.xlane.f32.xlu0 %v3136
    %v3138 = vpop.xlane.xlu0 %3137
    %v3139 = vsel %vm3045, %v2948, 0.0
    %3140 = vadd.xlane.f32.xlu0 %v3139
    %v3141 = vpop.xlane.xlu0 %3140
    %v3142 = vsel %vm3045, %v2949, 0.0
    %3143 = vadd.xlane.f32.xlu0 %v3142
    %v3144 = vpop.xlane.xlu0 %3143
    %v3145 = vsel %vm3045, %v2950, 0.0
    %3146 = vadd.xlane.f32.xlu0 %v3145
    %v3147 = vpop.xlane.xlu0 %3146
    %v3148 = vsel %vm3045, %v2951, 0.0
    %3149 = vadd.xlane.f32.xlu0 %v3148
    %v3150 = vpop.xlane.xlu0 %3149
    %v3151 = vsel %vm3045, %v2952, 0.0
    %3152 = vadd.xlane.f32.xlu0 %v3151
    %v3153 = vpop.xlane.xlu0 %3152
    %v3154 = vsel %vm3045, %v2953, 0.0
    %3155 = vadd.xlane.f32.xlu0 %v3154
    %v3156 = vpop.xlane.xlu0 %3155
    %v3157 = vsel %vm3045, %v2954, 0.0
    %3158 = vadd.xlane.f32.xlu0 %v3157
    %v3159 = vpop.xlane.xlu0 %3158
    %v3160 = vsel %vm3045, %v2955, 0.0
    %3161 = vadd.xlane.f32.xlu0 %v3160
    %v3162 = vpop.xlane.xlu0 %3161
    %v3163 = vsel %vm3045, %v2956, 0.0
    %3164 = vadd.xlane.f32.xlu0 %v3163
    %v3165 = vpop.xlane.xlu0 %3164
    %v3166 = vsel %vm3045, %v2957, 0.0
    %3167 = vadd.xlane.f32.xlu0 %v3166
    %v3168 = vpop.xlane.xlu0 %3167
    %v3169 = vsel %vm3045, %v2958, 0.0
    %3170 = vadd.xlane.f32.xlu0 %v3169
    %v3171 = vpop.xlane.xlu0 %3170
    %v3172 = vsel %vm3045, %v2959, 0.0
    %3173 = vadd.xlane.f32.xlu0 %v3172
    %v3174 = vpop.xlane.xlu0 %3173
    %v3175 = vsel %vm3045, %v2960, 0.0
    %3176 = vadd.xlane.f32.xlu0 %v3175
    %v3177 = vpop.xlane.xlu0 %3176
    %v3178 = vsel %vm3045, %v2961, 0.0
    %3179 = vadd.xlane.f32.xlu0 %v3178
    %v3180 = vpop.xlane.xlu0 %3179
    %v3181 = vsel %vm3045, %v2962, 0.0
    %3182 = vadd.xlane.f32.xlu0 %v3181
    %v3183 = vpop.xlane.xlu0 %3182
    %v3184 = vsel %vm3045, %v2963, 0.0
    %3185 = vadd.xlane.f32.xlu0 %v3184
    %v3186 = vpop.xlane.xlu0 %3185
    %v3187 = vsel %vm3045, %v2964, 0.0
    %3188 = vadd.xlane.f32.xlu0 %v3187
    %v3189 = vpop.xlane.xlu0 %3188
    %v3190 = vsel %vm3045, %v2965, 0.0
    %3191 = vadd.xlane.f32.xlu0 %v3190
    %v3192 = vpop.xlane.xlu0 %3191
    %v3193 = vsel %vm3045, %v2966, 0.0
    %3194 = vadd.xlane.f32.xlu0 %v3193
    %v3195 = vpop.xlane.xlu0 %3194
    %v3196 = vsel %vm3045, %v2967, 0.0
    %3197 = vadd.xlane.f32.xlu0 %v3196
    %v3198 = vpop.xlane.xlu0 %3197
    %v3199 = vsel %vm3045, %v2968, 0.0
    %3200 = vadd.xlane.f32.xlu0 %v3199
    %v3201 = vpop.xlane.xlu0 %3200
    %v3202 = vsel %vm3045, %v2969, 0.0
    %3203 = vadd.xlane.f32.xlu0 %v3202
    %v3204 = vpop.xlane.xlu0 %3203
    %v3205 = vsel %vm3045, %v2970, 0.0
    %3206 = vadd.xlane.f32.xlu0 %v3205
    %v3207 = vpop.xlane.xlu0 %3206
    %v3208 = vsel %vm3045, %v2971, 0.0
    %3209 = vadd.xlane.f32.xlu0 %v3208
    %v3210 = vpop.xlane.xlu0 %3209
    %v3211 = vsel %vm3045, %v2972, 0.0
    %3212 = vadd.xlane.f32.xlu0 %v3211
    %v3213 = vpop.xlane.xlu0 %3212
    %v3214 = vsel %vm3045, %v2973, 0.0
    %3215 = vadd.xlane.f32.xlu0 %v3214
    %v3216 = vpop.xlane.xlu0 %3215
    %v3217 = vsel %vm3045, %v2974, 0.0
    %3218 = vadd.xlane.f32.xlu0 %v3217
    %v3219 = vpop.xlane.xlu0 %3218
    %v3220 = vsel %vm3045, %v2975, 0.0
    %3221 = vadd.xlane.f32.xlu0 %v3220
    %v3222 = vpop.xlane.xlu0 %3221
    %v3223 = vsel %vm3045, %v2976, 0.0
    %3224 = vadd.xlane.f32.xlu0 %v3223
    %v3225 = vpop.xlane.xlu0 %3224
    %v3226 = vsel %vm3045, %v2977, 0.0
    %3227 = vadd.xlane.f32.xlu0 %v3226
    %v3228 = vpop.xlane.xlu0 %3227
    %v3229 = vsel %vm3045, %v2978, 0.0
    %3230 = vadd.xlane.f32.xlu0 %v3229
    %v3231 = vpop.xlane.xlu0 %3230
    %v3232 = vsel %vm3045, %v2979, 0.0
    %3233 = vadd.xlane.f32.xlu0 %v3232
    %v3234 = vpop.xlane.xlu0 %3233
    %v3235 = vsel %vm3045, %v2980, 0.0
    %3236 = vadd.xlane.f32.xlu0 %v3235
    %v3237 = vpop.xlane.xlu0 %3236
    %v3238 = vsel %vm3045, %v2981, 0.0
    %3239 = vadd.xlane.f32.xlu0 %v3238
    %v3240 = vpop.xlane.xlu0 %3239
    %v3241 = vsel %vm3045, %v2982, 0.0
    %3242 = vadd.xlane.f32.xlu0 %v3241
    %v3243 = vpop.xlane.xlu0 %3242
    %v3244 = vsel %vm3045, %v2983, 0.0
    %3245 = vadd.xlane.f32.xlu0 %v3244
    %v3246 = vpop.xlane.xlu0 %3245
    %v3247 = vsel %vm3045, %v2984, 0.0
    %3248 = vadd.xlane.f32.xlu0 %v3247
    %v3249 = vpop.xlane.xlu0 %3248
    %v3250 = vsel %vm3045, %v2985, 0.0
    %3251 = vadd.xlane.f32.xlu0 %v3250
    %v3252 = vpop.xlane.xlu0 %3251
    %v3253 = vsel %vm3045, %v2986, 0.0
    %3254 = vadd.xlane.f32.xlu0 %v3253
    %v3255 = vpop.xlane.xlu0 %3254
    %v3256 = vsel %vm3045, %v2987, 0.0
    %3257 = vadd.xlane.f32.xlu0 %v3256
    %v3258 = vpop.xlane.xlu0 %3257
    %v3259 = vsel %vm3045, %v2988, 0.0
    %3260 = vadd.xlane.f32.xlu0 %v3259
    %v3261 = vpop.xlane.xlu0 %3260
    %v3262 = vsel %vm3045, %v2989, 0.0
    %3263 = vadd.xlane.f32.xlu0 %v3262
    %v3264 = vpop.xlane.xlu0 %3263
    %v3265 = vsel %vm3045, %v2990, 0.0
    %3266 = vadd.xlane.f32.xlu0 %v3265
    %v3267 = vpop.xlane.xlu0 %3266
    %v3268 = vsel %vm3045, %v2991, 0.0
    %3269 = vadd.xlane.f32.xlu0 %v3268
    %v3270 = vpop.xlane.xlu0 %3269
    %v3271 = vsel %vm3045, %v2992, 0.0
    %3272 = vadd.xlane.f32.xlu0 %v3271
    %v3273 = vpop.xlane.xlu0 %3272
    %v3274 = vsel %vm3045, %v2993, 0.0
    %3275 = vadd.xlane.f32.xlu0 %v3274
    %v3276 = vpop.xlane.xlu0 %3275
    %v3277 = vsel %vm3045, %v2994, 0.0
    %3278 = vadd.xlane.f32.xlu0 %v3277
    %v3279 = vpop.xlane.xlu0 %3278
    %v3280 = vsel %vm3045, %v2995, 0.0
    %3281 = vadd.xlane.f32.xlu0 %v3280
    %v3282 = vpop.xlane.xlu0 %3281
    %v3283 = vsel %vm3045, %v2996, 0.0
    %3284 = vadd.xlane.f32.xlu0 %v3283
    %v3285 = vpop.xlane.xlu0 %3284
    %v3286 = vsel %vm3045, %v2997, 0.0
    %3287 = vadd.xlane.f32.xlu0 %v3286
    %v3288 = vpop.xlane.xlu0 %3287
    %v3289 = vsel %vm3045, %v2998, 0.0
    %3290 = vadd.xlane.f32.xlu0 %v3289
    %v3291 = vpop.xlane.xlu0 %3290
    %v3292 = vsel %vm3045, %v2999, 0.0
    %3293 = vadd.xlane.f32.xlu0 %v3292
    %v3294 = vpop.xlane.xlu0 %3293
    %v3295 = vsel %vm3045, %v3000, 0.0
    %3296 = vadd.xlane.f32.xlu0 %v3295
    %v3297 = vpop.xlane.xlu0 %3296
    %v3298 = vsel %vm3045, %v3001, 0.0
    %3299 = vadd.xlane.f32.xlu0 %v3298
    %v3300 = vpop.xlane.xlu0 %3299
    %v3301 = vsel %vm3045, %v3002, 0.0
    %3302 = vadd.xlane.f32.xlu0 %v3301
    %v3303 = vpop.xlane.xlu0 %3302
    %v3304 = vsel %vm3045, %v3003, 0.0
    %3305 = vadd.xlane.f32.xlu0 %v3304
    %v3306 = vpop.xlane.xlu0 %3305
    %v3307 = vsel %vm3045, %v3004, 0.0
    %3308 = vadd.xlane.f32.xlu0 %v3307
    %v3309 = vpop.xlane.xlu0 %3308
    %v3310 = vsel %vm3045, %v3005, 0.0
    %3311 = vadd.xlane.f32.xlu0 %v3310
    %v3312 = vpop.xlane.xlu0 %3311
    %v3313 = vsel %vm3045, %v3006, 0.0
    %3314 = vadd.xlane.f32.xlu0 %v3313
    %v3315 = vpop.xlane.xlu0 %3314
    %v3316 = vsel %vm3045, %v3007, 0.0
    %3317 = vadd.xlane.f32.xlu0 %v3316
    %v3318 = vpop.xlane.xlu0 %3317
    %v3319 = vsel %vm3045, %v3008, 0.0
    %3320 = vadd.xlane.f32.xlu0 %v3319
    %v3321 = vpop.xlane.xlu0 %3320
    %v3322 = vsel %vm3045, %v3009, 0.0
    %3323 = vadd.xlane.f32.xlu0 %v3322
    %v3324 = vpop.xlane.xlu0 %3323
    %v3325 = vsel %vm3045, %v3010, 0.0
    %3326 = vadd.xlane.f32.xlu0 %v3325
    %v3327 = vpop.xlane.xlu0 %3326
    %v3328 = vsel %vm3045, %v3011, 0.0
    %3329 = vadd.xlane.f32.xlu0 %v3328
    %v3330 = vpop.xlane.xlu0 %3329
    %v3331 = vsel %vm3045, %v3012, 0.0
    %3332 = vadd.xlane.f32.xlu0 %v3331
    %v3333 = vpop.xlane.xlu0 %3332
    %v3334 = vsel %vm3045, %v3013, 0.0
    %3335 = vadd.xlane.f32.xlu0 %v3334
    %v3336 = vpop.xlane.xlu0 %3335
    %v3337 = vsel %vm3045, %v3014, 0.0
    %3338 = vadd.xlane.f32.xlu0 %v3337
    %v3339 = vpop.xlane.xlu0 %3338
    %v3340 = vsel %vm3045, %v3015, 0.0
    %3341 = vadd.xlane.f32.xlu0 %v3340
    %v3342 = vpop.xlane.xlu0 %3341
    %v3343 = vsel %vm3045, %v3016, 0.0
    %3344 = vadd.xlane.f32.xlu0 %v3343
    %v3345 = vpop.xlane.xlu0 %3344
    %v3346 = vsel %vm3045, %v3017, 0.0
    %3347 = vadd.xlane.f32.xlu0 %v3346
    %v3348 = vpop.xlane.xlu0 %3347
    %v3349 = vsel %vm3045, %v3018, 0.0
    %3350 = vadd.xlane.f32.xlu0 %v3349
    %v3351 = vpop.xlane.xlu0 %3350
    %v3352 = vsel %vm3045, %v3019, 0.0
    %3353 = vadd.xlane.f32.xlu0 %v3352
    %v3354 = vpop.xlane.xlu0 %3353
    %v3355 = vsel %vm3045, %v3020, 0.0
    %3356 = vadd.xlane.f32.xlu0 %v3355
    %v3357 = vpop.xlane.xlu0 %3356
    %v3358 = vsel %vm3045, %v3021, 0.0
    %3359 = vadd.xlane.f32.xlu0 %v3358
    %v3360 = vpop.xlane.xlu0 %3359
    %v3361 = vsel %vm3045, %v3022, 0.0
    %3362 = vadd.xlane.f32.xlu0 %v3361
    %v3363 = vpop.xlane.xlu0 %3362
    %v3364 = vsel %vm3045, %v3023, 0.0
    %3365 = vadd.xlane.f32.xlu0 %v3364
    %v3366 = vpop.xlane.xlu0 %3365
    %v3367 = vsel %vm3045, %v3024, 0.0
    %3368 = vadd.xlane.f32.xlu0 %v3367
    %v3369 = vpop.xlane.xlu0 %3368
    %v3370 = vsel %vm3045, %v3025, 0.0
    %3371 = vadd.xlane.f32.xlu0 %v3370
    %v3372 = vpop.xlane.xlu0 %3371
    %v3373 = vsel %vm3045, %v3026, 0.0
    %3374 = vadd.xlane.f32.xlu0 %v3373
    %v3375 = vpop.xlane.xlu0 %3374
    %v3376 = vsel %vm3045, %v3027, 0.0
    %3377 = vadd.xlane.f32.xlu0 %v3376
    %v3378 = vpop.xlane.xlu0 %3377
    %v3379 = vsel %vm3045, %v3028, 0.0
    %3380 = vadd.xlane.f32.xlu0 %v3379
    %v3381 = vpop.xlane.xlu0 %3380
    %v3382 = vsel %vm3045, %v3029, 0.0
    %3383 = vadd.xlane.f32.xlu0 %v3382
    %v3384 = vpop.xlane.xlu0 %3383
    %v3385 = vsel %vm3045, %v3030, 0.0
    %3386 = vadd.xlane.f32.xlu0 %v3385
    %v3387 = vpop.xlane.xlu0 %3386
    %v3388 = vsel %vm3045, %v3031, 0.0
    %3389 = vadd.xlane.f32.xlu0 %v3388
    %v3390 = vpop.xlane.xlu0 %3389
    %v3391 = vsel %vm3045, %v3032, 0.0
    %3392 = vadd.xlane.f32.xlu0 %v3391
    %v3393 = vpop.xlane.xlu0 %3392
    %v3394 = vsel %vm3045, %v3033, 0.0
    %3395 = vadd.xlane.f32.xlu0 %v3394
    %v3396 = vpop.xlane.xlu0 %3395
    %v3397 = vsel %vm3045, %v3034, 0.0
    %3398 = vadd.xlane.f32.xlu0 %v3397
    %v3399 = vpop.xlane.xlu0 %3398
    %v3400 = vsel %vm3045, %v3035, 0.0
    %3401 = vadd.xlane.f32.xlu0 %v3400
    %v3402 = vpop.xlane.xlu0 %3401
    %v3403 = vsel %vm3045, %v3036, 0.0
    %3404 = vadd.xlane.f32.xlu0 %v3403
    %v3405 = vpop.xlane.xlu0 %3404
    %v3406 = vsel %vm3045, %v3037, 0.0
    %3407 = vadd.xlane.f32.xlu0 %v3406
    %v3408 = vpop.xlane.xlu0 %3407
    %v3409 = vsel %vm3045, %v3038, 0.0
    %3410 = vadd.xlane.f32.xlu0 %v3409
    %v3411 = vpop.xlane.xlu0 %3410
    %v3412 = vsel %vm3045, %v3039, 0.0
    %3413 = vadd.xlane.f32.xlu0 %v3412
    %v3414 = vpop.xlane.xlu0 %3413
    %v3415 = vsel %vm3045, %v3040, 0.0
    %3416 = vadd.xlane.f32.xlu0 %v3415
    %v3417 = vpop.xlane.xlu0 %3416
    %v3418 = vsel %vm3045, %v3041, 0.0
    %3419 = vadd.xlane.f32.xlu0 %v3418
    %v3420 = vpop.xlane.xlu0 %3419
    %v3421 = vsel %vm3045, %v3042, 0.0
    %3422 = vadd.xlane.f32.xlu0 %v3421
    %v3423 = vpop.xlane.xlu0 %3422
    %v3424 = vsel %vm3045, %v3043, 0.0
    %3425 = vadd.xlane.f32.xlu0 %v3424
    %v3426 = vpop.xlane.xlu0 %3425
    %v3427 = vsel %vm3045, %v3044, 0.0
    %3428 = vadd.xlane.f32.xlu0 %v3427
    %v3429 = vpop.xlane.xlu0 %3428
    %v3430 = vld [vmem:[#allocation2] sm:$0x1]
    %v3432 = vlaneseq
    %v3433 = vshrl.u32 %v3432, 7
    %v3434 = vsub.s32 0, %v3433
    %v3435 = vrot.slane %v3430, %v3434
    %v3437 = vadd.f32 %v3048, %v3435
    %v3438 = vadd.f32 %v3051, %v3435
    %v3439 = vadd.f32 %v3054, %v3435
    %v3440 = vadd.f32 %v3057, %v3435
    %v3441 = vadd.f32 %v3060, %v3435
    %v3442 = vadd.f32 %v3063, %v3435
    %v3443 = vadd.f32 %v3066, %v3435
    %v3444 = vadd.f32 %v3069, %v3435
    %v3445 = vadd.f32 %v3072, %v3435
    %v3446 = vadd.f32 %v3075, %v3435
    %v3447 = vadd.f32 %v3078, %v3435
    %v3448 = vadd.f32 %v3081, %v3435
    %v3449 = vadd.f32 %v3084, %v3435
    %v3450 = vadd.f32 %v3087, %v3435
    %v3451 = vadd.f32 %v3090, %v3435
    %v3452 = vadd.f32 %v3093, %v3435
    %v3453 = vadd.f32 %v3096, %v3435
    %v3454 = vadd.f32 %v3099, %v3435
    %v3455 = vadd.f32 %v3102, %v3435
    %v3456 = vadd.f32 %v3105, %v3435
    %v3457 = vadd.f32 %v3108, %v3435
    %v3458 = vadd.f32 %v3111, %v3435
    %v3459 = vadd.f32 %v3114, %v3435
    %v3460 = vadd.f32 %v3117, %v3435
    %v3461 = vadd.f32 %v3120, %v3435
    %v3462 = vadd.f32 %v3123, %v3435
    %v3463 = vadd.f32 %v3126, %v3435
    %v3464 = vadd.f32 %v3129, %v3435
    %v3465 = vadd.f32 %v3132, %v3435
    %v3466 = vadd.f32 %v3135, %v3435
    %v3467 = vadd.f32 %v3138, %v3435
    %v3468 = vadd.f32 %v3141, %v3435
    %v3469 = vadd.f32 %v3144, %v3435
    %v3470 = vadd.f32 %v3147, %v3435
    %v3471 = vadd.f32 %v3150, %v3435
    %v3472 = vadd.f32 %v3153, %v3435
    %v3473 = vadd.f32 %v3156, %v3435
    %v3474 = vadd.f32 %v3159, %v3435
    %v3475 = vadd.f32 %v3162, %v3435
    %v3476 = vadd.f32 %v3165, %v3435
    %v3477 = vadd.f32 %v3168, %v3435
    %v3478 = vadd.f32 %v3171, %v3435
    %v3479 = vadd.f32 %v3174, %v3435
    %v3480 = vadd.f32 %v3177, %v3435
    %v3481 = vadd.f32 %v3180, %v3435
    %v3482 = vadd.f32 %v3183, %v3435
    %v3483 = vadd.f32 %v3186, %v3435
    %v3484 = vadd.f32 %v3189, %v3435
    %v3485 = vadd.f32 %v3192, %v3435
    %v3486 = vadd.f32 %v3195, %v3435
    %v3487 = vadd.f32 %v3198, %v3435
    %v3488 = vadd.f32 %v3201, %v3435
    %v3489 = vadd.f32 %v3204, %v3435
    %v3490 = vadd.f32 %v3207, %v3435
    %v3491 = vadd.f32 %v3210, %v3435
    %v3492 = vadd.f32 %v3213, %v3435
    %v3493 = vadd.f32 %v3216, %v3435
    %v3494 = vadd.f32 %v3219, %v3435
    %v3495 = vadd.f32 %v3222, %v3435
    %v3496 = vadd.f32 %v3225, %v3435
    %v3497 = vadd.f32 %v3228, %v3435
    %v3498 = vadd.f32 %v3231, %v3435
    %v3499 = vadd.f32 %v3234, %v3435
    %v3500 = vadd.f32 %v3237, %v3435
    %v3501 = vadd.f32 %v3240, %v3435
    %v3502 = vadd.f32 %v3243, %v3435
    %v3503 = vadd.f32 %v3246, %v3435
    %v3504 = vadd.f32 %v3249, %v3435
    %v3505 = vadd.f32 %v3252, %v3435
    %v3506 = vadd.f32 %v3255, %v3435
    %v3507 = vadd.f32 %v3258, %v3435
    %v3508 = vadd.f32 %v3261, %v3435
    %v3509 = vadd.f32 %v3264, %v3435
    %v3510 = vadd.f32 %v3267, %v3435
    %v3511 = vadd.f32 %v3270, %v3435
    %v3512 = vadd.f32 %v3273, %v3435
    %v3513 = vadd.f32 %v3276, %v3435
    %v3514 = vadd.f32 %v3279, %v3435
    %v3515 = vadd.f32 %v3282, %v3435
    %v3516 = vadd.f32 %v3285, %v3435
    %v3517 = vadd.f32 %v3288, %v3435
    %v3518 = vadd.f32 %v3291, %v3435
    %v3519 = vadd.f32 %v3294, %v3435
    %v3520 = vadd.f32 %v3297, %v3435
    %v3521 = vadd.f32 %v3300, %v3435
    %v3522 = vadd.f32 %v3303, %v3435
    %v3523 = vadd.f32 %v3306, %v3435
    %v3524 = vadd.f32 %v3309, %v3435
    %v3525 = vadd.f32 %v3312, %v3435
    %v3526 = vadd.f32 %v3315, %v3435
    %v3527 = vadd.f32 %v3318, %v3435
    %v3528 = vadd.f32 %v3321, %v3435
    %v3529 = vadd.f32 %v3324, %v3435
    %v3530 = vadd.f32 %v3327, %v3435
    %v3531 = vadd.f32 %v3330, %v3435
    %v3532 = vadd.f32 %v3333, %v3435
    %v3533 = vadd.f32 %v3336, %v3435
    %v3534 = vadd.f32 %v3339, %v3435
    %v3535 = vadd.f32 %v3342, %v3435
    %v3536 = vadd.f32 %v3345, %v3435
    %v3537 = vadd.f32 %v3348, %v3435
    %v3538 = vadd.f32 %v3351, %v3435
    %v3539 = vadd.f32 %v3354, %v3435
    %v3540 = vadd.f32 %v3357, %v3435
    %v3541 = vadd.f32 %v3360, %v3435
    %v3542 = vadd.f32 %v3363, %v3435
    %v3543 = vadd.f32 %v3366, %v3435
    %v3544 = vadd.f32 %v3369, %v3435
    %v3545 = vadd.f32 %v3372, %v3435
    %v3546 = vadd.f32 %v3375, %v3435
    %v3547 = vadd.f32 %v3378, %v3435
    %v3548 = vadd.f32 %v3381, %v3435
    %v3549 = vadd.f32 %v3384, %v3435
    %v3550 = vadd.f32 %v3387, %v3435
    %v3551 = vadd.f32 %v3390, %v3435
    %v3552 = vadd.f32 %v3393, %v3435
    %v3553 = vadd.f32 %v3396, %v3435
    %v3554 = vadd.f32 %v3399, %v3435
    %v3555 = vadd.f32 %v3402, %v3435
    %v3556 = vadd.f32 %v3405, %v3435
    %v3557 = vadd.f32 %v3408, %v3435
    %v3558 = vadd.f32 %v3411, %v3435
    %v3559 = vadd.f32 %v3414, %v3435
    %v3560 = vadd.f32 %v3417, %v3435
    %v3561 = vadd.f32 %v3420, %v3435
    %v3562 = vadd.f32 %v3423, %v3435
    %v3563 = vadd.f32 %v3426, %v3435
    %v3564 = vadd.f32 %v3429, %v3435
    %3693 = vset.pattern.permute.xlu0 0
    %3694 = vperm.xlu0 %3693, %v3437
    %v3695 = vpop.permute.xlu0 %3694
    %3696 = vset.pattern.permute.xlu0 0
    %3697 = vperm.xlu0 %3696, %v3438
    %v3698 = vpop.permute.xlu0 %3697
    %3699 = vset.pattern.permute.xlu0 0
    %3700 = vperm.xlu0 %3699, %v3439
    %v3701 = vpop.permute.xlu0 %3700
    %3702 = vset.pattern.permute.xlu0 0
    %3703 = vperm.xlu0 %3702, %v3440
    %v3704 = vpop.permute.xlu0 %3703
    %3705 = vset.pattern.permute.xlu0 0
    %3706 = vperm.xlu0 %3705, %v3441
    %v3707 = vpop.permute.xlu0 %3706
    %3708 = vset.pattern.permute.xlu0 0
    %3709 = vperm.xlu0 %3708, %v3442
    %v3710 = vpop.permute.xlu0 %3709
    %3711 = vset.pattern.permute.xlu0 0
    %3712 = vperm.xlu0 %3711, %v3443
    %v3713 = vpop.permute.xlu0 %3712
    %3714 = vset.pattern.permute.xlu0 0
    %3715 = vperm.xlu0 %3714, %v3444
    %v3716 = vpop.permute.xlu0 %3715
    %3717 = vset.pattern.permute.xlu0 0
    %3718 = vperm.xlu0 %3717, %v3445
    %v3719 = vpop.permute.xlu0 %3718
    %3720 = vset.pattern.permute.xlu0 0
    %3721 = vperm.xlu0 %3720, %v3446
    %v3722 = vpop.permute.xlu0 %3721
    %3723 = vset.pattern.permute.xlu0 0
    %3724 = vperm.xlu0 %3723, %v3447
    %v3725 = vpop.permute.xlu0 %3724
    %3726 = vset.pattern.permute.xlu0 0
    %3727 = vperm.xlu0 %3726, %v3448
    %v3728 = vpop.permute.xlu0 %3727
    %3729 = vset.pattern.permute.xlu0 0
    %3730 = vperm.xlu0 %3729, %v3449
    %v3731 = vpop.permute.xlu0 %3730
    %3732 = vset.pattern.permute.xlu0 0
    %3733 = vperm.xlu0 %3732, %v3450
    %v3734 = vpop.permute.xlu0 %3733
    %3735 = vset.pattern.permute.xlu0 0
    %3736 = vperm.xlu0 %3735, %v3451
    %v3737 = vpop.permute.xlu0 %3736
    %3738 = vset.pattern.permute.xlu0 0
    %3739 = vperm.xlu0 %3738, %v3452
    %v3740 = vpop.permute.xlu0 %3739
    %3741 = vset.pattern.permute.xlu0 0
    %3742 = vperm.xlu0 %3741, %v3453
    %v3743 = vpop.permute.xlu0 %3742
    %3744 = vset.pattern.permute.xlu0 0
    %3745 = vperm.xlu0 %3744, %v3454
    %v3746 = vpop.permute.xlu0 %3745
    %3747 = vset.pattern.permute.xlu0 0
    %3748 = vperm.xlu0 %3747, %v3455
    %v3749 = vpop.permute.xlu0 %3748
    %3750 = vset.pattern.permute.xlu0 0
    %3751 = vperm.xlu0 %3750, %v3456
    %v3752 = vpop.permute.xlu0 %3751
    %3753 = vset.pattern.permute.xlu0 0
    %3754 = vperm.xlu0 %3753, %v3457
    %v3755 = vpop.permute.xlu0 %3754
    %3756 = vset.pattern.permute.xlu0 0
    %3757 = vperm.xlu0 %3756, %v3458
    %v3758 = vpop.permute.xlu0 %3757
    %3759 = vset.pattern.permute.xlu0 0
    %3760 = vperm.xlu0 %3759, %v3459
    %v3761 = vpop.permute.xlu0 %3760
    %3762 = vset.pattern.permute.xlu0 0
    %3763 = vperm.xlu0 %3762, %v3460
    %v3764 = vpop.permute.xlu0 %3763
    %3765 = vset.pattern.permute.xlu0 0
    %3766 = vperm.xlu0 %3765, %v3461
    %v3767 = vpop.permute.xlu0 %3766
    %3768 = vset.pattern.permute.xlu0 0
    %3769 = vperm.xlu0 %3768, %v3462
    %v3770 = vpop.permute.xlu0 %3769
    %3771 = vset.pattern.permute.xlu0 0
    %3772 = vperm.xlu0 %3771, %v3463
    %v3773 = vpop.permute.xlu0 %3772
    %3774 = vset.pattern.permute.xlu0 0
    %3775 = vperm.xlu0 %3774, %v3464
    %v3776 = vpop.permute.xlu0 %3775
    %3777 = vset.pattern.permute.xlu0 0
    %3778 = vperm.xlu0 %3777, %v3465
    %v3779 = vpop.permute.xlu0 %3778
    %3780 = vset.pattern.permute.xlu0 0
    %3781 = vperm.xlu0 %3780, %v3466
    %v3782 = vpop.permute.xlu0 %3781
    %3783 = vset.pattern.permute.xlu0 0
    %3784 = vperm.xlu0 %3783, %v3467
    %v3785 = vpop.permute.xlu0 %3784
    %3786 = vset.pattern.permute.xlu0 0
    %3787 = vperm.xlu0 %3786, %v3468
    %v3788 = vpop.permute.xlu0 %3787
    %3789 = vset.pattern.permute.xlu0 0
    %3790 = vperm.xlu0 %3789, %v3469
    %v3791 = vpop.permute.xlu0 %3790
    %3792 = vset.pattern.permute.xlu0 0
    %3793 = vperm.xlu0 %3792, %v3470
    %v3794 = vpop.permute.xlu0 %3793
    %3795 = vset.pattern.permute.xlu0 0
    %3796 = vperm.xlu0 %3795, %v3471
    %v3797 = vpop.permute.xlu0 %3796
    %3798 = vset.pattern.permute.xlu0 0
    %3799 = vperm.xlu0 %3798, %v3472
    %v3800 = vpop.permute.xlu0 %3799
    %3801 = vset.pattern.permute.xlu0 0
    %3802 = vperm.xlu0 %3801, %v3473
    %v3803 = vpop.permute.xlu0 %3802
    %3804 = vset.pattern.permute.xlu0 0
    %3805 = vperm.xlu0 %3804, %v3474
    %v3806 = vpop.permute.xlu0 %3805
    %3807 = vset.pattern.permute.xlu0 0
    %3808 = vperm.xlu0 %3807, %v3475
    %v3809 = vpop.permute.xlu0 %3808
    %3810 = vset.pattern.permute.xlu0 0
    %3811 = vperm.xlu0 %3810, %v3476
    %v3812 = vpop.permute.xlu0 %3811
    %3813 = vset.pattern.permute.xlu0 0
    %3814 = vperm.xlu0 %3813, %v3477
    %v3815 = vpop.permute.xlu0 %3814
    %3816 = vset.pattern.permute.xlu0 0
    %3817 = vperm.xlu0 %3816, %v3478
    %v3818 = vpop.permute.xlu0 %3817
    %3819 = vset.pattern.permute.xlu0 0
    %3820 = vperm.xlu0 %3819, %v3479
    %v3821 = vpop.permute.xlu0 %3820
    %3822 = vset.pattern.permute.xlu0 0
    %3823 = vperm.xlu0 %3822, %v3480
    %v3824 = vpop.permute.xlu0 %3823
    %3825 = vset.pattern.permute.xlu0 0
    %3826 = vperm.xlu0 %3825, %v3481
    %v3827 = vpop.permute.xlu0 %3826
    %3828 = vset.pattern.permute.xlu0 0
    %3829 = vperm.xlu0 %3828, %v3482
    %v3830 = vpop.permute.xlu0 %3829
    %3831 = vset.pattern.permute.xlu0 0
    %3832 = vperm.xlu0 %3831, %v3483
    %v3833 = vpop.permute.xlu0 %3832
    %3834 = vset.pattern.permute.xlu0 0
    %3835 = vperm.xlu0 %3834, %v3484
    %v3836 = vpop.permute.xlu0 %3835
    %3837 = vset.pattern.permute.xlu0 0
    %3838 = vperm.xlu0 %3837, %v3485
    %v3839 = vpop.permute.xlu0 %3838
    %3840 = vset.pattern.permute.xlu0 0
    %3841 = vperm.xlu0 %3840, %v3486
    %v3842 = vpop.permute.xlu0 %3841
    %3843 = vset.pattern.permute.xlu0 0
    %3844 = vperm.xlu0 %3843, %v3487
    %v3845 = vpop.permute.xlu0 %3844
    %3846 = vset.pattern.permute.xlu0 0
    %3847 = vperm.xlu0 %3846, %v3488
    %v3848 = vpop.permute.xlu0 %3847
    %3849 = vset.pattern.permute.xlu0 0
    %3850 = vperm.xlu0 %3849, %v3489
    %v3851 = vpop.permute.xlu0 %3850
    %3852 = vset.pattern.permute.xlu0 0
    %3853 = vperm.xlu0 %3852, %v3490
    %v3854 = vpop.permute.xlu0 %3853
    %3855 = vset.pattern.permute.xlu0 0
    %3856 = vperm.xlu0 %3855, %v3491
    %v3857 = vpop.permute.xlu0 %3856
    %3858 = vset.pattern.permute.xlu0 0
    %3859 = vperm.xlu0 %3858, %v3492
    %v3860 = vpop.permute.xlu0 %3859
    %3861 = vset.pattern.permute.xlu0 0
    %3862 = vperm.xlu0 %3861, %v3493
    %v3863 = vpop.permute.xlu0 %3862
    %3864 = vset.pattern.permute.xlu0 0
    %3865 = vperm.xlu0 %3864, %v3494
    %v3866 = vpop.permute.xlu0 %3865
    %3867 = vset.pattern.permute.xlu0 0
    %3868 = vperm.xlu0 %3867, %v3495
    %v3869 = vpop.permute.xlu0 %3868
    %3870 = vset.pattern.permute.xlu0 0
    %3871 = vperm.xlu0 %3870, %v3496
    %v3872 = vpop.permute.xlu0 %3871
    %3873 = vset.pattern.permute.xlu0 0
    %3874 = vperm.xlu0 %3873, %v3497
    %v3875 = vpop.permute.xlu0 %3874
    %3876 = vset.pattern.permute.xlu0 0
    %3877 = vperm.xlu0 %3876, %v3498
    %v3878 = vpop.permute.xlu0 %3877
    %3879 = vset.pattern.permute.xlu0 0
    %3880 = vperm.xlu0 %3879, %v3499
    %v3881 = vpop.permute.xlu0 %3880
    %3882 = vset.pattern.permute.xlu0 0
    %3883 = vperm.xlu0 %3882, %v3500
    %v3884 = vpop.permute.xlu0 %3883
    %3885 = vset.pattern.permute.xlu0 0
    %3886 = vperm.xlu0 %3885, %v3501
    %v3887 = vpop.permute.xlu0 %3886
    %3888 = vset.pattern.permute.xlu0 0
    %3889 = vperm.xlu0 %3888, %v3502
    %v3890 = vpop.permute.xlu0 %3889
    %3891 = vset.pattern.permute.xlu0 0
    %3892 = vperm.xlu0 %3891, %v3503
    %v3893 = vpop.permute.xlu0 %3892
    %3894 = vset.pattern.permute.xlu0 0
    %3895 = vperm.xlu0 %3894, %v3504
    %v3896 = vpop.permute.xlu0 %3895
    %3897 = vset.pattern.permute.xlu0 0
    %3898 = vperm.xlu0 %3897, %v3505
    %v3899 = vpop.permute.xlu0 %3898
    %3900 = vset.pattern.permute.xlu0 0
    %3901 = vperm.xlu0 %3900, %v3506
    %v3902 = vpop.permute.xlu0 %3901
    %3903 = vset.pattern.permute.xlu0 0
    %3904 = vperm.xlu0 %3903, %v3507
    %v3905 = vpop.permute.xlu0 %3904
    %3906 = vset.pattern.permute.xlu0 0
    %3907 = vperm.xlu0 %3906, %v3508
    %v3908 = vpop.permute.xlu0 %3907
    %3909 = vset.pattern.permute.xlu0 0
    %3910 = vperm.xlu0 %3909, %v3509
    %v3911 = vpop.permute.xlu0 %3910
    %3912 = vset.pattern.permute.xlu0 0
    %3913 = vperm.xlu0 %3912, %v3510
    %v3914 = vpop.permute.xlu0 %3913
    %3915 = vset.pattern.permute.xlu0 0
    %3916 = vperm.xlu0 %3915, %v3511
    %v3917 = vpop.permute.xlu0 %3916
    %3918 = vset.pattern.permute.xlu0 0
    %3919 = vperm.xlu0 %3918, %v3512
    %v3920 = vpop.permute.xlu0 %3919
    %3921 = vset.pattern.permute.xlu0 0
    %3922 = vperm.xlu0 %3921, %v3513
    %v3923 = vpop.permute.xlu0 %3922
    %3924 = vset.pattern.permute.xlu0 0
    %3925 = vperm.xlu0 %3924, %v3514
    %v3926 = vpop.permute.xlu0 %3925
    %3927 = vset.pattern.permute.xlu0 0
    %3928 = vperm.xlu0 %3927, %v3515
    %v3929 = vpop.permute.xlu0 %3928
    %3930 = vset.pattern.permute.xlu0 0
    %3931 = vperm.xlu0 %3930, %v3516
    %v3932 = vpop.permute.xlu0 %3931
    %3933 = vset.pattern.permute.xlu0 0
    %3934 = vperm.xlu0 %3933, %v3517
    %v3935 = vpop.permute.xlu0 %3934
    %3936 = vset.pattern.permute.xlu0 0
    %3937 = vperm.xlu0 %3936, %v3518
    %v3938 = vpop.permute.xlu0 %3937
    %3939 = vset.pattern.permute.xlu0 0
    %3940 = vperm.xlu0 %3939, %v3519
    %v3941 = vpop.permute.xlu0 %3940
    %3942 = vset.pattern.permute.xlu0 0
    %3943 = vperm.xlu0 %3942, %v3520
    %v3944 = vpop.permute.xlu0 %3943
    %3945 = vset.pattern.permute.xlu0 0
    %3946 = vperm.xlu0 %3945, %v3521
    %v3947 = vpop.permute.xlu0 %3946
    %3948 = vset.pattern.permute.xlu0 0
    %3949 = vperm.xlu0 %3948, %v3522
    %v3950 = vpop.permute.xlu0 %3949
    %3951 = vset.pattern.permute.xlu0 0
    %3952 = vperm.xlu0 %3951, %v3523
    %v3953 = vpop.permute.xlu0 %3952
    %3954 = vset.pattern.permute.xlu0 0
    %3955 = vperm.xlu0 %3954, %v3524
    %v3956 = vpop.permute.xlu0 %3955
    %3957 = vset.pattern.permute.xlu0 0
    %3958 = vperm.xlu0 %3957, %v3525
    %v3959 = vpop.permute.xlu0 %3958
    %3960 = vset.pattern.permute.xlu0 0
    %3961 = vperm.xlu0 %3960, %v3526
    %v3962 = vpop.permute.xlu0 %3961
    %3963 = vset.pattern.permute.xlu0 0
    %3964 = vperm.xlu0 %3963, %v3527
    %v3965 = vpop.permute.xlu0 %3964
    %3966 = vset.pattern.permute.xlu0 0
    %3967 = vperm.xlu0 %3966, %v3528
    %v3968 = vpop.permute.xlu0 %3967
    %3969 = vset.pattern.permute.xlu0 0
    %3970 = vperm.xlu0 %3969, %v3529
    %v3971 = vpop.permute.xlu0 %3970
    %3972 = vset.pattern.permute.xlu0 0
    %3973 = vperm.xlu0 %3972, %v3530
    %v3974 = vpop.permute.xlu0 %3973
    %3975 = vset.pattern.permute.xlu0 0
    %3976 = vperm.xlu0 %3975, %v3531
    %v3977 = vpop.permute.xlu0 %3976
    %3978 = vset.pattern.permute.xlu0 0
    %3979 = vperm.xlu0 %3978, %v3532
    %v3980 = vpop.permute.xlu0 %3979
    %3981 = vset.pattern.permute.xlu0 0
    %3982 = vperm.xlu0 %3981, %v3533
    %v3983 = vpop.permute.xlu0 %3982
    %3984 = vset.pattern.permute.xlu0 0
    %3985 = vperm.xlu0 %3984, %v3534
    %v3986 = vpop.permute.xlu0 %3985
    %3987 = vset.pattern.permute.xlu0 0
    %3988 = vperm.xlu0 %3987, %v3535
    %v3989 = vpop.permute.xlu0 %3988
    %3990 = vset.pattern.permute.xlu0 0
    %3991 = vperm.xlu0 %3990, %v3536
    %v3992 = vpop.permute.xlu0 %3991
    %3993 = vset.pattern.permute.xlu0 0
    %3994 = vperm.xlu0 %3993, %v3537
    %v3995 = vpop.permute.xlu0 %3994
    %3996 = vset.pattern.permute.xlu0 0
    %3997 = vperm.xlu0 %3996, %v3538
    %v3998 = vpop.permute.xlu0 %3997
    %3999 = vset.pattern.permute.xlu0 0
    %4000 = vperm.xlu0 %3999, %v3539
    %v4001 = vpop.permute.xlu0 %4000
    %4002 = vset.pattern.permute.xlu0 0
    %4003 = vperm.xlu0 %4002, %v3540
    %v4004 = vpop.permute.xlu0 %4003
    %4005 = vset.pattern.permute.xlu0 0
    %4006 = vperm.xlu0 %4005, %v3541
    %v4007 = vpop.permute.xlu0 %4006
    %4008 = vset.pattern.permute.xlu0 0
    %4009 = vperm.xlu0 %4008, %v3542
    %v4010 = vpop.permute.xlu0 %4009
    %4011 = vset.pattern.permute.xlu0 0
    %4012 = vperm.xlu0 %4011, %v3543
    %v4013 = vpop.permute.xlu0 %4012
    %4014 = vset.pattern.permute.xlu0 0
    %4015 = vperm.xlu0 %4014, %v3544
    %v4016 = vpop.permute.xlu0 %4015
    %4017 = vset.pattern.permute.xlu0 0
    %4018 = vperm.xlu0 %4017, %v3545
    %v4019 = vpop.permute.xlu0 %4018
    %4020 = vset.pattern.permute.xlu0 0
    %4021 = vperm.xlu0 %4020, %v3546
    %v4022 = vpop.permute.xlu0 %4021
    %4023 = vset.pattern.permute.xlu0 0
    %4024 = vperm.xlu0 %4023, %v3547
    %v4025 = vpop.permute.xlu0 %4024
    %4026 = vset.pattern.permute.xlu0 0
    %4027 = vperm.xlu0 %4026, %v3548
    %v4028 = vpop.permute.xlu0 %4027
    %4029 = vset.pattern.permute.xlu0 0
    %4030 = vperm.xlu0 %4029, %v3549
    %v4031 = vpop.permute.xlu0 %4030
    %4032 = vset.pattern.permute.xlu0 0
    %4033 = vperm.xlu0 %4032, %v3550
    %v4034 = vpop.permute.xlu0 %4033
    %4035 = vset.pattern.permute.xlu0 0
    %4036 = vperm.xlu0 %4035, %v3551
    %v4037 = vpop.permute.xlu0 %4036
    %4038 = vset.pattern.permute.xlu0 0
    %4039 = vperm.xlu0 %4038, %v3552
    %v4040 = vpop.permute.xlu0 %4039
    %4041 = vset.pattern.permute.xlu0 0
    %4042 = vperm.xlu0 %4041, %v3553
    %v4043 = vpop.permute.xlu0 %4042
    %4044 = vset.pattern.permute.xlu0 0
    %4045 = vperm.xlu0 %4044, %v3554
    %v4046 = vpop.permute.xlu0 %4045
    %4047 = vset.pattern.permute.xlu0 0
    %4048 = vperm.xlu0 %4047, %v3555
    %v4049 = vpop.permute.xlu0 %4048
    %4050 = vset.pattern.permute.xlu0 0
    %4051 = vperm.xlu0 %4050, %v3556
    %v4052 = vpop.permute.xlu0 %4051
    %4053 = vset.pattern.permute.xlu0 0
    %4054 = vperm.xlu0 %4053, %v3557
    %v4055 = vpop.permute.xlu0 %4054
    %4056 = vset.pattern.permute.xlu0 0
    %4057 = vperm.xlu0 %4056, %v3558
    %v4058 = vpop.permute.xlu0 %4057
    %4059 = vset.pattern.permute.xlu0 0
    %4060 = vperm.xlu0 %4059, %v3559
    %v4061 = vpop.permute.xlu0 %4060
    %4062 = vset.pattern.permute.xlu0 0
    %4063 = vperm.xlu0 %4062, %v3560
    %v4064 = vpop.permute.xlu0 %4063
    %4065 = vset.pattern.permute.xlu0 0
    %4066 = vperm.xlu0 %4065, %v3561
    %v4067 = vpop.permute.xlu0 %4066
    %4068 = vset.pattern.permute.xlu0 0
    %4069 = vperm.xlu0 %4068, %v3562
    %v4070 = vpop.permute.xlu0 %4069
    %4071 = vset.pattern.permute.xlu0 0
    %4072 = vperm.xlu0 %4071, %v3563
    %v4073 = vpop.permute.xlu0 %4072
    %4074 = vset.pattern.permute.xlu0 0
    %4075 = vperm.xlu0 %4074, %v3564
    %v4076 = vpop.permute.xlu0 %4075
    %v4077 = vlaneseq
    %v4078 = vand.u32 %v4077, 127
    %v4079 = vlaneseq
    %v4080 = vshrl.u32 %v4079, 7
    %v4081 = vsub.s32 %v4078, %v4080
    %v4082 = vrot.slane %v3695, %v4081
    %v4083 = vadd.s32 %v4078, 4294967288
    %v4084 = vlaneseq
    %v4085 = vshrl.u32 %v4084, 7
    %v4086 = vsub.s32 %v4083, %v4085
    %v4087 = vrot.slane %v3698, %v4086
    %vm4088 = vcmask 130112
    %v4089 = vsel %vm4088, %v4087, %v4082
    %v4090 = vadd.s32 %v4078, 4294967280
    %v4091 = vlaneseq
    %v4092 = vshrl.u32 %v4091, 7
    %v4093 = vsub.s32 %v4090, %v4092
    %v4094 = vrot.slane %v3701, %v4093
    %vm4095 = vcmask 195712
    %v4096 = vsel %vm4095, %v4094, %v4089
    %v4097 = vadd.s32 %v4078, 4294967272
    %v4098 = vlaneseq
    %v4099 = vshrl.u32 %v4098, 7
    %v4100 = vsub.s32 %v4097, %v4099
    %v4101 = vrot.slane %v3704, %v4100
    %vm4102 = vcmask 261312
    %v4103 = vsel %vm4102, %v4101, %v4096
    %v4104 = vadd.s32 %v4078, 4294967264
    %v4105 = vlaneseq
    %v4106 = vshrl.u32 %v4105, 7
    %v4107 = vsub.s32 %v4104, %v4106
    %v4108 = vrot.slane %v3707, %v4107
    %vm4109 = vcmask 326912
    %v4110 = vsel %vm4109, %v4108, %v4103
    %v4111 = vadd.s32 %v4078, 4294967256
    %v4112 = vlaneseq
    %v4113 = vshrl.u32 %v4112, 7
    %v4114 = vsub.s32 %v4111, %v4113
    %v4115 = vrot.slane %v3710, %v4114
    %vm4116 = vcmask 392512
    %v4117 = vsel %vm4116, %v4115, %v4110
    %v4118 = vadd.s32 %v4078, 4294967248
    %v4119 = vlaneseq
    %v4120 = vshrl.u32 %v4119, 7
    %v4121 = vsub.s32 %v4118, %v4120
    %v4122 = vrot.slane %v3713, %v4121
    %vm4123 = vcmask 458112
    %v4124 = vsel %vm4123, %v4122, %v4117
    %v4125 = vadd.s32 %v4078, 4294967240
    %v4126 = vlaneseq
    %v4127 = vshrl.u32 %v4126, 7
    %v4128 = vsub.s32 %v4125, %v4127
    %v4129 = vrot.slane %v3716, %v4128
    %vm4130 = vcmask 523712
    %v4131 = vsel %vm4130, %v4129, %v4124
    %v4132 = vadd.s32 %v4078, 4294967232
    %v4133 = vlaneseq
    %v4134 = vshrl.u32 %v4133, 7
    %v4135 = vsub.s32 %v4132, %v4134
    %v4136 = vrot.slane %v3719, %v4135
    %vm4137 = vcmask 589312
    %v4138 = vsel %vm4137, %v4136, %v4131
    %v4139 = vadd.s32 %v4078, 4294967224
    %v4140 = vlaneseq
    %v4141 = vshrl.u32 %v4140, 7
    %v4142 = vsub.s32 %v4139, %v4141
    %v4143 = vrot.slane %v3722, %v4142
    %vm4144 = vcmask 654912
    %v4145 = vsel %vm4144, %v4143, %v4138
    %v4146 = vadd.s32 %v4078, 4294967216
    %v4147 = vlaneseq
    %v4148 = vshrl.u32 %v4147, 7
    %v4149 = vsub.s32 %v4146, %v4148
    %v4150 = vrot.slane %v3725, %v4149
    %vm4151 = vcmask 720512
    %v4152 = vsel %vm4151, %v4150, %v4145
    %v4153 = vadd.s32 %v4078, 4294967208
    %v4154 = vlaneseq
    %v4155 = vshrl.u32 %v4154, 7
    %v4156 = vsub.s32 %v4153, %v4155
    %v4157 = vrot.slane %v3728, %v4156
    %vm4158 = vcmask 786112
    %v4159 = vsel %vm4158, %v4157, %v4152
    %v4160 = vadd.s32 %v4078, 4294967200
    %v4161 = vlaneseq
    %v4162 = vshrl.u32 %v4161, 7
    %v4163 = vsub.s32 %v4160, %v4162
    %v4164 = vrot.slane %v3731, %v4163
    %vm4165 = vcmask 851712
    %v4166 = vsel %vm4165, %v4164, %v4159
    %v4167 = vadd.s32 %v4078, 4294967192
    %v4168 = vlaneseq
    %v4169 = vshrl.u32 %v4168, 7
    %v4170 = vsub.s32 %v4167, %v4169
    %v4171 = vrot.slane %v3734, %v4170
    %vm4172 = vcmask 917312
    %v4173 = vsel %vm4172, %v4171, %v4166
    %v4174 = vadd.s32 %v4078, 4294967184
    %v4175 = vlaneseq
    %v4176 = vshrl.u32 %v4175, 7
    %v4177 = vsub.s32 %v4174, %v4176
    %v4178 = vrot.slane %v3737, %v4177
    %vm4179 = vcmask 982912
    %v4180 = vsel %vm4179, %v4178, %v4173
    %v4181 = vadd.s32 %v4078, 4294967176
    %v4182 = vlaneseq
    %v4183 = vshrl.u32 %v4182, 7
    %v4184 = vsub.s32 %v4181, %v4183
    %v4185 = vrot.slane %v3740, %v4184
    %vm4186 = vcmask 1048512
    %v4187 = vsel %vm4186, %v4185, %v4180
    %v4188 = vlaneseq
    %v4189 = vshrl.u32 %v4188, 7
    %v4190 = vsub.s32 %v4078, %v4189
    %v4191 = vrot.slane %v3743, %v4190
    %v4192 = vlaneseq
    %v4193 = vshrl.u32 %v4192, 7
    %v4194 = vsub.s32 %v4083, %v4193
    %v4195 = vrot.slane %v3746, %v4194
    %v4196 = vsel %vm4088, %v4195, %v4191
    %v4197 = vlaneseq
    %v4198 = vshrl.u32 %v4197, 7
    %v4199 = vsub.s32 %v4090, %v4198
    %v4200 = vrot.slane %v3749, %v4199
    %v4201 = vsel %vm4095, %v4200, %v4196
    %v4202 = vlaneseq
    %v4203 = vshrl.u32 %v4202, 7
    %v4204 = vsub.s32 %v4097, %v4203
    %v4205 = vrot.slane %v3752, %v4204
    %v4206 = vsel %vm4102, %v4205, %v4201
    %v4207 = vlaneseq
    %v4208 = vshrl.u32 %v4207, 7
    %v4209 = vsub.s32 %v4104, %v4208
    %v4210 = vrot.slane %v3755, %v4209
    %v4211 = vsel %vm4109, %v4210, %v4206
    %v4212 = vlaneseq
    %v4213 = vshrl.u32 %v4212, 7
    %v4214 = vsub.s32 %v4111, %v4213
    %v4215 = vrot.slane %v3758, %v4214
    %v4216 = vsel %vm4116, %v4215, %v4211
    %v4217 = vlaneseq
    %v4218 = vshrl.u32 %v4217, 7
    %v4219 = vsub.s32 %v4118, %v4218
    %v4220 = vrot.slane %v3761, %v4219
    %v4221 = vsel %vm4123, %v4220, %v4216
    %v4222 = vlaneseq
    %v4223 = vshrl.u32 %v4222, 7
    %v4224 = vsub.s32 %v4125, %v4223
    %v4225 = vrot.slane %v3764, %v4224
    %v4226 = vsel %vm4130, %v4225, %v4221
    %v4227 = vlaneseq
    %v4228 = vshrl.u32 %v4227, 7
    %v4229 = vsub.s32 %v4132, %v4228
    %v4230 = vrot.slane %v3767, %v4229
    %v4231 = vsel %vm4137, %v4230, %v4226
    %v4232 = vlaneseq
    %v4233 = vshrl.u32 %v4232, 7
    %v4234 = vsub.s32 %v4139, %v4233
    %v4235 = vrot.slane %v3770, %v4234
    %v4236 = vsel %vm4144, %v4235, %v4231
    %v4237 = vlaneseq
    %v4238 = vshrl.u32 %v4237, 7
    %v4239 = vsub.s32 %v4146, %v4238
    %v4240 = vrot.slane %v3773, %v4239
    %v4241 = vsel %vm4151, %v4240, %v4236
    %v4242 = vlaneseq
    %v4243 = vshrl.u32 %v4242, 7
    %v4244 = vsub.s32 %v4153, %v4243
    %v4245 = vrot.slane %v3776, %v4244
    %v4246 = vsel %vm4158, %v4245, %v4241
    %v4247 = vlaneseq
    %v4248 = vshrl.u32 %v4247, 7
    %v4249 = vsub.s32 %v4160, %v4248
    %v4250 = vrot.slane %v3779, %v4249
    %v4251 = vsel %vm4165, %v4250, %v4246
    %v4252 = vlaneseq
    %v4253 = vshrl.u32 %v4252, 7
    %v4254 = vsub.s32 %v4167, %v4253
    %v4255 = vrot.slane %v3782, %v4254
    %v4256 = vsel %vm4172, %v4255, %v4251
    %v4257 = vlaneseq
    %v4258 = vshrl.u32 %v4257, 7
    %v4259 = vsub.s32 %v4174, %v4258
    %v4260 = vrot.slane %v3785, %v4259
    %v4261 = vsel %vm4179, %v4260, %v4256
    %v4262 = vlaneseq
    %v4263 = vshrl.u32 %v4262, 7
    %v4264 = vsub.s32 %v4181, %v4263
    %v4265 = vrot.slane %v3788, %v4264
    %v4266 = vsel %vm4186, %v4265, %v4261
    %v4267 = vlaneseq
    %v4268 = vshrl.u32 %v4267, 7
    %v4269 = vsub.s32 %v4078, %v4268
    %v4270 = vrot.slane %v3791, %v4269
    %v4271 = vlaneseq
    %v4272 = vshrl.u32 %v4271, 7
    %v4273 = vsub.s32 %v4083, %v4272
    %v4274 = vrot.slane %v3794, %v4273
    %v4275 = vsel %vm4088, %v4274, %v4270
    %v4276 = vlaneseq
    %v4277 = vshrl.u32 %v4276, 7
    %v4278 = vsub.s32 %v4090, %v4277
    %v4279 = vrot.slane %v3797, %v4278
    %v4280 = vsel %vm4095, %v4279, %v4275
    %v4281 = vlaneseq
    %v4282 = vshrl.u32 %v4281, 7
    %v4283 = vsub.s32 %v4097, %v4282
    %v4284 = vrot.slane %v3800, %v4283
    %v4285 = vsel %vm4102, %v4284, %v4280
    %v4286 = vlaneseq
    %v4287 = vshrl.u32 %v4286, 7
    %v4288 = vsub.s32 %v4104, %v4287
    %v4289 = vrot.slane %v3803, %v4288
    %v4290 = vsel %vm4109, %v4289, %v4285
    %v4291 = vlaneseq
    %v4292 = vshrl.u32 %v4291, 7
    %v4293 = vsub.s32 %v4111, %v4292
    %v4294 = vrot.slane %v3806, %v4293
    %v4295 = vsel %vm4116, %v4294, %v4290
    %v4296 = vlaneseq
    %v4297 = vshrl.u32 %v4296, 7
    %v4298 = vsub.s32 %v4118, %v4297
    %v4299 = vrot.slane %v3809, %v4298
    %v4300 = vsel %vm4123, %v4299, %v4295
    %v4301 = vlaneseq
    %v4302 = vshrl.u32 %v4301, 7
    %v4303 = vsub.s32 %v4125, %v4302
    %v4304 = vrot.slane %v3812, %v4303
    %v4305 = vsel %vm4130, %v4304, %v4300
    %v4306 = vlaneseq
    %v4307 = vshrl.u32 %v4306, 7
    %v4308 = vsub.s32 %v4132, %v4307
    %v4309 = vrot.slane %v3815, %v4308
    %v4310 = vsel %vm4137, %v4309, %v4305
    %v4311 = vlaneseq
    %v4312 = vshrl.u32 %v4311, 7
    %v4313 = vsub.s32 %v4139, %v4312
    %v4314 = vrot.slane %v3818, %v4313
    %v4315 = vsel %vm4144, %v4314, %v4310
    %v4316 = vlaneseq
    %v4317 = vshrl.u32 %v4316, 7
    %v4318 = vsub.s32 %v4146, %v4317
    %v4319 = vrot.slane %v3821, %v4318
    %v4320 = vsel %vm4151, %v4319, %v4315
    %v4321 = vlaneseq
    %v4322 = vshrl.u32 %v4321, 7
    %v4323 = vsub.s32 %v4153, %v4322
    %v4324 = vrot.slane %v3824, %v4323
    %v4325 = vsel %vm4158, %v4324, %v4320
    %v4326 = vlaneseq
    %v4327 = vshrl.u32 %v4326, 7
    %v4328 = vsub.s32 %v4160, %v4327
    %v4329 = vrot.slane %v3827, %v4328
    %v4330 = vsel %vm4165, %v4329, %v4325
    %v4331 = vlaneseq
    %v4332 = vshrl.u32 %v4331, 7
    %v4333 = vsub.s32 %v4167, %v4332
    %v4334 = vrot.slane %v3830, %v4333
    %v4335 = vsel %vm4172, %v4334, %v4330
    %v4336 = vlaneseq
    %v4337 = vshrl.u32 %v4336, 7
    %v4338 = vsub.s32 %v4174, %v4337
    %v4339 = vrot.slane %v3833, %v4338
    %v4340 = vsel %vm4179, %v4339, %v4335
    %v4341 = vlaneseq
    %v4342 = vshrl.u32 %v4341, 7
    %v4343 = vsub.s32 %v4181, %v4342
    %v4344 = vrot.slane %v3836, %v4343
    %v4345 = vsel %vm4186, %v4344, %v4340
    %v4346 = vlaneseq
    %v4347 = vshrl.u32 %v4346, 7
    %v4348 = vsub.s32 %v4078, %v4347
    %v4349 = vrot.slane %v3839, %v4348
    %v4350 = vlaneseq
    %v4351 = vshrl.u32 %v4350, 7
    %v4352 = vsub.s32 %v4083, %v4351
    %v4353 = vrot.slane %v3842, %v4352
    %v4354 = vsel %vm4088, %v4353, %v4349
    %v4355 = vlaneseq
    %v4356 = vshrl.u32 %v4355, 7
    %v4357 = vsub.s32 %v4090, %v4356
    %v4358 = vrot.slane %v3845, %v4357
    %v4359 = vsel %vm4095, %v4358, %v4354
    %v4360 = vlaneseq
    %v4361 = vshrl.u32 %v4360, 7
    %v4362 = vsub.s32 %v4097, %v4361
    %v4363 = vrot.slane %v3848, %v4362
    %v4364 = vsel %vm4102, %v4363, %v4359
    %v4365 = vlaneseq
    %v4366 = vshrl.u32 %v4365, 7
    %v4367 = vsub.s32 %v4104, %v4366
    %v4368 = vrot.slane %v3851, %v4367
    %v4369 = vsel %vm4109, %v4368, %v4364
    %v4370 = vlaneseq
    %v4371 = vshrl.u32 %v4370, 7
    %v4372 = vsub.s32 %v4111, %v4371
    %v4373 = vrot.slane %v3854, %v4372
    %v4374 = vsel %vm4116, %v4373, %v4369
    %v4375 = vlaneseq
    %v4376 = vshrl.u32 %v4375, 7
    %v4377 = vsub.s32 %v4118, %v4376
    %v4378 = vrot.slane %v3857, %v4377
    %v4379 = vsel %vm4123, %v4378, %v4374
    %v4380 = vlaneseq
    %v4381 = vshrl.u32 %v4380, 7
    %v4382 = vsub.s32 %v4125, %v4381
    %v4383 = vrot.slane %v3860, %v4382
    %v4384 = vsel %vm4130, %v4383, %v4379
    %v4385 = vlaneseq
    %v4386 = vshrl.u32 %v4385, 7
    %v4387 = vsub.s32 %v4132, %v4386
    %v4388 = vrot.slane %v3863, %v4387
    %v4389 = vsel %vm4137, %v4388, %v4384
    %v4390 = vlaneseq
    %v4391 = vshrl.u32 %v4390, 7
    %v4392 = vsub.s32 %v4139, %v4391
    %v4393 = vrot.slane %v3866, %v4392
    %v4394 = vsel %vm4144, %v4393, %v4389
    %v4395 = vlaneseq
    %v4396 = vshrl.u32 %v4395, 7
    %v4397 = vsub.s32 %v4146, %v4396
    %v4398 = vrot.slane %v3869, %v4397
    %v4399 = vsel %vm4151, %v4398, %v4394
    %v4400 = vlaneseq
    %v4401 = vshrl.u32 %v4400, 7
    %v4402 = vsub.s32 %v4153, %v4401
    %v4403 = vrot.slane %v3872, %v4402
    %v4404 = vsel %vm4158, %v4403, %v4399
    %v4405 = vlaneseq
    %v4406 = vshrl.u32 %v4405, 7
    %v4407 = vsub.s32 %v4160, %v4406
    %v4408 = vrot.slane %v3875, %v4407
    %v4409 = vsel %vm4165, %v4408, %v4404
    %v4410 = vlaneseq
    %v4411 = vshrl.u32 %v4410, 7
    %v4412 = vsub.s32 %v4167, %v4411
    %v4413 = vrot.slane %v3878, %v4412
    %v4414 = vsel %vm4172, %v4413, %v4409
    %v4415 = vlaneseq
    %v4416 = vshrl.u32 %v4415, 7
    %v4417 = vsub.s32 %v4174, %v4416
    %v4418 = vrot.slane %v3881, %v4417
    %v4419 = vsel %vm4179, %v4418, %v4414
    %v4420 = vlaneseq
    %v4421 = vshrl.u32 %v4420, 7
    %v4422 = vsub.s32 %v4181, %v4421
    %v4423 = vrot.slane %v3884, %v4422
    %v4424 = vsel %vm4186, %v4423, %v4419
    %v4425 = vlaneseq
    %v4426 = vshrl.u32 %v4425, 7
    %v4427 = vsub.s32 %v4078, %v4426
    %v4428 = vrot.slane %v3887, %v4427
    %v4429 = vlaneseq
    %v4430 = vshrl.u32 %v4429, 7
    %v4431 = vsub.s32 %v4083, %v4430
    %v4432 = vrot.slane %v3890, %v4431
    %v4433 = vsel %vm4088, %v4432, %v4428
    %v4434 = vlaneseq
    %v4435 = vshrl.u32 %v4434, 7
    %v4436 = vsub.s32 %v4090, %v4435
    %v4437 = vrot.slane %v3893, %v4436
    %v4438 = vsel %vm4095, %v4437, %v4433
    %v4439 = vlaneseq
    %v4440 = vshrl.u32 %v4439, 7
    %v4441 = vsub.s32 %v4097, %v4440
    %v4442 = vrot.slane %v3896, %v4441
    %v4443 = vsel %vm4102, %v4442, %v4438
    %v4444 = vlaneseq
    %v4445 = vshrl.u32 %v4444, 7
    %v4446 = vsub.s32 %v4104, %v4445
    %v4447 = vrot.slane %v3899, %v4446
    %v4448 = vsel %vm4109, %v4447, %v4443
    %v4449 = vlaneseq
    %v4450 = vshrl.u32 %v4449, 7
    %v4451 = vsub.s32 %v4111, %v4450
    %v4452 = vrot.slane %v3902, %v4451
    %v4453 = vsel %vm4116, %v4452, %v4448
    %v4454 = vlaneseq
    %v4455 = vshrl.u32 %v4454, 7
    %v4456 = vsub.s32 %v4118, %v4455
    %v4457 = vrot.slane %v3905, %v4456
    %v4458 = vsel %vm4123, %v4457, %v4453
    %v4459 = vlaneseq
    %v4460 = vshrl.u32 %v4459, 7
    %v4461 = vsub.s32 %v4125, %v4460
    %v4462 = vrot.slane %v3908, %v4461
    %v4463 = vsel %vm4130, %v4462, %v4458
    %v4464 = vlaneseq
    %v4465 = vshrl.u32 %v4464, 7
    %v4466 = vsub.s32 %v4132, %v4465
    %v4467 = vrot.slane %v3911, %v4466
    %v4468 = vsel %vm4137, %v4467, %v4463
    %v4469 = vlaneseq
    %v4470 = vshrl.u32 %v4469, 7
    %v4471 = vsub.s32 %v4139, %v4470
    %v4472 = vrot.slane %v3914, %v4471
    %v4473 = vsel %vm4144, %v4472, %v4468
    %v4474 = vlaneseq
    %v4475 = vshrl.u32 %v4474, 7
    %v4476 = vsub.s32 %v4146, %v4475
    %v4477 = vrot.slane %v3917, %v4476
    %v4478 = vsel %vm4151, %v4477, %v4473
    %v4479 = vlaneseq
    %v4480 = vshrl.u32 %v4479, 7
    %v4481 = vsub.s32 %v4153, %v4480
    %v4482 = vrot.slane %v3920, %v4481
    %v4483 = vsel %vm4158, %v4482, %v4478
    %v4484 = vlaneseq
    %v4485 = vshrl.u32 %v4484, 7
    %v4486 = vsub.s32 %v4160, %v4485
    %v4487 = vrot.slane %v3923, %v4486
    %v4488 = vsel %vm4165, %v4487, %v4483
    %v4489 = vlaneseq
    %v4490 = vshrl.u32 %v4489, 7
    %v4491 = vsub.s32 %v4167, %v4490
    %v4492 = vrot.slane %v3926, %v4491
    %v4493 = vsel %vm4172, %v4492, %v4488
    %v4494 = vlaneseq
    %v4495 = vshrl.u32 %v4494, 7
    %v4496 = vsub.s32 %v4174, %v4495
    %v4497 = vrot.slane %v3929, %v4496
    %v4498 = vsel %vm4179, %v4497, %v4493
    %v4499 = vlaneseq
    %v4500 = vshrl.u32 %v4499, 7
    %v4501 = vsub.s32 %v4181, %v4500
    %v4502 = vrot.slane %v3932, %v4501
    %v4503 = vsel %vm4186, %v4502, %v4498
    %v4504 = vlaneseq
    %v4505 = vshrl.u32 %v4504, 7
    %v4506 = vsub.s32 %v4078, %v4505
    %v4507 = vrot.slane %v3935, %v4506
    %v4508 = vlaneseq
    %v4509 = vshrl.u32 %v4508, 7
    %v4510 = vsub.s32 %v4083, %v4509
    %v4511 = vrot.slane %v3938, %v4510
    %v4512 = vsel %vm4088, %v4511, %v4507
    %v4513 = vlaneseq
    %v4514 = vshrl.u32 %v4513, 7
    %v4515 = vsub.s32 %v4090, %v4514
    %v4516 = vrot.slane %v3941, %v4515
    %v4517 = vsel %vm4095, %v4516, %v4512
    %v4518 = vlaneseq
    %v4519 = vshrl.u32 %v4518, 7
    %v4520 = vsub.s32 %v4097, %v4519
    %v4521 = vrot.slane %v3944, %v4520
    %v4522 = vsel %vm4102, %v4521, %v4517
    %v4523 = vlaneseq
    %v4524 = vshrl.u32 %v4523, 7
    %v4525 = vsub.s32 %v4104, %v4524
    %v4526 = vrot.slane %v3947, %v4525
    %v4527 = vsel %vm4109, %v4526, %v4522
    %v4528 = vlaneseq
    %v4529 = vshrl.u32 %v4528, 7
    %v4530 = vsub.s32 %v4111, %v4529
    %v4531 = vrot.slane %v3950, %v4530
    %v4532 = vsel %vm4116, %v4531, %v4527
    %v4533 = vlaneseq
    %v4534 = vshrl.u32 %v4533, 7
    %v4535 = vsub.s32 %v4118, %v4534
    %v4536 = vrot.slane %v3953, %v4535
    %v4537 = vsel %vm4123, %v4536, %v4532
    %v4538 = vlaneseq
    %v4539 = vshrl.u32 %v4538, 7
    %v4540 = vsub.s32 %v4125, %v4539
    %v4541 = vrot.slane %v3956, %v4540
    %v4542 = vsel %vm4130, %v4541, %v4537
    %v4543 = vlaneseq
    %v4544 = vshrl.u32 %v4543, 7
    %v4545 = vsub.s32 %v4132, %v4544
    %v4546 = vrot.slane %v3959, %v4545
    %v4547 = vsel %vm4137, %v4546, %v4542
    %v4548 = vlaneseq
    %v4549 = vshrl.u32 %v4548, 7
    %v4550 = vsub.s32 %v4139, %v4549
    %v4551 = vrot.slane %v3962, %v4550
    %v4552 = vsel %vm4144, %v4551, %v4547
    %v4553 = vlaneseq
    %v4554 = vshrl.u32 %v4553, 7
    %v4555 = vsub.s32 %v4146, %v4554
    %v4556 = vrot.slane %v3965, %v4555
    %v4557 = vsel %vm4151, %v4556, %v4552
    %v4558 = vlaneseq
    %v4559 = vshrl.u32 %v4558, 7
    %v4560 = vsub.s32 %v4153, %v4559
    %v4561 = vrot.slane %v3968, %v4560
    %v4562 = vsel %vm4158, %v4561, %v4557
    %v4563 = vlaneseq
    %v4564 = vshrl.u32 %v4563, 7
    %v4565 = vsub.s32 %v4160, %v4564
    %v4566 = vrot.slane %v3971, %v4565
    %v4567 = vsel %vm4165, %v4566, %v4562
    %v4568 = vlaneseq
    %v4569 = vshrl.u32 %v4568, 7
    %v4570 = vsub.s32 %v4167, %v4569
    %v4571 = vrot.slane %v3974, %v4570
    %v4572 = vsel %vm4172, %v4571, %v4567
    %v4573 = vlaneseq
    %v4574 = vshrl.u32 %v4573, 7
    %v4575 = vsub.s32 %v4174, %v4574
    %v4576 = vrot.slane %v3977, %v4575
    %v4577 = vsel %vm4179, %v4576, %v4572
    %v4578 = vlaneseq
    %v4579 = vshrl.u32 %v4578, 7
    %v4580 = vsub.s32 %v4181, %v4579
    %v4581 = vrot.slane %v3980, %v4580
    %v4582 = vsel %vm4186, %v4581, %v4577
    %v4583 = vlaneseq
    %v4584 = vshrl.u32 %v4583, 7
    %v4585 = vsub.s32 %v4078, %v4584
    %v4586 = vrot.slane %v3983, %v4585
    %v4587 = vlaneseq
    %v4588 = vshrl.u32 %v4587, 7
    %v4589 = vsub.s32 %v4083, %v4588
    %v4590 = vrot.slane %v3986, %v4589
    %v4591 = vsel %vm4088, %v4590, %v4586
    %v4592 = vlaneseq
    %v4593 = vshrl.u32 %v4592, 7
    %v4594 = vsub.s32 %v4090, %v4593
    %v4595 = vrot.slane %v3989, %v4594
    %v4596 = vsel %vm4095, %v4595, %v4591
    %v4597 = vlaneseq
    %v4598 = vshrl.u32 %v4597, 7
    %v4599 = vsub.s32 %v4097, %v4598
    %v4600 = vrot.slane %v3992, %v4599
    %v4601 = vsel %vm4102, %v4600, %v4596
    %v4602 = vlaneseq
    %v4603 = vshrl.u32 %v4602, 7
    %v4604 = vsub.s32 %v4104, %v4603
    %v4605 = vrot.slane %v3995, %v4604
    %v4606 = vsel %vm4109, %v4605, %v4601
    %v4607 = vlaneseq
    %v4608 = vshrl.u32 %v4607, 7
    %v4609 = vsub.s32 %v4111, %v4608
    %v4610 = vrot.slane %v3998, %v4609
    %v4611 = vsel %vm4116, %v4610, %v4606
    %v4612 = vlaneseq
    %v4613 = vshrl.u32 %v4612, 7
    %v4614 = vsub.s32 %v4118, %v4613
    %v4615 = vrot.slane %v4001, %v4614
    %v4616 = vsel %vm4123, %v4615, %v4611
    %v4617 = vlaneseq
    %v4618 = vshrl.u32 %v4617, 7
    %v4619 = vsub.s32 %v4125, %v4618
    %v4620 = vrot.slane %v4004, %v4619
    %v4621 = vsel %vm4130, %v4620, %v4616
    %v4622 = vlaneseq
    %v4623 = vshrl.u32 %v4622, 7
    %v4624 = vsub.s32 %v4132, %v4623
    %v4625 = vrot.slane %v4007, %v4624
    %v4626 = vsel %vm4137, %v4625, %v4621
    %v4627 = vlaneseq
    %v4628 = vshrl.u32 %v4627, 7
    %v4629 = vsub.s32 %v4139, %v4628
    %v4630 = vrot.slane %v4010, %v4629
    %v4631 = vsel %vm4144, %v4630, %v4626
    %v4632 = vlaneseq
    %v4633 = vshrl.u32 %v4632, 7
    %v4634 = vsub.s32 %v4146, %v4633
    %v4635 = vrot.slane %v4013, %v4634
    %v4636 = vsel %vm4151, %v4635, %v4631
    %v4637 = vlaneseq
    %v4638 = vshrl.u32 %v4637, 7
    %v4639 = vsub.s32 %v4153, %v4638
    %v4640 = vrot.slane %v4016, %v4639
    %v4641 = vsel %vm4158, %v4640, %v4636
    %v4642 = vlaneseq
    %v4643 = vshrl.u32 %v4642, 7
    %v4644 = vsub.s32 %v4160, %v4643
    %v4645 = vrot.slane %v4019, %v4644
    %v4646 = vsel %vm4165, %v4645, %v4641
    %v4647 = vlaneseq
    %v4648 = vshrl.u32 %v4647, 7
    %v4649 = vsub.s32 %v4167, %v4648
    %v4650 = vrot.slane %v4022, %v4649
    %v4651 = vsel %vm4172, %v4650, %v4646
    %v4652 = vlaneseq
    %v4653 = vshrl.u32 %v4652, 7
    %v4654 = vsub.s32 %v4174, %v4653
    %v4655 = vrot.slane %v4025, %v4654
    %v4656 = vsel %vm4179, %v4655, %v4651
    %v4657 = vlaneseq
    %v4658 = vshrl.u32 %v4657, 7
    %v4659 = vsub.s32 %v4181, %v4658
    %v4660 = vrot.slane %v4028, %v4659
    %v4661 = vsel %vm4186, %v4660, %v4656
    %v4662 = vlaneseq
    %v4663 = vshrl.u32 %v4662, 7
    %v4664 = vsub.s32 %v4078, %v4663
    %v4665 = vrot.slane %v4031, %v4664
    %v4666 = vlaneseq
    %v4667 = vshrl.u32 %v4666, 7
    %v4668 = vsub.s32 %v4083, %v4667
    %v4669 = vrot.slane %v4034, %v4668
    %v4670 = vsel %vm4088, %v4669, %v4665
    %v4671 = vlaneseq
    %v4672 = vshrl.u32 %v4671, 7
    %v4673 = vsub.s32 %v4090, %v4672
    %v4674 = vrot.slane %v4037, %v4673
    %v4675 = vsel %vm4095, %v4674, %v4670
    %v4676 = vlaneseq
    %v4677 = vshrl.u32 %v4676, 7
    %v4678 = vsub.s32 %v4097, %v4677
    %v4679 = vrot.slane %v4040, %v4678
    %v4680 = vsel %vm4102, %v4679, %v4675
    %v4681 = vlaneseq
    %v4682 = vshrl.u32 %v4681, 7
    %v4683 = vsub.s32 %v4104, %v4682
    %v4684 = vrot.slane %v4043, %v4683
    %v4685 = vsel %vm4109, %v4684, %v4680
    %v4686 = vlaneseq
    %v4687 = vshrl.u32 %v4686, 7
    %v4688 = vsub.s32 %v4111, %v4687
    %v4689 = vrot.slane %v4046, %v4688
    %v4690 = vsel %vm4116, %v4689, %v4685
    %v4691 = vlaneseq
    %v4692 = vshrl.u32 %v4691, 7
    %v4693 = vsub.s32 %v4118, %v4692
    %v4694 = vrot.slane %v4049, %v4693
    %v4695 = vsel %vm4123, %v4694, %v4690
    %v4696 = vlaneseq
    %v4697 = vshrl.u32 %v4696, 7
    %v4698 = vsub.s32 %v4125, %v4697
    %v4699 = vrot.slane %v4052, %v4698
    %v4700 = vsel %vm4130, %v4699, %v4695
    %v4701 = vlaneseq
    %v4702 = vshrl.u32 %v4701, 7
    %v4703 = vsub.s32 %v4132, %v4702
    %v4704 = vrot.slane %v4055, %v4703
    %v4705 = vsel %vm4137, %v4704, %v4700
    %v4706 = vlaneseq
    %v4707 = vshrl.u32 %v4706, 7
    %v4708 = vsub.s32 %v4139, %v4707
    %v4709 = vrot.slane %v4058, %v4708
    %v4710 = vsel %vm4144, %v4709, %v4705
    %v4711 = vlaneseq
    %v4712 = vshrl.u32 %v4711, 7
    %v4713 = vsub.s32 %v4146, %v4712
    %v4714 = vrot.slane %v4061, %v4713
    %v4715 = vsel %vm4151, %v4714, %v4710
    %v4716 = vlaneseq
    %v4717 = vshrl.u32 %v4716, 7
    %v4718 = vsub.s32 %v4153, %v4717
    %v4719 = vrot.slane %v4064, %v4718
    %v4720 = vsel %vm4158, %v4719, %v4715
    %v4721 = vlaneseq
    %v4722 = vshrl.u32 %v4721, 7
    %v4723 = vsub.s32 %v4160, %v4722
    %v4724 = vrot.slane %v4067, %v4723
    %v4725 = vsel %vm4165, %v4724, %v4720
    %v4726 = vlaneseq
    %v4727 = vshrl.u32 %v4726, 7
    %v4728 = vsub.s32 %v4167, %v4727
    %v4729 = vrot.slane %v4070, %v4728
    %v4730 = vsel %vm4172, %v4729, %v4725
    %v4731 = vlaneseq
    %v4732 = vshrl.u32 %v4731, 7
    %v4733 = vsub.s32 %v4174, %v4732
    %v4734 = vrot.slane %v4073, %v4733
    %v4735 = vsel %vm4179, %v4734, %v4730
    %v4736 = vlaneseq
    %v4737 = vshrl.u32 %v4736, 7
    %v4738 = vsub.s32 %v4181, %v4737
    %v4739 = vrot.slane %v4076, %v4738
    %v4740 = vsel %vm4186, %v4739, %v4735
    %vm4741 = vcmask 1041409
    %v4742 = vsel %vm4741, %v4266, %v4187
    %vm4743 = vcmask 1042434
    %v4744 = vsel %vm4743, %v4345, %v4742
    %vm4745 = vcmask 1043459
    %v4746 = vsel %vm4745, %v4424, %v4744
    %vm4747 = vcmask 1044484
    %v4748 = vsel %vm4747, %v4503, %v4746
    %vm4749 = vcmask 1045509
    %v4750 = vsel %vm4749, %v4582, %v4748
    %vm4751 = vcmask 1046534
    %v4752 = vsel %vm4751, %v4661, %v4750
    %vm4753 = vcmask 1047559
    %v4754 = vsel %vm4753, %v4740, %v4752
    %4756 = vst [vmem:[#allocation3] sm:$0xff] %v4754
    // Predicated region
    $region38: #{tpu_custom_call.1} parent=1 // pred_check
      _
    $region39: #{tpu_custom_call.1} parent=1 // pred_check_branch
      %4758 = sbr.rel (0) target = $region41
    $region40: #{tpu_custom_call.1} parent=1 // pred_region
      %s4760 = ssub.s32 128, 128
      %4761 = vsyncadd [#allocation4], %s4760
      %s4763 = sshll.u32 [#allocation3], 4
      %s4764 = int_to_ptr.vmem [resolvable:$true] %s4763
      %4766 = dma.vmem_to_hbm [thread:$0]  %s4764, 128, %s9, [#allocation4]
    $region41: #{tpu_custom_call.1} parent=1 // pred_fallthru
      _
    // Predicated region
    $region42: #{tpu_custom_call.1} parent=1 // pred_check
      _
    $region43: #{tpu_custom_call.1} parent=1 // pred_check_branch
      %4768 = sbr.rel (0) target = $region45
    $region44: #{tpu_custom_call.1} parent=1 // pred_region
      %4769 = dma.done [#allocation4], 128
    $region45: #{tpu_custom_call.1} parent=1 // pred_fallthru
      _
    %4770 = vsyncpa [#allocation4], 1

</llo_original>
